<compile_context>
chip_gen: v7x
topology: tpu7x:2x2x1
jax: 0.10.0
libtpu: 0.0.40
codegen_flags: <defaults>
</compile_context>

<pallas_src>
import math

import jax
import jax.numpy as jnp
from jax.experimental import pallas as pl
from jax.experimental.pallas import tpu as pltpu


def _round_up(x, m):
    return ((x + m - 1) // m) * m


# ---------------------------------------------------------------------------
# Kernel 1: fused (tile_m, Cin) @ (Cin, Csum_pad) + bias + ReLU
#           (serves b0 / b1a / b2a in a single wide, lane-dense matmul)
# ---------------------------------------------------------------------------
def _matmul_bias_relu_kernel(x_ref, w_ref, bias_ref, o_ref):
    acc = jnp.dot(x_ref[...], w_ref[...], preferred_element_type=jnp.float32)
    o_ref[...] = jnp.maximum(acc + bias_ref[...], 0.0).astype(o_ref.dtype)


def matmul_bias_relu(x2d, w2d_bf16, bias, *, tile_m=1024):
    """x2d: (M, K) bf16; w2d_bf16: (K, Coutp) bf16 (BN folded, Coutp % 128 == 0)."""
    M, K = x2d.shape
    Coutp = w2d_bf16.shape[1]
    # Big tiles (mem-bound kernel) but keep >= 2 grid blocks so both v7x TCs
    # get work even at small M.
    tile_m = max(8, min(tile_m, _round_up((M + 1) // 2, 8)))
    m_pad = _round_up(M, tile_m)
    if m_pad != M:
        x2d = jnp.pad(x2d, ((0, m_pad - M), (0, 0)))
    grid = (m_pad // tile_m,)
    out = pl.pallas_call(
        _matmul_bias_relu_kernel,
        out_shape=jax.ShapeDtypeStruct((m_pad, Coutp), jnp.bfloat16),
        grid=grid,
        in_specs=[
            pl.BlockSpec((tile_m, K), lambda i: (i, 0)),
            pl.BlockSpec((K, Coutp), lambda i: (0, 0)),
            pl.BlockSpec((1, Coutp), lambda i: (0, 0)),
        ],
        out_specs=pl.BlockSpec((tile_m, Coutp), lambda i: (i, 0)),
        compiler_params=pltpu.CompilerParams(
            dimension_semantics=("parallel",)),
    )(x2d, w2d_bf16, bias.reshape(1, Coutp).astype(jnp.float32))
    return out[:M]


# ---------------------------------------------------------------------------
# Kernel 2: 3x3x3 conv (SAME, stride 1) + bias + ReLU.
# The padded (T+2, H+2, W+2, Cin) volume of batch item n is a resident block
# (index_map ignores t -> fetched once per n).  Per output frame t we run
# three (H*W, 9*Cin) @ (9*Cin, Coutp) matmuls accumulated in f32.
# ---------------------------------------------------------------------------
def _conv3x3_kernel(xp_ref, w_ref, bias_ref, o_ref):
    t = pl.program_id(1)
    _, hp, wp, cin = xp_ref.shape
    h, w = hp - 2, wp - 2
    coutp = o_ref.shape[-1]
    acc = jnp.zeros((h * w, coutp), jnp.float32)
    for kt in range(3):
        slab = xp_ref[t + kt]                              # (hp, wp, cin) bf16
        taps = []
        for kh in range(3):
            for kw in range(3):
                taps.append(slab[kh:kh + h, kw:kw + w, :])
        patch = jnp.concatenate(taps, axis=-1).reshape(h * w, 9 * cin)
        acc = acc + jnp.dot(patch, w_ref[kt],
                            preferred_element_type=jnp.float32)
    o_ref[...] = jnp.maximum(acc + bias_ref[...], 0.0).astype(o_ref.dtype)


def conv3x3_bn_relu(x, w, scale, bias):
    """x: (N,T,H,W,Cin) bf16; w: torch Conv3d layout (Cout, Cin, 3, 3, 3) f32."""
    N, T, H, W, Cin = x.shape
    Cout = w.shape[0]
    Coutp = _round_up(Cout, 128)
    # Weight as (kt, kh*kw*cin, cout); fold BN scale; pad Cout to lane width.
    w6 = jnp.transpose(w, (2, 3, 4, 1, 0)).reshape(3, 9 * Cin, Cout) * scale
    w6 = jnp.pad(w6, ((0, 0), (0, 0), (0, Coutp - Cout))).astype(jnp.bfloat16)
    biasp = jnp.pad(bias, (0, Coutp - Cout)).reshape(1, Coutp).astype(jnp.float32)
    xp = jnp.pad(x, ((0, 0), (1, 1), (1, 1), (1, 1), (0, 0)))
    Tp, Hp, Wp = T + 2, H + 2, W + 2
    M = N * T * H * W

    out = pl.pallas_call(
        _conv3x3_kernel,
        out_shape=jax.ShapeDtypeStruct((M, Coutp), jnp.bfloat16),
        grid=(N, T),
        in_specs=[
            # resident per-n volume: same block index for every t -> one DMA/n
            pl.BlockSpec((None, Tp, Hp, Wp, Cin), lambda n, t: (n, 0, 0, 0, 0)),
            pl.BlockSpec((3, 9 * Cin, Coutp), lambda n, t: (0, 0, 0)),
            pl.BlockSpec((1, Coutp), lambda n, t: (0, 0)),
        ],
        out_specs=pl.BlockSpec((H * W, Coutp), lambda n, t: (n * T + t, 0)),
        compiler_params=pltpu.CompilerParams(
            dimension_semantics=("parallel", "arbitrary")),
    )(xp, w6, biasp)
    return out.reshape(N, T, H, W, Coutp)[..., :Cout]


# ---------------------------------------------------------------------------
# Kernel 3: fused MaxPool3d(3,3,3, SAME, zero-pad) + 1x1x1 conv + bias + ReLU.
# Separable max (T, then W, then H) on the resident per-n padded volume; the
# pooled tensor never hits HBM.
# ---------------------------------------------------------------------------
def _pool_1x1_kernel(xp_ref, w_ref, bias_ref, o_ref):
    t = pl.program_id(1)
    _, hp, wp, cin = xp_ref.shape
    h, w = hp - 2, wp - 2
    m = jnp.maximum(jnp.maximum(xp_ref[t], xp_ref[t + 1]), xp_ref[t + 2])
    m = jnp.maximum(jnp.maximum(m[:, 0:w, :], m[:, 1:w + 1, :]), m[:, 2:w + 2, :])
    m = jnp.maximum(jnp.maximum(m[0:h], m[1:h + 1]), m[2:h + 2])       # (h, w, cin)
    pooled = m.reshape(h * w, cin)                                     # bf16 (exact max)
    acc = jnp.dot(pooled, w_ref[...], preferred_element_type=jnp.float32)
    o_ref[...] = jnp.maximum(acc + bias_ref[...], 0.0).astype(o_ref.dtype)


def maxpool_1x1_bn_relu(x, w, scale, bias):
    """x: (N,T,H,W,Cin) bf16; w: (Cout, Cin, 1, 1, 1) f32."""
    N, T, H, W, Cin = x.shape
    Cout = w.shape[0]
    Coutp = _round_up(Cout, 128)
    w2d = w.reshape(Cout, Cin).T * scale[None, :]
    w2d = jnp.pad(w2d, ((0, 0), (0, Coutp - Cout))).astype(jnp.bfloat16)
    biasp = jnp.pad(bias, (0, Coutp - Cout)).reshape(1, Coutp).astype(jnp.float32)
    xp = jnp.pad(x, ((0, 0), (1, 1), (1, 1), (1, 1), (0, 0)))
    Tp, Hp, Wp = T + 2, H + 2, W + 2
    M = N * T * H * W

    out = pl.pallas_call(
        _pool_1x1_kernel,
        out_shape=jax.ShapeDtypeStruct((M, Coutp), jnp.bfloat16),
        grid=(N, T),
        in_specs=[
            pl.BlockSpec((None, Tp, Hp, Wp, Cin), lambda n, t: (n, 0, 0, 0, 0)),
            pl.BlockSpec((Cin, Coutp), lambda n, t: (0, 0)),
            pl.BlockSpec((1, Coutp), lambda n, t: (0, 0)),
        ],
        out_specs=pl.BlockSpec((H * W, Coutp), lambda n, t: (n * T + t, 0)),
        compiler_params=pltpu.CompilerParams(
            dimension_semantics=("parallel", "arbitrary")),
    )(xp, w2d, biasp)
    return out.reshape(N, T, H, W, Coutp)[..., :Cout]


# ---------------------------------------------------------------------------
# InceptionModule forward
# ---------------------------------------------------------------------------
def inception_module(x_ncthw, params):
    """x_ncthw: (N, C, T, H, W) -> (N, sum(out_ch[0,2,4,5]), T, H, W)."""
    # NCTHW -> NTHWC, bf16 activations in HBM.
    x = jnp.transpose(x_ncthw, (0, 2, 3, 4, 1)).astype(jnp.bfloat16)
    N, T, H, W, Cin = x.shape
    M = N * T * H * W

    # --- b0 / b1a / b2a: one fused wide 1x1 matmul over the shared input.
    w0, s0, bb0 = params["b0"]
    w1a, s1a, bb1a = params["b1a"]
    w2a, s2a, bb2a = params["b2a"]

    def fold_1x1(wc, sc):
        cout = wc.shape[0]
        return wc.reshape(cout, Cin).T * sc[None, :]       # (Cin, Cout), BN folded

    c0, c1a, c2a = w0.shape[0], w1a.shape[0], w2a.shape[0]
    csum = c0 + c1a + c2a
    csum_pad = _round_up(csum, 128)                        # lane-dense output width
    wcat = jnp.concatenate(
        [fold_1x1(w0, s0), fold_1x1(w1a, s1a), fold_1x1(w2a, s2a)], axis=1)
    wcat = jnp.pad(wcat, ((0, 0), (0, csum_pad - csum))).astype(jnp.bfloat16)
    bcat = jnp.pad(jnp.concatenate([bb0, bb1a, bb2a], axis=0),
                   (0, csum_pad - csum))

    y = matmul_bias_relu(x.reshape(M, Cin), wcat, bcat)    # (M, csum_pad) bf16
    b0 = y[:, :c0].reshape(N, T, H, W, c0)
    y1a = y[:, c0:c0 + c1a].reshape(N, T, H, W, c1a)
    y2a = y[:, c0 + c1a:csum].reshape(N, T, H, W, c2a)

    # --- 3x3x3 branches (resident halo volume, per-kt accumulated matmuls).
    b1 = conv3x3_bn_relu(y1a, *params["b1b"])
    b2 = conv3x3_bn_relu(y2a, *params["b2b"])

    # --- maxpool(3x3x3, SAME, zero-pad) fused with its trailing 1x1 conv.
    b3 = maxpool_1x1_bn_relu(x, *params["b3b"])

    out = jnp.concatenate([b0, b1, b2, b3], axis=-1)       # channel concat
    # TODO(synk): concat + transpose could be fused into the kernels' out_specs
    # if the consumer accepts channels-last.
    return jnp.transpose(out, (0, 4, 1, 2, 3)).astype(jnp.float32)   # -> NCTHW


# ---------------------------------------------------------------------------
# Deterministic parameter initialization (mirrors nn.Conv3d / BatchNorm3d init)
# ---------------------------------------------------------------------------
def init_unit3d_params(key, cin, cout, k):
    fan_in = cin * k * k * k
    bound = 1.0 / math.sqrt(fan_in)                        # kaiming-uniform bound
    w = jax.random.uniform(key, (cout, cin, k, k, k),
                           minval=-bound, maxval=bound, dtype=jnp.float32)
    gamma = jnp.ones((cout,), jnp.float32)
    beta = jnp.zeros((cout,), jnp.float32)
    running_mean = jnp.zeros((cout,), jnp.float32)
    running_var = jnp.ones((cout,), jnp.float32)
    eps = 1e-5
    scale = gamma / jnp.sqrt(running_var + eps)
    bias = beta - running_mean * scale
    return w, scale, bias


if __name__ == "__main__":
    key = jax.random.PRNGKey(0)
    keys = jax.random.split(key, 7)

    # Small shapes consistent with the module's forward (NCTHW input).
    N, Cin, T, H, W = 2, 4, 4, 8, 8
    out_channels = [4, 4, 8, 4, 8, 4]

    x = jax.random.normal(keys[0], (N, Cin, T, H, W), dtype=jnp.float32)

    params = {
        "b0":  init_unit3d_params(keys[1], Cin, out_channels[0], 1),
        "b1a": init_unit3d_params(keys[2], Cin, out_channels[1], 1),
        "b1b": init_unit3d_params(keys[3], out_channels[1], out_channels[2], 3),
        "b2a": init_unit3d_params(keys[4], Cin, out_channels[3], 1),
        "b2b": init_unit3d_params(keys[5], out_channels[3], out_channels[4], 3),
        "b3b": init_unit3d_params(keys[6], Cin, out_channels[5], 1),
    }

    out = jax.jit(inception_module)(x, params)
    out = jax.block_until_ready(out)

    expected_c = (out_channels[0] + out_channels[2]
                  + out_channels[4] + out_channels[5])
    assert out.shape == (N, expected_c, T, H, W), out.shape
    assert bool(jnp.all(jnp.isfinite(out)))
    print("KERNEL_OK")
</pallas_src>

<mosaic_0001>
module attributes {stable_mosaic.version = 11 : i64} {
  func.func @_matmul_bias_relu_kernel(%arg0: i32, %arg1: memref<256x4xbf16, #tpu.memory_space<vmem>>, %arg2: memref<4x128xbf16, #tpu.memory_space<vmem>>, %arg3: memref<1x128xf32, #tpu.memory_space<vmem>>, %arg4: memref<256x128xbf16, #tpu.memory_space<vmem>>) attributes {dimension_semantics = [#tpu.dimension_semantics<parallel>], iteration_bounds = array<i64: 2>, scalar_prefetch = 0 : i64, scratch_operands = 0 : i64, tpu.core_type = #tpu.core_type<tc>, window_params = [{transform_indices = @transform_0, window_bounds = array<i64: 256, 4>}, {pipeline_mode = #tpu.pipeline_mode<synchronous>, transform_indices = @transform_1, window_bounds = array<i64: 4, 128>}, {pipeline_mode = #tpu.pipeline_mode<synchronous>, transform_indices = @transform_2, window_bounds = array<i64: 1, 128>}, {transform_indices = @transform_3, window_bounds = array<i64: 256, 128>}]} {
    %c0 = arith.constant 0 : index
    %c0_0 = arith.constant 0 : index
    %0 = vector.load %arg1[%c0, %c0_0] : memref<256x4xbf16, #tpu.memory_space<vmem>>, vector<256x4xbf16>
    %c0_1 = arith.constant 0 : index
    %c0_2 = arith.constant 0 : index
    %1 = vector.load %arg2[%c0_1, %c0_2] : memref<4x128xbf16, #tpu.memory_space<vmem>>, vector<4x128xbf16>
    %cst = arith.constant dense<0.000000e+00> : vector<256x128xf32>
    %2 = tpu.matmul %0, %1, %cst {dimension_numbers = #tpu.dot_dimension_numbers<[1], [0], [0], [1], [0, 0, 1, 1], [], []>} : vector<256x4xbf16>, vector<4x128xbf16>, vector<256x128xf32> -> vector<256x128xf32>
    %c0_3 = arith.constant 0 : index
    %c0_4 = arith.constant 0 : index
    %3 = vector.load %arg3[%c0_3, %c0_4] : memref<1x128xf32, #tpu.memory_space<vmem>>, vector<1x128xf32>
    %4 = vector.broadcast %3 : vector<1x128xf32> to vector<256x128xf32>
    %5 = arith.addf %2, %4 : vector<256x128xf32>
    %cst_5 = arith.constant 0.000000e+00 : f32
    %6 = vector.broadcast %cst_5 : f32 to vector<256x128xf32>
    %7 = arith.maximumf %5, %6 : vector<256x128xf32>
    %8 = arith.truncf %7 : vector<256x128xf32> to vector<256x128xbf16>
    %c0_6 = arith.constant 0 : index
    %c0_7 = arith.constant 0 : index
    %9 = vector.load %arg4[%c0_6, %c0_7] : memref<256x128xbf16, #tpu.memory_space<vmem>>, vector<256x128xbf16>
    tpu.vector_store %arg4[%c0_6, %c0_7], %8 {strides = array<i32>} : memref<256x128xbf16, #tpu.memory_space<vmem>>, vector<256x128xbf16>,
    return
  }
  func.func @transform_0(%arg0: i32) -> (i32, i32) {
    %c0_i32 = arith.constant 0 : i32
    %c0_i32_0 = arith.constant 0 : i32
    return %arg0, %c0_i32 : i32, i32
  }
  func.func @transform_1(%arg0: i32) -> (i32, i32) {
    %c0_i32 = arith.constant 0 : i32
    %c0_i32_0 = arith.constant 0 : i32
    %c0_i32_1 = arith.constant 0 : i32
    return %c0_i32, %c0_i32_0 : i32, i32
  }
  func.func @transform_2(%arg0: i32) -> (i32, i32) {
    %c0_i32 = arith.constant 0 : i32
    %c0_i32_0 = arith.constant 0 : i32
    %c0_i32_1 = arith.constant 0 : i32
    return %c0_i32, %c0_i32_0 : i32, i32
  }
  func.func @transform_3(%arg0: i32) -> (i32, i32) {
    %c0_i32 = arith.constant 0 : i32
    %c0_i32_0 = arith.constant 0 : i32
    return %arg0, %c0_i32 : i32, i32
  }
}

module attributes {stable_mosaic.version = 11 : i64} {
  func.func @_conv3x3_kernel(%arg0: i32, %arg1: i32, %arg2: memref<1x6x10x10x4xbf16, #tpu.memory_space<vmem>>, %arg3: memref<3x36x128xbf16, #tpu.memory_space<vmem>>, %arg4: memref<1x128xf32, #tpu.memory_space<vmem>>, %arg5: memref<64x128xbf16, #tpu.memory_space<vmem>>) attributes {dimension_semantics = [#tpu.dimension_semantics<parallel>, #tpu.dimension_semantics<arbitrary>], iteration_bounds = array<i64: 2, 4>, scalar_prefetch = 0 : i64, scratch_operands = 0 : i64, tpu.core_type = #tpu.core_type<tc>, window_params = [{transform_indices = @transform_0, window_bounds = array<i64: 1, 6, 10, 10, 4>}, {pipeline_mode = #tpu.pipeline_mode<synchronous>, transform_indices = @transform_1, window_bounds = array<i64: 3, 36, 128>}, {pipeline_mode = #tpu.pipeline_mode<synchronous>, transform_indices = @transform_2, window_bounds = array<i64: 1, 128>}, {transform_indices = @transform_3, window_bounds = array<i64: 64, 128>}]} {
    %cst = arith.constant 0.000000e+00 : f32
    %0 = vector.broadcast %cst : f32 to vector<64x128xf32>
    %c0_i32 = arith.constant 0 : i32
    %1 = arith.addi %arg1, %c0_i32 : i32
    %c0 = arith.constant 0 : index
    %2 = arith.index_cast %1 : i32 to index
    %c0_0 = arith.constant 0 : index
    %c0_1 = arith.constant 0 : index
    %c0_2 = arith.constant 0 : index
    %3 = vector.load %arg2[%c0, %2, %c0_0, %c0_1, %c0_2] : memref<1x6x10x10x4xbf16, #tpu.memory_space<vmem>>, vector<1x1x10x10x4xbf16>
    %4 = vector.shape_cast %3 : vector<1x1x10x10x4xbf16> to vector<10x10x4xbf16>
    %5 = vector.extract_strided_slice %4 {offsets = [0, 0, 0], sizes = [8, 8, 4], strides = [1, 1, 1]} : vector<10x10x4xbf16> to vector<8x8x4xbf16>
    %6 = vector.extract_strided_slice %4 {offsets = [0, 1, 0], sizes = [8, 8, 4], strides = [1, 1, 1]} : vector<10x10x4xbf16> to vector<8x8x4xbf16>
    %7 = vector.extract_strided_slice %4 {offsets = [0, 2, 0], sizes = [8, 8, 4], strides = [1, 1, 1]} : vector<10x10x4xbf16> to vector<8x8x4xbf16>
    %8 = vector.extract_strided_slice %4 {offsets = [1, 0, 0], sizes = [8, 8, 4], strides = [1, 1, 1]} : vector<10x10x4xbf16> to vector<8x8x4xbf16>
    %9 = vector.extract_strided_slice %4 {offsets = [1, 1, 0], sizes = [8, 8, 4], strides = [1, 1, 1]} : vector<10x10x4xbf16> to vector<8x8x4xbf16>
    %10 = vector.extract_strided_slice %4 {offsets = [1, 2, 0], sizes = [8, 8, 4], strides = [1, 1, 1]} : vector<10x10x4xbf16> to vector<8x8x4xbf16>
    %11 = vector.extract_strided_slice %4 {offsets = [2, 0, 0], sizes = [8, 8, 4], strides = [1, 1, 1]} : vector<10x10x4xbf16> to vector<8x8x4xbf16>
    %12 = vector.extract_strided_slice %4 {offsets = [2, 1, 0], sizes = [8, 8, 4], strides = [1, 1, 1]} : vector<10x10x4xbf16> to vector<8x8x4xbf16>
    %13 = vector.extract_strided_slice %4 {offsets = [2, 2, 0], sizes = [8, 8, 4], strides = [1, 1, 1]} : vector<10x10x4xbf16> to vector<8x8x4xbf16>
    %14 = tpu.concatenate %5, %6, %7, %8, %9, %10, %11, %12, %13 in 2 : vector<8x8x4xbf16>, vector<8x8x4xbf16>, vector<8x8x4xbf16>, vector<8x8x4xbf16>, vector<8x8x4xbf16>, vector<8x8x4xbf16>, vector<8x8x4xbf16>, vector<8x8x4xbf16>, vector<8x8x4xbf16> -> vector<8x8x36xbf16>
    %15 = vector.shape_cast %14 : vector<8x8x36xbf16> to vector<64x36xbf16>
    %c0_3 = arith.constant 0 : index
    %c0_4 = arith.constant 0 : index
    %c0_5 = arith.constant 0 : index
    %16 = vector.load %arg3[%c0_3, %c0_4, %c0_5] : memref<3x36x128xbf16, #tpu.memory_space<vmem>>, vector<1x36x128xbf16>
    %17 = vector.shape_cast %16 : vector<1x36x128xbf16> to vector<36x128xbf16>
    %cst_6 = arith.constant dense<0.000000e+00> : vector<64x128xf32>
    %18 = tpu.matmul %15, %17, %cst_6 {dimension_numbers = #tpu.dot_dimension_numbers<[1], [0], [0], [1], [0, 0, 1, 1], [], []>} : vector<64x36xbf16>, vector<36x128xbf16>, vector<64x128xf32> -> vector<64x128xf32>
    %19 = arith.addf %0, %18 : vector<64x128xf32>
    %c1_i32 = arith.constant 1 : i32
    %20 = arith.addi %arg1, %c1_i32 : i32
    %c0_7 = arith.constant 0 : index
    %21 = arith.index_cast %20 : i32 to index
    %c0_8 = arith.constant 0 : index
    %c0_9 = arith.constant 0 : index
    %c0_10 = arith.constant 0 : index
    %22 = vector.load %arg2[%c0_7, %21, %c0_8, %c0_9, %c0_10] : memref<1x6x10x10x4xbf16, #tpu.memory_space<vmem>>, vector<1x1x10x10x4xbf16>
    %23 = vector.shape_cast %22 : vector<1x1x10x10x4xbf16> to vector<10x10x4xbf16>
    %24 = vector.extract_strided_slice %23 {offsets = [0, 0, 0], sizes = [8, 8, 4], strides = [1, 1, 1]} : vector<10x10x4xbf16> to vector<8x8x4xbf16>
    %25 = vector.extract_strided_slice %23 {offsets = [0, 1, 0], sizes = [8, 8, 4], strides = [1, 1, 1]} : vector<10x10x4xbf16> to vector<8x8x4xbf16>
    %26 = vector.extract_strided_slice %23 {offsets = [0, 2, 0], sizes = [8, 8, 4], strides = [1, 1, 1]} : vector<10x10x4xbf16> to vector<8x8x4xbf16>
    %27 = vector.extract_strided_slice %23 {offsets = [1, 0, 0], sizes = [8, 8, 4], strides = [1, 1, 1]} : vector<10x10x4xbf16> to vector<8x8x4xbf16>
    %28 = vector.extract_strided_slice %23 {offsets = [1, 1, 0], sizes = [8, 8, 4], strides = [1, 1, 1]} : vector<10x10x4xbf16> to vector<8x8x4xbf16>
    %29 = vector.extract_strided_slice %23 {offsets = [1, 2, 0], sizes = [8, 8, 4], strides = [1, 1, 1]} : vector<10x10x4xbf16> to vector<8x8x4xbf16>
    %30 = vector.extract_strided_slice %23 {offsets = [2, 0, 0], sizes = [8, 8, 4], strides = [1, 1, 1]} : vector<10x10x4xbf16> to vector<8x8x4xbf16>
    %31 = vector.extract_strided_slice %23 {offsets = [2, 1, 0], sizes = [8, 8, 4], strides = [1, 1, 1]} : vector<10x10x4xbf16> to vector<8x8x4xbf16>
    %32 = vector.extract_strided_slice %23 {offsets = [2, 2, 0], sizes = [8, 8, 4], strides = [1, 1, 1]} : vector<10x10x4xbf16> to vector<8x8x4xbf16>
    %33 = tpu.concatenate %24, %25, %26, %27, %28, %29, %30, %31, %32 in 2 : vector<8x8x4xbf16>, vector<8x8x4xbf16>, vector<8x8x4xbf16>, vector<8x8x4xbf16>, vector<8x8x4xbf16>, vector<8x8x4xbf16>, vector<8x8x4xbf16>, vector<8x8x4xbf16>, vector<8x8x4xbf16> -> vector<8x8x36xbf16>
    %34 = vector.shape_cast %33 : vector<8x8x36xbf16> to vector<64x36xbf16>
    %c1 = arith.constant 1 : index
    %c0_11 = arith.constant 0 : index
    %c0_12 = arith.constant 0 : index
    %35 = vector.load %arg3[%c1, %c0_11, %c0_12] : memref<3x36x128xbf16, #tpu.memory_space<vmem>>, vector<1x36x128xbf16>
    %36 = vector.shape_cast %35 : vector<1x36x128xbf16> to vector<36x128xbf16>
    %cst_13 = arith.constant dense<0.000000e+00> : vector<64x128xf32>
    %37 = tpu.matmul %34, %36, %cst_13 {dimension_numbers = #tpu.dot_dimension_numbers<[1], [0], [0], [1], [0, 0, 1, 1], [], []>} : vector<64x36xbf16>, vector<36x128xbf16>, vector<64x128xf32> -> vector<64x128xf32>
    %38 = arith.addf %19, %37 : vector<64x128xf32>
    %c2_i32 = arith.constant 2 : i32
    %39 = arith.addi %arg1, %c2_i32 : i32
    %c0_14 = arith.constant 0 : index
    %40 = arith.index_cast %39 : i32 to index
    %c0_15 = arith.constant 0 : index
    %c0_16 = arith.constant 0 : index
    %c0_17 = arith.constant 0 : index
    %41 = vector.load %arg2[%c0_14, %40, %c0_15, %c0_16, %c0_17] : memref<1x6x10x10x4xbf16, #tpu.memory_space<vmem>>, vector<1x1x10x10x4xbf16>
    %42 = vector.shape_cast %41 : vector<1x1x10x10x4xbf16> to vector<10x10x4xbf16>
    %43 = vector.extract_strided_slice %42 {offsets = [0, 0, 0], sizes = [8, 8, 4], strides = [1, 1, 1]} : vector<10x10x4xbf16> to vector<8x8x4xbf16>
    %44 = vector.extract_strided_slice %42 {offsets = [0, 1, 0], sizes = [8, 8, 4], strides = [1, 1, 1]} : vector<10x10x4xbf16> to vector<8x8x4xbf16>
    %45 = vector.extract_strided_slice %42 {offsets = [0, 2, 0], sizes = [8, 8, 4], strides = [1, 1, 1]} : vector<10x10x4xbf16> to vector<8x8x4xbf16>
    %46 = vector.extract_strided_slice %42 {offsets = [1, 0, 0], sizes = [8, 8, 4], strides = [1, 1, 1]} : vector<10x10x4xbf16> to vector<8x8x4xbf16>
    %47 = vector.extract_strided_slice %42 {offsets = [1, 1, 0], sizes = [8, 8, 4], strides = [1, 1, 1]} : vector<10x10x4xbf16> to vector<8x8x4xbf16>
    %48 = vector.extract_strided_slice %42 {offsets = [1, 2, 0], sizes = [8, 8, 4], strides = [1, 1, 1]} : vector<10x10x4xbf16> to vector<8x8x4xbf16>
    %49 = vector.extract_strided_slice %42 {offsets = [2, 0, 0], sizes = [8, 8, 4], strides = [1, 1, 1]} : vector<10x10x4xbf16> to vector<8x8x4xbf16>
    %50 = vector.extract_strided_slice %42 {offsets = [2, 1, 0], sizes = [8, 8, 4], strides = [1, 1, 1]} : vector<10x10x4xbf16> to vector<8x8x4xbf16>
    %51 = vector.extract_strided_slice %42 {offsets = [2, 2, 0], sizes = [8, 8, 4], strides = [1, 1, 1]} : vector<10x10x4xbf16> to vector<8x8x4xbf16>
    %52 = tpu.concatenate %43, %44, %45, %46, %47, %48, %49, %50, %51 in 2 : vector<8x8x4xbf16>, vector<8x8x4xbf16>, vector<8x8x4xbf16>, vector<8x8x4xbf16>, vector<8x8x4xbf16>, vector<8x8x4xbf16>, vector<8x8x4xbf16>, vector<8x8x4xbf16>, vector<8x8x4xbf16> -> vector<8x8x36xbf16>
    %53 = vector.shape_cast %52 : vector<8x8x36xbf16> to vector<64x36xbf16>
    %c2 = arith.constant 2 : index
    %c0_18 = arith.constant 0 : index
    %c0_19 = arith.constant 0 : index
    %54 = vector.load %arg3[%c2, %c0_18, %c0_19] : memref<3x36x128xbf16, #tpu.memory_space<vmem>>, vector<1x36x128xbf16>
    %55 = vector.shape_cast %54 : vector<1x36x128xbf16> to vector<36x128xbf16>
    %cst_20 = arith.constant dense<0.000000e+00> : vector<64x128xf32>
    %56 = tpu.matmul %53, %55, %cst_20 {dimension_numbers = #tpu.dot_dimension_numbers<[1], [0], [0], [1], [0, 0, 1, 1], [], []>} : vector<64x36xbf16>, vector<36x128xbf16>, vector<64x128xf32> -> vector<64x128xf32>
    %57 = arith.addf %38, %56 : vector<64x128xf32>
    %c0_21 = arith.constant 0 : index
    %c0_22 = arith.constant 0 : index
    %58 = vector.load %arg4[%c0_21, %c0_22] : memref<1x128xf32, #tpu.memory_space<vmem>>, vector<1x128xf32>
    %59 = vector.broadcast %58 : vector<1x128xf32> to vector<64x128xf32>
    %60 = arith.addf %57, %59 : vector<64x128xf32>
    %cst_23 = arith.constant 0.000000e+00 : f32
    %61 = vector.broadcast %cst_23 : f32 to vector<64x128xf32>
    %62 = arith.maximumf %60, %61 : vector<64x128xf32>
    %63 = arith.truncf %62 : vector<64x128xf32> to vector<64x128xbf16>
    %c0_24 = arith.constant 0 : index
    %c0_25 = arith.constant 0 : index
    %64 = vector.load %arg5[%c0_24, %c0_25] : memref<64x128xbf16, #tpu.memory_space<vmem>>, vector<64x128xbf16>
    tpu.vector_store %arg5[%c0_24, %c0_25], %63 {strides = array<i32>} : memref<64x128xbf16, #tpu.memory_space<vmem>>, vector<64x128xbf16>,
    return
  }
  func.func @transform_0(%arg0: i32, %arg1: i32) -> (i32, i32, i32, i32, i32) {
    %c0_i32 = arith.constant 0 : i32
    %c0_i32_0 = arith.constant 0 : i32
    %c0_i32_1 = arith.constant 0 : i32
    %c0_i32_2 = arith.constant 0 : i32
    %c0_i32_3 = arith.constant 0 : i32
    return %arg0, %c0_i32, %c0_i32_0, %c0_i32_1, %c0_i32_2 : i32, i32, i32, i32, i32
  }
  func.func @transform_1(%arg0: i32, %arg1: i32) -> (i32, i32, i32) {
    %c0_i32 = arith.constant 0 : i32
    %c0_i32_0 = arith.constant 0 : i32
    %c0_i32_1 = arith.constant 0 : i32
    %c0_i32_2 = arith.constant 0 : i32
    return %c0_i32, %c0_i32_0, %c0_i32_1 : i32, i32, i32
  }
  func.func @transform_2(%arg0: i32, %arg1: i32) -> (i32, i32) {
    %c0_i32 = arith.constant 0 : i32
    %c0_i32_0 = arith.constant 0 : i32
    %c0_i32_1 = arith.constant 0 : i32
    return %c0_i32, %c0_i32_0 : i32, i32
  }
  func.func @transform_3(%arg0: i32, %arg1: i32) -> (i32, i32) {
    %c4_i32 = arith.constant 4 : i32
    %0 = arith.muli %arg0, %c4_i32 : i32
    %1 = arith.addi %0, %arg1 : i32
    %c0_i32 = arith.constant 0 : i32
    %c0_i32_0 = arith.constant 0 : i32
    return %1, %c0_i32 : i32, i32
  }
}

module attributes {stable_mosaic.version = 11 : i64} {
  func.func @_pool_1x1_kernel(%arg0: i32, %arg1: i32, %arg2: memref<1x6x10x10x4xbf16, #tpu.memory_space<vmem>>, %arg3: memref<4x128xbf16, #tpu.memory_space<vmem>>, %arg4: memref<1x128xf32, #tpu.memory_space<vmem>>, %arg5: memref<64x128xbf16, #tpu.memory_space<vmem>>) attributes {dimension_semantics = [#tpu.dimension_semantics<parallel>, #tpu.dimension_semantics<arbitrary>], iteration_bounds = array<i64: 2, 4>, scalar_prefetch = 0 : i64, scratch_operands = 0 : i64, tpu.core_type = #tpu.core_type<tc>, window_params = [{transform_indices = @transform_0, window_bounds = array<i64: 1, 6, 10, 10, 4>}, {pipeline_mode = #tpu.pipeline_mode<synchronous>, transform_indices = @transform_1, window_bounds = array<i64: 4, 128>}, {pipeline_mode = #tpu.pipeline_mode<synchronous>, transform_indices = @transform_2, window_bounds = array<i64: 1, 128>}, {transform_indices = @transform_3, window_bounds = array<i64: 64, 128>}]} {
    %c0 = arith.constant 0 : index
    %0 = arith.index_cast %arg1 : i32 to index
    %c0_0 = arith.constant 0 : index
    %c0_1 = arith.constant 0 : index
    %c0_2 = arith.constant 0 : index
    %1 = vector.load %arg2[%c0, %0, %c0_0, %c0_1, %c0_2] : memref<1x6x10x10x4xbf16, #tpu.memory_space<vmem>>, vector<1x1x10x10x4xbf16>
    %2 = vector.shape_cast %1 : vector<1x1x10x10x4xbf16> to vector<10x10x4xbf16>
    %c1_i32 = arith.constant 1 : i32
    %3 = arith.addi %arg1, %c1_i32 : i32
    %c0_3 = arith.constant 0 : index
    %4 = arith.index_cast %3 : i32 to index
    %c0_4 = arith.constant 0 : index
    %c0_5 = arith.constant 0 : index
    %c0_6 = arith.constant 0 : index
    %5 = vector.load %arg2[%c0_3, %4, %c0_4, %c0_5, %c0_6] : memref<1x6x10x10x4xbf16, #tpu.memory_space<vmem>>, vector<1x1x10x10x4xbf16>
    %6 = vector.shape_cast %5 : vector<1x1x10x10x4xbf16> to vector<10x10x4xbf16>
    %7 = arith.maximumf %2, %6 : vector<10x10x4xbf16>
    %c2_i32 = arith.constant 2 : i32
    %8 = arith.addi %arg1, %c2_i32 : i32
    %c0_7 = arith.constant 0 : index
    %9 = arith.index_cast %8 : i32 to index
    %c0_8 = arith.constant 0 : index
    %c0_9 = arith.constant 0 : index
    %c0_10 = arith.constant 0 : index
    %10 = vector.load %arg2[%c0_7, %9, %c0_8, %c0_9, %c0_10] : memref<1x6x10x10x4xbf16, #tpu.memory_space<vmem>>, vector<1x1x10x10x4xbf16>
    %11 = vector.shape_cast %10 : vector<1x1x10x10x4xbf16> to vector<10x10x4xbf16>
    %12 = arith.maximumf %7, %11 : vector<10x10x4xbf16>
    %13 = vector.extract_strided_slice %12 {offsets = [0, 0, 0], sizes = [10, 8, 4], strides = [1, 1, 1]} : vector<10x10x4xbf16> to vector<10x8x4xbf16>
    %14 = vector.extract_strided_slice %12 {offsets = [0, 1, 0], sizes = [10, 8, 4], strides = [1, 1, 1]} : vector<10x10x4xbf16> to vector<10x8x4xbf16>
    %15 = arith.maximumf %13, %14 : vector<10x8x4xbf16>
    %16 = vector.extract_strided_slice %12 {offsets = [0, 2, 0], sizes = [10, 8, 4], strides = [1, 1, 1]} : vector<10x10x4xbf16> to vector<10x8x4xbf16>
    %17 = arith.maximumf %15, %16 : vector<10x8x4xbf16>
    %18 = vector.extract_strided_slice %17 {offsets = [0, 0, 0], sizes = [8, 8, 4], strides = [1, 1, 1]} : vector<10x8x4xbf16> to vector<8x8x4xbf16>
    %19 = vector.extract_strided_slice %17 {offsets = [1, 0, 0], sizes = [8, 8, 4], strides = [1, 1, 1]} : vector<10x8x4xbf16> to vector<8x8x4xbf16>
    %20 = arith.maximumf %18, %19 : vector<8x8x4xbf16>
    %21 = vector.extract_strided_slice %17 {offsets = [2, 0, 0], sizes = [8, 8, 4], strides = [1, 1, 1]} : vector<10x8x4xbf16> to vector<8x8x4xbf16>
    %22 = arith.maximumf %20, %21 : vector<8x8x4xbf16>
    %23 = vector.shape_cast %22 : vector<8x8x4xbf16> to vector<64x4xbf16>
    %c0_11 = arith.constant 0 : index
    %c0_12 = arith.constant 0 : index
    %24 = vector.load %arg3[%c0_11, %c0_12] : memref<4x128xbf16, #tpu.memory_space<vmem>>, vector<4x128xbf16>
    %cst = arith.constant dense<0.000000e+00> : vector<64x128xf32>
    %25 = tpu.matmul %23, %24, %cst {dimension_numbers = #tpu.dot_dimension_numbers<[1], [0], [0], [1], [0, 0, 1, 1], [], []>} : vector<64x4xbf16>, vector<4x128xbf16>, vector<64x128xf32> -> vector<64x128xf32>
    %c0_13 = arith.constant 0 : index
    %c0_14 = arith.constant 0 : index
    %26 = vector.load %arg4[%c0_13, %c0_14] : memref<1x128xf32, #tpu.memory_space<vmem>>, vector<1x128xf32>
    %27 = vector.broadcast %26 : vector<1x128xf32> to vector<64x128xf32>
    %28 = arith.addf %25, %27 : vector<64x128xf32>
    %cst_15 = arith.constant 0.000000e+00 : f32
    %29 = vector.broadcast %cst_15 : f32 to vector<64x128xf32>
    %30 = arith.maximumf %28, %29 : vector<64x128xf32>
    %31 = arith.truncf %30 : vector<64x128xf32> to vector<64x128xbf16>
    %c0_16 = arith.constant 0 : index
    %c0_17 = arith.constant 0 : index
    %32 = vector.load %arg5[%c0_16, %c0_17] : memref<64x128xbf16, #tpu.memory_space<vmem>>, vector<64x128xbf16>
    tpu.vector_store %arg5[%c0_16, %c0_17], %31 {strides = array<i32>} : memref<64x128xbf16, #tpu.memory_space<vmem>>, vector<64x128xbf16>,
    return
  }
  func.func @transform_0(%arg0: i32, %arg1: i32) -> (i32, i32, i32, i32, i32) {
    %c0_i32 = arith.constant 0 : i32
    %c0_i32_0 = arith.constant 0 : i32
    %c0_i32_1 = arith.constant 0 : i32
    %c0_i32_2 = arith.constant 0 : i32
    %c0_i32_3 = arith.constant 0 : i32
    return %arg0, %c0_i32, %c0_i32_0, %c0_i32_1, %c0_i32_2 : i32, i32, i32, i32, i32
  }
  func.func @transform_1(%arg0: i32, %arg1: i32) -> (i32, i32) {
    %c0_i32 = arith.constant 0 : i32
    %c0_i32_0 = arith.constant 0 : i32
    %c0_i32_1 = arith.constant 0 : i32
    return %c0_i32, %c0_i32_0 : i32, i32
  }
  func.func @transform_2(%arg0: i32, %arg1: i32) -> (i32, i32) {
    %c0_i32 = arith.constant 0 : i32
    %c0_i32_0 = arith.constant 0 : i32
    %c0_i32_1 = arith.constant 0 : i32
    return %c0_i32, %c0_i32_0 : i32, i32
  }
  func.func @transform_3(%arg0: i32, %arg1: i32) -> (i32, i32) {
    %c4_i32 = arith.constant 4 : i32
    %0 = arith.muli %arg0, %c4_i32 : i32
    %1 = arith.addi %0, %arg1 : i32
    %c0_i32 = arith.constant 0 : i32
    %c0_i32_0 = arith.constant 0 : i32
    return %1, %c0_i32 : i32, i32
  }
}

</mosaic_0001>

<llo_original>
// kernel: inception_module.4
$region0: #{inception_module.4}
  #allocation0 [shape = 'u32[]', space=smem, size = 0x4, offset = 0x4, fixed_abs, tag = 'smem constant byte address 0x4 - core index']
  #allocation1 [shape = 'u32[144,128]{1,0:T(1,128)}', space=vmem, size = 0x12000, scoped, tag = 'internal scratch']
  %s0 = inlined_call_operand.vmem [shape: bf16[512,4], index: 0, kind: input, shape index: {}]
  %s1 = inlined_call_operand.vmem [shape: bf16[4,128], index: 1, kind: input, shape index: {}]
  %s2 = inlined_call_operand.vmem [shape: f32[1,128], index: 2, kind: input, shape index: {}]
  %s3 = inlined_call_operand.vmem [shape: bf16[512,128], index: 3, kind: output, shape index: {}]
  %s4 = sld [smem:[#allocation0]]
  $region45: #{inception_module.4} parent=0
    _
  %s6 = ssub.s32 1, %s4
  %s7 = scalar_select 0, %s6, %s4
  loop: start=0, step=1, limit=4
  $region2: #{inception_module.4} parent=0 // loop_pre_header
    _
  $region3: #{inception_module.4} parent=0 // loop_header
    %s9 = sphi 0, %s13
    %p10 = scmp.ge.s32.totalorder %s9, 4
    %s19 = sphi 0, %s21
    %s22 = sphi 0, %s19
    %s23 = sphi 0, %s22
    %s39 = sphi 0, %s23
    %s43 = sphi 0, %s43
    %s45 = sphi 0, %s43
    %s46 = sphi 0, %s45
    %s60 = sphi 0, %s46
    %s64 = sphi 0, %s64
    %s66 = sphi 0, %s64
    %s67 = sphi 0, %s66
    %s81 = sphi 0, %s67
    %s87 = sphi 0, %s89
    %s90 = sphi 0, %s87
    %s91 = sphi 0, %s90
    %s107 = sphi 0, %s91
  $region4: #{inception_module.4} parent=0 // loop_header_branch
    %12 = sbr.rel (%p10) target = $region8
  $region5: #{inception_module.4} parent=0 // loop_body
    %s14 = ssub.s32 %s9, 1
    %s15 = ssub.s32 %s9, 2
    %s16 = sadd.s32 %s9, 1
    %s17 = ssub.s32 %s9, %s16
    %p18 = scmp.eq.s32.totalorder %s17, 0
    %s20 = sadd.s32 %s19, 1
    %s21 = scalar_select %p18, %s19, %s20
    %p24 = pneg %p18
    %p25 = scmp.eq.s32.totalorder %s9, 1
    %p26 = por %p24, %p25
    %p27 = scmp.ne.s32.totalorder %s19, %s22
    %p28 = scmp.eq.s32.totalorder %s9, 0
    %p29 = por %p27, %p28
    %p30 = scmp.ne.s32.totalorder %s19, %s22
    %p31 = scmp.eq.s32.totalorder %s14, 1
    %p32 = por %p30, %p31
    %p33 = scmp.ne.s32.totalorder %s22, %s23
    %p34 = scmp.eq.s32.totalorder %s14, 0
    %p35 = por %p33, %p34
    %p36 = scmp.ne.s32.totalorder %s22, %s23
    %p37 = scmp.eq.s32.totalorder %s15, 1
    %p38 = por %p36, %p37
    %p40 = scmp.ne.s32.totalorder %s23, %s39
    %p41 = scmp.eq.s32.totalorder %s15, 0
    %p42 = por %p40, %p41
    %s44 = sadd.s32 %s43, 1
    %p47 = scmp.eq.s32.totalorder %s9, 1
    %p48 = scmp.ne.s32.totalorder %s43, %s45
    %p49 = scmp.eq.s32.totalorder %s9, 0
    %p50 = por %p48, %p49
    %p51 = scmp.ne.s32.totalorder %s43, %s45
    %p52 = scmp.eq.s32.totalorder %s14, 1
    %p53 = por %p51, %p52
    %p54 = scmp.ne.s32.totalorder %s45, %s46
    %p55 = scmp.eq.s32.totalorder %s14, 0
    %p56 = por %p54, %p55
    %p57 = scmp.ne.s32.totalorder %s45, %s46
    %p58 = scmp.eq.s32.totalorder %s15, 1
    %p59 = por %p57, %p58
    %p61 = scmp.ne.s32.totalorder %s46, %s60
    %p62 = scmp.eq.s32.totalorder %s15, 0
    %p63 = por %p61, %p62
    %s65 = sadd.s32 %s64, 1
    %p68 = scmp.eq.s32.totalorder %s9, 1
    %p69 = scmp.ne.s32.totalorder %s64, %s66
    %p70 = scmp.eq.s32.totalorder %s9, 0
    %p71 = por %p69, %p70
    %p72 = scmp.ne.s32.totalorder %s64, %s66
    %p73 = scmp.eq.s32.totalorder %s14, 1
    %p74 = por %p72, %p73
    %p75 = scmp.ne.s32.totalorder %s66, %s67
    %p76 = scmp.eq.s32.totalorder %s14, 0
    %p77 = por %p75, %p76
    %p78 = scmp.ne.s32.totalorder %s66, %s67
    %p79 = scmp.eq.s32.totalorder %s15, 1
    %p80 = por %p78, %p79
    %p82 = scmp.ne.s32.totalorder %s67, %s81
    %p83 = scmp.eq.s32.totalorder %s15, 0
    %p84 = por %p82, %p83
    %s85 = ssub.s32 %s9, %s16
    %p86 = scmp.eq.s32.totalorder %s85, 0
    %s88 = sadd.s32 %s87, 1
    %s89 = scalar_select %p86, %s87, %s88
    %p92 = pneg %p86
    %p93 = scmp.eq.s32.totalorder %s9, 1
    %p94 = por %p92, %p93
    %p95 = scmp.ne.s32.totalorder %s87, %s90
    %p96 = scmp.eq.s32.totalorder %s9, 0
    %p97 = por %p95, %p96
    %p98 = scmp.ne.s32.totalorder %s87, %s90
    %p99 = scmp.eq.s32.totalorder %s14, 1
    %p100 = por %p98, %p99
    %p101 = scmp.ne.s32.totalorder %s90, %s91
    %p102 = scmp.eq.s32.totalorder %s14, 0
    %p103 = por %p101, %p102
    %p104 = scmp.ne.s32.totalorder %s90, %s91
    %p105 = scmp.eq.s32.totalorder %s15, 1
    %p106 = por %p104, %p105
    %p108 = scmp.ne.s32.totalorder %s91, %s107
    %p109 = scmp.eq.s32.totalorder %s15, 0
    %p110 = por %p108, %p109
    %p111 = scmp.le.s32.totalorder 1, %s9
    %p112 = scmp.lt.s32.totalorder %s9, 3
    %p113 = pnand %p111, %p112
    %p114 = pneg %p113
    // Predicated region
    $region9: #{inception_module.4} parent=5 // pred_check
      _
    $region10: #{inception_module.4} parent=5 // pred_check_branch
      %116 = sbr.rel (%p113) target = $region12
    $region11: #{inception_module.4} parent=5 // pred_region
      %s117 = ssub.s32 %s9, 1
      // Predicated region
      $region13: #{inception_module.4} parent=11 // pred_check
        %p118 = pneg %p56
      $region14: #{inception_module.4} parent=11 // pred_check_branch
        %120 = sbr.rel (%p118) target = $region16
      $region15: #{inception_module.4} parent=11 // pred_region
        _
      $region16: #{inception_module.4} parent=11 // pred_fallthru
        _
      // Predicated region
      $region17: #{inception_module.4} parent=11 // pred_check
        %p121 = pneg %p77
      $region18: #{inception_module.4} parent=11 // pred_check_branch
        %123 = sbr.rel (%p121) target = $region20
      $region19: #{inception_module.4} parent=11 // pred_region
        _
      $region20: #{inception_module.4} parent=11 // pred_fallthru
        _
    $region12: #{inception_module.4} parent=5 // pred_fallthru
      _
    %p124 = scmp.lt.s32.totalorder %s9, 2
    // Predicated region
    $region21: #{inception_module.4} parent=5 // pred_check
      %p125 = pneg %p124
    $region22: #{inception_module.4} parent=5 // pred_check_branch
      %127 = sbr.rel (%p125) target = $region24
    $region23: #{inception_module.4} parent=5 // pred_region
      // Predicated region
      $region25: #{inception_module.4} parent=23 // pred_check
        %p128 = pneg %p29
      $region26: #{inception_module.4} parent=23 // pred_check_branch
        %130 = sbr.rel (%p128) target = $region28
      $region27: #{inception_module.4} parent=23 // pred_region
        %s131 = smul.u32 32, %s9
        %p132 = scmp.lt.s32.totalorder %s131, 63
        %s133 = scalar_select %p132, %s131, 63
        %s134 = smul.addr %s133, 4
        %s135 = scalar_lea.vmem %s0, %s134
        %s136 = smul.u32 32, %s9
      $region28: #{inception_module.4} parent=23 // pred_fallthru
        _
    $region24: #{inception_module.4} parent=5 // pred_fallthru
      _
    %p137 = scmp.le.s32.totalorder 1, %s9
    %p138 = scmp.lt.s32.totalorder %s9, 3
    %p139 = pnand %p137, %p138
    %p140 = pneg %p139
    // Predicated region
    $region29: #{inception_module.4} parent=5 // pred_check
      _
    $region30: #{inception_module.4} parent=5 // pred_check_branch
      %142 = sbr.rel (%p139) target = $region32
    $region31: #{inception_module.4} parent=5 // pred_region
      %s143 = ssub.s32 %s9, 1
      %s144 = smul.u32 32, %s14
      %p145 = scmp.lt.s32.totalorder %s144, 63
      %s146 = scalar_select %p145, %s144, 63
      %s147 = smul.addr %s146, 4
      %s148 = scalar_lea.vmem %s0, %s147
      %p149 = pneg %p35
      %p150 = pneg %p32
      %p151 = pneg %p56
      %p152 = pneg %p53
      %p153 = pneg %p77
      %p154 = pneg %p74
      %p155 = pneg %p103
      %p156 = pneg %p100
      %s157 = smul.u32 32, %s14
      %p158 = scmp.lt.s32.totalorder %s157, 63
      %s159 = scalar_select %p158, %s157, 63
      %s160 = smul.addr %s159, 4
      %s161 = scalar_lea.vmem %s3, %s160
      %s162 = smul.u32 32, %s14
      %p163 = scmp.lt.s32.totalorder %s162, 63
      %s164 = scalar_select %p163, %s162, 63
      %s165 = smul.addr %s164, 4
      %s166 = scalar_lea.vmem %s0, %s165
      %s167 = smul.u32 32, %s14
      %s168 = smul.u32 32, %s14
      %p169 = scmp.lt.s32.totalorder %s168, 63
      %s170 = scalar_select %p169, %s168, 63
      %s171 = smul.addr %s170, 4
      %s172 = scalar_lea.vmem %s3, %s171
      %s173 = smul.u32 32, %s14
      %v175 = vld [vmem:[%s166] sm:$0xf]
      %v176 = vld [vmem:[%s166 + $0x4] sm:$0xf]
      %v177 = vld [vmem:[%s166 + $0x8] sm:$0xf]
      %v178 = vld [vmem:[%s166 + $0xc] sm:$0xf]
      %v179 = vld [vmem:[%s166 + $0x10] sm:$0xf]
      %v180 = vld [vmem:[%s166 + $0x14] sm:$0xf]
      %v181 = vld [vmem:[%s166 + $0x18] sm:$0xf]
      %v182 = vld [vmem:[%s166 + $0x1c] sm:$0xf]
      %v183 = vld [vmem:[%s166 + $0x20] sm:$0xf]
      %v184 = vld [vmem:[%s166 + $0x24] sm:$0xf]
      %v185 = vld [vmem:[%s166 + $0x28] sm:$0xf]
      %v186 = vld [vmem:[%s166 + $0x2c] sm:$0xf]
      %v187 = vld [vmem:[%s166 + $0x30] sm:$0xf]
      %v188 = vld [vmem:[%s166 + $0x34] sm:$0xf]
      %v189 = vld [vmem:[%s166 + $0x38] sm:$0xf]
      %v190 = vld [vmem:[%s166 + $0x3c] sm:$0xf]
      %v191 = vld [vmem:[%s166 + $0x40] sm:$0xf]
      %v192 = vld [vmem:[%s166 + $0x44] sm:$0xf]
      %v193 = vld [vmem:[%s166 + $0x48] sm:$0xf]
      %v194 = vld [vmem:[%s166 + $0x4c] sm:$0xf]
      %v195 = vld [vmem:[%s166 + $0x50] sm:$0xf]
      %v196 = vld [vmem:[%s166 + $0x54] sm:$0xf]
      %v197 = vld [vmem:[%s166 + $0x58] sm:$0xf]
      %v198 = vld [vmem:[%s166 + $0x5c] sm:$0xf]
      %v199 = vld [vmem:[%s166 + $0x60] sm:$0xf]
      %v200 = vld [vmem:[%s166 + $0x64] sm:$0xf]
      %v201 = vld [vmem:[%s166 + $0x68] sm:$0xf]
      %v202 = vld [vmem:[%s166 + $0x6c] sm:$0xf]
      %v203 = vld [vmem:[%s166 + $0x70] sm:$0xf]
      %v204 = vld [vmem:[%s166 + $0x74] sm:$0xf]
      %v205 = vld [vmem:[%s166 + $0x78] sm:$0xf]
      %v206 = vld [vmem:[%s166 + $0x7c] sm:$0xf]
      %v207 = vld [vmem:[%s1] sm:$0x3]
      %v208 = vld [vmem:[%s2] sm:$0x1]
      %v210 = vlaneseq
      %v211 = vshrl.u32 %v210, 7
      %v212 = vsub.s32 0, %v211
      %v213 = vrot.slane %v208, %v212
      %v247 = vunpack.c.l.b16 %v175
      %v248 = vunpack.c.l.b16 %v176
      %v249 = vunpack.c.l.b16 %v177
      %v250 = vunpack.c.l.b16 %v178
      %v251 = vunpack.c.l.b16 %v179
      %v252 = vunpack.c.l.b16 %v180
      %v253 = vunpack.c.l.b16 %v181
      %v254 = vunpack.c.l.b16 %v182
      %v255 = vunpack.c.l.b16 %v183
      %v256 = vunpack.c.l.b16 %v184
      %v257 = vunpack.c.l.b16 %v185
      %v258 = vunpack.c.l.b16 %v186
      %v259 = vunpack.c.l.b16 %v187
      %v260 = vunpack.c.l.b16 %v188
      %v261 = vunpack.c.l.b16 %v189
      %v262 = vunpack.c.l.b16 %v190
      %v263 = vunpack.c.l.b16 %v191
      %v264 = vunpack.c.l.b16 %v192
      %v265 = vunpack.c.l.b16 %v193
      %v266 = vunpack.c.l.b16 %v194
      %v267 = vunpack.c.l.b16 %v195
      %v268 = vunpack.c.l.b16 %v196
      %v269 = vunpack.c.l.b16 %v197
      %v270 = vunpack.c.l.b16 %v198
      %v271 = vunpack.c.l.b16 %v199
      %v272 = vunpack.c.l.b16 %v200
      %v273 = vunpack.c.l.b16 %v201
      %v274 = vunpack.c.l.b16 %v202
      %v275 = vunpack.c.l.b16 %v203
      %v276 = vunpack.c.l.b16 %v204
      %v277 = vunpack.c.l.b16 %v205
      %v278 = vunpack.c.l.b16 %v206
      %v279 = vpack.c.b16 %v248, %v247
      %v280 = vpack.c.b16 %v250, %v249
      %v281 = vpack.c.b16 %v252, %v251
      %v282 = vpack.c.b16 %v254, %v253
      %v283 = vpack.c.b16 %v256, %v255
      %v284 = vpack.c.b16 %v258, %v257
      %v285 = vpack.c.b16 %v260, %v259
      %v286 = vpack.c.b16 %v262, %v261
      %v287 = vpack.c.b16 %v264, %v263
      %v288 = vpack.c.b16 %v266, %v265
      %v289 = vpack.c.b16 %v268, %v267
      %v290 = vpack.c.b16 %v270, %v269
      %v291 = vpack.c.b16 %v272, %v271
      %v292 = vpack.c.b16 %v274, %v273
      %v293 = vpack.c.b16 %v276, %v275
      %v294 = vpack.c.b16 %v278, %v277
      %vm295 = vcmask 31744
      %v297 = vsel %vm295, %v279, 0
      %v300 = vsel %vm295, %v280, 0
      %v303 = vsel %vm295, %v281, 0
      %v306 = vsel %vm295, %v282, 0
      %v309 = vsel %vm295, %v283, 0
      %v312 = vsel %vm295, %v284, 0
      %v315 = vsel %vm295, %v285, 0
      %v318 = vsel %vm295, %v286, 0
      %v321 = vsel %vm295, %v287, 0
      %v324 = vsel %vm295, %v288, 0
      %v327 = vsel %vm295, %v289, 0
      %v330 = vsel %vm295, %v290, 0
      %v333 = vsel %vm295, %v291, 0
      %v336 = vsel %vm295, %v292, 0
      %v339 = vsel %vm295, %v293, 0
      %v342 = vsel %vm295, %v294, 0
      %vm344 = vcmask 1041408
      %v346 = vsel %vm344, %v207, 0
      %348 = vmatprep.subr.bf16.mxu0 0
      %349 = vmatpush1.bf16.msra.mxu0 %v346
      %350 = vmatprep.subr.bf16.mxu0 0
      %351 = vmatpush1.bf16.msra.mxu0 0
      %352 = vmatprep.subr.bf16.mxu0 0
      %353 = vmatpush1.bf16.msra.mxu0 0
      %354 = vmatprep.subr.bf16.mxu0 0
      %355 = vmatpush1.bf16.msra.mxu0 0
      %356 = vmatprep.subr.bf16.mxu0 0
      %357 = vmatpush1.bf16.msra.mxu0 0
      %358 = vmatprep.subr.bf16.mxu0 0
      %359 = vmatpush1.bf16.msra.mxu0 0
      %360 = vmatprep.subr.bf16.mxu0 0
      %361 = vmatpush1.bf16.msra.mxu0 0
      %362 = vmatprep.subr.bf16.mxu0 0
      %363 = vmatpush1.bf16.msra.mxu0 0
      %364 = vmatprep.subr.bf16.mxu0 0
      %365 = vmatpush1.bf16.msra.mxu0 0
      %366 = vmatprep.subr.bf16.mxu0 0
      %367 = vmatpush1.bf16.msra.mxu0 0
      %368 = vmatprep.subr.bf16.mxu0 0
      %369 = vmatpush1.bf16.msra.mxu0 0
      %370 = vmatprep.subr.bf16.mxu0 0
      %371 = vmatpush1.bf16.msra.mxu0 0
      %372 = vmatprep.subr.bf16.mxu0 0
      %373 = vmatpush1.bf16.msra.mxu0 0
      %374 = vmatprep.subr.bf16.mxu0 0
      %375 = vmatpush1.bf16.msra.mxu0 0
      %376 = vmatprep.subr.bf16.mxu0 0
      %377 = vmatpush1.bf16.msra.mxu0 0
      %378 = vmatprep.subr.bf16.mxu0 0
      %379 = vmatpush1.bf16.msra.mxu0 0
      %380 = vmatprep.mubr.bf16.mxu0 0
      %381 = vmatmul.mubr.bf16.gmra.mrb[0].mxu0 %v297
      %v382 = vpop.f32.mrb[0].mxu0
      %v383 = vadd.f32 %v213, %v382
      %v384 = vpop.f32.mrb[0].mxu0
      %v385 = vpop.f32.mrb[0].mxu0
      %v386 = vadd.f32 %v213, %v385
      %v387 = vpop.f32.mrb[0].mxu0
      %388 = vmatprep.mubr.bf16.mxu0 0
      %389 = vmatmul.mubr.bf16.gmra.mrb[0].mxu0 %v300
      %v390 = vpop.f32.mrb[0].mxu0
      %v391 = vadd.f32 %v213, %v390
      %v392 = vpop.f32.mrb[0].mxu0
      %v393 = vpop.f32.mrb[0].mxu0
      %v394 = vadd.f32 %v213, %v393
      %v395 = vpop.f32.mrb[0].mxu0
      %396 = vmatprep.mubr.bf16.mxu0 0
      %397 = vmatmul.mubr.bf16.gmra.mrb[0].mxu0 %v303
      %v398 = vpop.f32.mrb[0].mxu0
      %v399 = vadd.f32 %v213, %v398
      %v400 = vpop.f32.mrb[0].mxu0
      %v401 = vpop.f32.mrb[0].mxu0
      %v402 = vadd.f32 %v213, %v401
      %v403 = vpop.f32.mrb[0].mxu0
      %404 = vmatprep.mubr.bf16.mxu0 0
      %405 = vmatmul.mubr.bf16.gmra.mrb[0].mxu0 %v306
      %v406 = vpop.f32.mrb[0].mxu0
      %v407 = vadd.f32 %v213, %v406
      %v408 = vpop.f32.mrb[0].mxu0
      %v409 = vpop.f32.mrb[0].mxu0
      %v410 = vadd.f32 %v213, %v409
      %v411 = vpop.f32.mrb[0].mxu0
      %412 = vmatprep.mubr.bf16.mxu0 0
      %413 = vmatmul.mubr.bf16.gmra.mrb[0].mxu0 %v309
      %v414 = vpop.f32.mrb[0].mxu0
      %v415 = vadd.f32 %v213, %v414
      %v416 = vpop.f32.mrb[0].mxu0
      %v417 = vpop.f32.mrb[0].mxu0
      %v418 = vadd.f32 %v213, %v417
      %v419 = vpop.f32.mrb[0].mxu0
      %420 = vmatprep.mubr.bf16.mxu0 0
      %421 = vmatmul.mubr.bf16.gmra.mrb[0].mxu0 %v312
      %v422 = vpop.f32.mrb[0].mxu0
      %v423 = vadd.f32 %v213, %v422
      %v424 = vpop.f32.mrb[0].mxu0
      %v425 = vpop.f32.mrb[0].mxu0
      %v426 = vadd.f32 %v213, %v425
      %v427 = vpop.f32.mrb[0].mxu0
      %428 = vmatprep.mubr.bf16.mxu0 0
      %429 = vmatmul.mubr.bf16.gmra.mrb[0].mxu0 %v315
      %v430 = vpop.f32.mrb[0].mxu0
      %v431 = vadd.f32 %v213, %v430
      %v432 = vpop.f32.mrb[0].mxu0
      %v433 = vpop.f32.mrb[0].mxu0
      %v434 = vadd.f32 %v213, %v433
      %v435 = vpop.f32.mrb[0].mxu0
      %436 = vmatprep.mubr.bf16.mxu0 0
      %437 = vmatmul.mubr.bf16.gmra.mrb[0].mxu0 %v318
      %v438 = vpop.f32.mrb[0].mxu0
      %v439 = vadd.f32 %v213, %v438
      %v440 = vpop.f32.mrb[0].mxu0
      %v441 = vpop.f32.mrb[0].mxu0
      %v442 = vadd.f32 %v213, %v441
      %v443 = vpop.f32.mrb[0].mxu0
      %444 = vmatprep.mubr.bf16.mxu0 0
      %445 = vmatmul.mubr.bf16.gmra.mrb[0].mxu0 %v321
      %v446 = vpop.f32.mrb[0].mxu0
      %v447 = vadd.f32 %v213, %v446
      %v448 = vpop.f32.mrb[0].mxu0
      %v449 = vpop.f32.mrb[0].mxu0
      %v450 = vadd.f32 %v213, %v449
      %v451 = vpop.f32.mrb[0].mxu0
      %452 = vmatprep.mubr.bf16.mxu0 0
      %453 = vmatmul.mubr.bf16.gmra.mrb[0].mxu0 %v324
      %v454 = vpop.f32.mrb[0].mxu0
      %v455 = vadd.f32 %v213, %v454
      %v456 = vpop.f32.mrb[0].mxu0
      %v457 = vpop.f32.mrb[0].mxu0
      %v458 = vadd.f32 %v213, %v457
      %v459 = vpop.f32.mrb[0].mxu0
      %460 = vmatprep.mubr.bf16.mxu0 0
      %461 = vmatmul.mubr.bf16.gmra.mrb[0].mxu0 %v327
      %v462 = vpop.f32.mrb[0].mxu0
      %v463 = vadd.f32 %v213, %v462
      %v464 = vpop.f32.mrb[0].mxu0
      %v465 = vpop.f32.mrb[0].mxu0
      %v466 = vadd.f32 %v213, %v465
      %v467 = vpop.f32.mrb[0].mxu0
      %468 = vmatprep.mubr.bf16.mxu0 0
      %469 = vmatmul.mubr.bf16.gmra.mrb[0].mxu0 %v330
      %v470 = vpop.f32.mrb[0].mxu0
      %v471 = vadd.f32 %v213, %v470
      %v472 = vpop.f32.mrb[0].mxu0
      %v473 = vpop.f32.mrb[0].mxu0
      %v474 = vadd.f32 %v213, %v473
      %v475 = vpop.f32.mrb[0].mxu0
      %476 = vmatprep.mubr.bf16.mxu0 0
      %477 = vmatmul.mubr.bf16.gmra.mrb[0].mxu0 %v333
      %v478 = vpop.f32.mrb[0].mxu0
      %v479 = vadd.f32 %v213, %v478
      %v480 = vpop.f32.mrb[0].mxu0
      %v481 = vpop.f32.mrb[0].mxu0
      %v482 = vadd.f32 %v213, %v481
      %v483 = vpop.f32.mrb[0].mxu0
      %484 = vmatprep.mubr.bf16.mxu0 0
      %485 = vmatmul.mubr.bf16.gmra.mrb[0].mxu0 %v336
      %v486 = vpop.f32.mrb[0].mxu0
      %v487 = vadd.f32 %v213, %v486
      %v488 = vpop.f32.mrb[0].mxu0
      %v489 = vpop.f32.mrb[0].mxu0
      %v490 = vadd.f32 %v213, %v489
      %v491 = vpop.f32.mrb[0].mxu0
      %492 = vmatprep.mubr.bf16.mxu0 0
      %493 = vmatmul.mubr.bf16.gmra.mrb[0].mxu0 %v339
      %v494 = vpop.f32.mrb[0].mxu0
      %v495 = vadd.f32 %v213, %v494
      %v496 = vpop.f32.mrb[0].mxu0
      %v497 = vpop.f32.mrb[0].mxu0
      %v498 = vadd.f32 %v213, %v497
      %v499 = vpop.f32.mrb[0].mxu0
      %500 = vmatprep.mubr.bf16.mxu0 0
      %501 = vmatmul.mubr.bf16.gmra.mrb[0].mxu0 %v342
      %v502 = vpop.f32.mrb[0].mxu0
      %v503 = vadd.f32 %v213, %v502
      %v504 = vpop.f32.mrb[0].mxu0
      %v505 = vpop.f32.mrb[0].mxu0
      %v506 = vadd.f32 %v213, %v505
      %v507 = vpop.f32.mrb[0].mxu0
      %508 = vdwg.mxu0
      %v509 = vmax.f32 %v383, 0.0
      %v510 = vmax.f32 %v386, 0.0
      %v511 = vmax.f32 %v391, 0.0
      %v512 = vmax.f32 %v394, 0.0
      %v513 = vmax.f32 %v399, 0.0
      %v514 = vmax.f32 %v402, 0.0
      %v515 = vmax.f32 %v407, 0.0
      %v516 = vmax.f32 %v410, 0.0
      %v517 = vmax.f32 %v415, 0.0
      %v518 = vmax.f32 %v418, 0.0
      %v519 = vmax.f32 %v423, 0.0
      %v520 = vmax.f32 %v426, 0.0
      %v521 = vmax.f32 %v431, 0.0
      %v522 = vmax.f32 %v434, 0.0
      %v523 = vmax.f32 %v439, 0.0
      %v524 = vmax.f32 %v442, 0.0
      %v525 = vmax.f32 %v447, 0.0
      %v526 = vmax.f32 %v450, 0.0
      %v527 = vmax.f32 %v455, 0.0
      %v528 = vmax.f32 %v458, 0.0
      %v529 = vmax.f32 %v463, 0.0
      %v530 = vmax.f32 %v466, 0.0
      %v531 = vmax.f32 %v471, 0.0
      %v532 = vmax.f32 %v474, 0.0
      %v533 = vmax.f32 %v479, 0.0
      %v534 = vmax.f32 %v482, 0.0
      %v535 = vmax.f32 %v487, 0.0
      %v536 = vmax.f32 %v490, 0.0
      %v537 = vmax.f32 %v495, 0.0
      %v538 = vmax.f32 %v498, 0.0
      %v539 = vmax.f32 %v503, 0.0
      %v540 = vmax.f32 %v506, 0.0
      %v541 = vpack.c.bf16 %v510, %v509
      %v542 = vpack.c.bf16 %v512, %v511
      %v543 = vpack.c.bf16 %v514, %v513
      %v544 = vpack.c.bf16 %v516, %v515
      %v545 = vpack.c.bf16 %v518, %v517
      %v546 = vpack.c.bf16 %v520, %v519
      %v547 = vpack.c.bf16 %v522, %v521
      %v548 = vpack.c.bf16 %v524, %v523
      %v549 = vpack.c.bf16 %v526, %v525
      %v550 = vpack.c.bf16 %v528, %v527
      %v551 = vpack.c.bf16 %v530, %v529
      %v552 = vpack.c.bf16 %v532, %v531
      %v553 = vpack.c.bf16 %v534, %v533
      %v554 = vpack.c.bf16 %v536, %v535
      %v555 = vpack.c.bf16 %v538, %v537
      %v556 = vpack.c.bf16 %v540, %v539
      %v573 = vunpack.c.l.b16 %v541
      %v574 = vunpack.c.h.b16 %v541
      %v575 = vunpack.c.l.b16 %v542
      %v576 = vunpack.c.h.b16 %v542
      %v577 = vunpack.c.l.b16 %v543
      %v578 = vunpack.c.h.b16 %v543
      %v579 = vunpack.c.l.b16 %v544
      %v580 = vunpack.c.h.b16 %v544
      %v581 = vunpack.c.l.b16 %v545
      %v582 = vunpack.c.h.b16 %v545
      %v583 = vunpack.c.l.b16 %v546
      %v584 = vunpack.c.h.b16 %v546
      %v585 = vunpack.c.l.b16 %v547
      %v586 = vunpack.c.h.b16 %v547
      %v587 = vunpack.c.l.b16 %v548
      %v588 = vunpack.c.h.b16 %v548
      %v589 = vunpack.c.l.b16 %v549
      %v590 = vunpack.c.h.b16 %v549
      %v591 = vunpack.c.l.b16 %v550
      %v592 = vunpack.c.h.b16 %v550
      %v593 = vunpack.c.l.b16 %v551
      %v594 = vunpack.c.h.b16 %v551
      %v595 = vunpack.c.l.b16 %v552
      %v596 = vunpack.c.h.b16 %v552
      %v597 = vunpack.c.l.b16 %v553
      %v598 = vunpack.c.h.b16 %v553
      %v599 = vunpack.c.l.b16 %v554
      %v600 = vunpack.c.h.b16 %v554
      %v601 = vunpack.c.l.b16 %v555
      %v602 = vunpack.c.h.b16 %v555
      %v603 = vunpack.c.l.b16 %v556
      %v604 = vunpack.c.h.b16 %v556
      %v605 = vpack.c.b16 %v573, %v573
      %v606 = vpack.c.b16 %v574, %v574
      %v607 = vpack.c.b16 %v575, %v575
      %v608 = vpack.c.b16 %v576, %v576
      %v609 = vpack.c.b16 %v577, %v577
      %v610 = vpack.c.b16 %v578, %v578
      %v611 = vpack.c.b16 %v579, %v579
      %v612 = vpack.c.b16 %v580, %v580
      %v613 = vpack.c.b16 %v581, %v581
      %v614 = vpack.c.b16 %v582, %v582
      %v615 = vpack.c.b16 %v583, %v583
      %v616 = vpack.c.b16 %v584, %v584
      %v617 = vpack.c.b16 %v585, %v585
      %v618 = vpack.c.b16 %v586, %v586
      %v619 = vpack.c.b16 %v587, %v587
      %v620 = vpack.c.b16 %v588, %v588
      %v621 = vpack.c.b16 %v589, %v589
      %v622 = vpack.c.b16 %v590, %v590
      %v623 = vpack.c.b16 %v591, %v591
      %v624 = vpack.c.b16 %v592, %v592
      %v625 = vpack.c.b16 %v593, %v593
      %v626 = vpack.c.b16 %v594, %v594
      %v627 = vpack.c.b16 %v595, %v595
      %v628 = vpack.c.b16 %v596, %v596
      %v629 = vpack.c.b16 %v597, %v597
      %v630 = vpack.c.b16 %v598, %v598
      %v631 = vpack.c.b16 %v599, %v599
      %v632 = vpack.c.b16 %v600, %v600
      %v633 = vpack.c.b16 %v601, %v601
      %v634 = vpack.c.b16 %v602, %v602
      %v635 = vpack.c.b16 %v603, %v603
      %v636 = vpack.c.b16 %v604, %v604
      %669 = vst [vmem:[%s172] sm:$0xf] %v605
      %670 = vst [vmem:[%s172 + $0x4] sm:$0xf] %v606
      %671 = vst [vmem:[%s172 + $0x8] sm:$0xf] %v607
      %672 = vst [vmem:[%s172 + $0xc] sm:$0xf] %v608
      %673 = vst [vmem:[%s172 + $0x10] sm:$0xf] %v609
      %674 = vst [vmem:[%s172 + $0x14] sm:$0xf] %v610
      %675 = vst [vmem:[%s172 + $0x18] sm:$0xf] %v611
      %676 = vst [vmem:[%s172 + $0x1c] sm:$0xf] %v612
      %677 = vst [vmem:[%s172 + $0x20] sm:$0xf] %v613
      %678 = vst [vmem:[%s172 + $0x24] sm:$0xf] %v614
      %679 = vst [vmem:[%s172 + $0x28] sm:$0xf] %v615
      %680 = vst [vmem:[%s172 + $0x2c] sm:$0xf] %v616
      %681 = vst [vmem:[%s172 + $0x30] sm:$0xf] %v617
      %682 = vst [vmem:[%s172 + $0x34] sm:$0xf] %v618
      %683 = vst [vmem:[%s172 + $0x38] sm:$0xf] %v619
      %684 = vst [vmem:[%s172 + $0x3c] sm:$0xf] %v620
      %685 = vst [vmem:[%s172 + $0x40] sm:$0xf] %v621
      %686 = vst [vmem:[%s172 + $0x44] sm:$0xf] %v622
      %687 = vst [vmem:[%s172 + $0x48] sm:$0xf] %v623
      %688 = vst [vmem:[%s172 + $0x4c] sm:$0xf] %v624
      %689 = vst [vmem:[%s172 + $0x50] sm:$0xf] %v625
      %690 = vst [vmem:[%s172 + $0x54] sm:$0xf] %v626
      %691 = vst [vmem:[%s172 + $0x58] sm:$0xf] %v627
      %692 = vst [vmem:[%s172 + $0x5c] sm:$0xf] %v628
      %693 = vst [vmem:[%s172 + $0x60] sm:$0xf] %v629
      %694 = vst [vmem:[%s172 + $0x64] sm:$0xf] %v630
      %695 = vst [vmem:[%s172 + $0x68] sm:$0xf] %v631
      %696 = vst [vmem:[%s172 + $0x6c] sm:$0xf] %v632
      %697 = vst [vmem:[%s172 + $0x70] sm:$0xf] %v633
      %698 = vst [vmem:[%s172 + $0x74] sm:$0xf] %v634
      %699 = vst [vmem:[%s172 + $0x78] sm:$0xf] %v635
      %700 = vst [vmem:[%s172 + $0x7c] sm:$0xf] %v636
      %s701 = smul.u32 32, %s14
      %p702 = scmp.lt.s32.totalorder %s701, 63
      %s703 = scalar_select %p702, %s701, 63
      %s704 = smul.addr %s703, 4
      %s705 = scalar_lea.vmem %s3, %s704
      // Predicated region
      $region33: #{inception_module.4} parent=31 // pred_check
        %p706 = pneg %p100
      $region34: #{inception_module.4} parent=31 // pred_check_branch
        %708 = sbr.rel (%p706) target = $region36
      $region35: #{inception_module.4} parent=31 // pred_region
        %s709 = smul.u32 32, %s14
      $region36: #{inception_module.4} parent=31 // pred_fallthru
        _
    $region32: #{inception_module.4} parent=5 // pred_fallthru
      _
    %p710 = scmp.le.s32.totalorder 2, %s9
    // Predicated region
    $region37: #{inception_module.4} parent=5 // pred_check
      %p711 = pneg %p710
    $region38: #{inception_module.4} parent=5 // pred_check_branch
      %713 = sbr.rel (%p711) target = $region40
    $region39: #{inception_module.4} parent=5 // pred_region
      %s714 = ssub.s32 %s9, 2
      // Predicated region
      $region41: #{inception_module.4} parent=39 // pred_check
        %p715 = pneg %p106
      $region42: #{inception_module.4} parent=39 // pred_check_branch
        %717 = sbr.rel (%p715) target = $region44
      $region43: #{inception_module.4} parent=39 // pred_region
        %s718 = smul.u32 32, %s15
        %p719 = scmp.lt.s32.totalorder %s718, 63
        %s720 = scalar_select %p719, %s718, 63
        %s721 = smul.addr %s720, 4
        %s722 = scalar_lea.vmem %s3, %s721
      $region44: #{inception_module.4} parent=39 // pred_fallthru
        _
    $region40: #{inception_module.4} parent=5 // pred_fallthru
      _
  $region6: #{inception_module.4} parent=0 // loop_footer
    %s13 = sadd.s32 1, %s9
  $region7: #{inception_module.4} parent=0 // loop_footer_branch
    %8 = sbr.rel target = $region3
  $region8: #{inception_module.4} parent=0 // loop_exit
    _

// kernel: inception_module.7
$region0: #{inception_module.7}
  #allocation0 [shape = 'u32[]', space=smem, size = 0x4, offset = 0x4, fixed_abs, tag = 'smem constant byte address 0x4 - core index']
  #allocation1 [shape = 'u32[144,128]{1,0:T(1,128)}', space=vmem, size = 0x12000, scoped, tag = 'internal scratch']
  %s0 = inlined_call_operand.vmem [shape: bf16[2,6,10,10,4], index: 0, kind: input, shape index: {}]
  %s1 = inlined_call_operand.vmem [shape: bf16[4,128], index: 1, kind: input, shape index: {}]
  %s2 = inlined_call_operand.vmem [shape: f32[1,128], index: 2, kind: input, shape index: {}]
  %s3 = inlined_call_operand.vmem [shape: bf16[512,128], index: 3, kind: output, shape index: {}]
  %s4 = sld [smem:[#allocation0]]
  $region45: #{inception_module.7} parent=0
    _
  %s6 = ssub.s32 1, %s4
  %s7 = scalar_select 0, %s6, %s4
  loop: start=0, step=1, limit=10
  $region2: #{inception_module.7} parent=0 // loop_pre_header
    _
  $region3: #{inception_module.7} parent=0 // loop_header
    %s9 = sphi 0, %s13
    %p10 = scmp.ge.s32.totalorder %s9, 10
    %s16 = sphi 0, %s28
    %s17 = sphi 0, %s24
    %s18 = sphi 0, %s16
    %s19 = sphi 0, %s17
    %s20 = sphi 0, %s18
    %s21 = sphi 0, %s19
    %s31 = sphi 0, %s33
    %s34 = sphi 0, %s31
    %s35 = sphi 0, %s34
    %s51 = sphi 0, %s35
    %s55 = sphi 0, %s55
    %s57 = sphi 0, %s55
    %s58 = sphi 0, %s57
    %s72 = sphi 0, %s58
    %s76 = sphi 0, %s76
    %s78 = sphi 0, %s76
    %s79 = sphi 0, %s78
    %s93 = sphi 0, %s79
    %s103 = sphi 0, %s105
    %s106 = sphi 0, %s103
    %s107 = sphi 0, %s106
    %s123 = sphi 0, %s107
  $region4: #{inception_module.7} parent=0 // loop_header_branch
    %12 = sbr.rel (%p10) target = $region8
  $region5: #{inception_module.7} parent=0 // loop_body
    %s14 = ssub.s32 %s9, 1
    %s15 = ssub.s32 %s9, 2
    %s22 = sadd.s32 1, %s17
    %p23 = scmp.ge.s32.totalorder %s22, 4
    %s24 = scalar_select %p23, 0, %s22
    %s25 = sadd.s32 1, %s16
    %s26 = scalar_select %p23, %s25, %s16
    %p27 = scmp.ge.s32.totalorder %s26, 2
    %s28 = scalar_select %p27, 0, %s26
    %s29 = ssub.s32 %s16, %s28
    %p30 = scmp.eq.s32.totalorder %s29, 0
    %s32 = sadd.s32 %s31, 1
    %s33 = scalar_select %p30, %s31, %s32
    %p36 = pneg %p30
    %p37 = scmp.eq.s32.totalorder %s9, 7
    %p38 = por %p36, %p37
    %p39 = scmp.ne.s32.totalorder %s31, %s34
    %p40 = scmp.eq.s32.totalorder %s9, 0
    %p41 = por %p39, %p40
    %p42 = scmp.ne.s32.totalorder %s31, %s34
    %p43 = scmp.eq.s32.totalorder %s14, 7
    %p44 = por %p42, %p43
    %p45 = scmp.ne.s32.totalorder %s34, %s35
    %p46 = scmp.eq.s32.totalorder %s14, 0
    %p47 = por %p45, %p46
    %p48 = scmp.ne.s32.totalorder %s34, %s35
    %p49 = scmp.eq.s32.totalorder %s15, 7
    %p50 = por %p48, %p49
    %p52 = scmp.ne.s32.totalorder %s35, %s51
    %p53 = scmp.eq.s32.totalorder %s15, 0
    %p54 = por %p52, %p53
    %s56 = sadd.s32 %s55, 1
    %p59 = scmp.eq.s32.totalorder %s9, 7
    %p60 = scmp.ne.s32.totalorder %s55, %s57
    %p61 = scmp.eq.s32.totalorder %s9, 0
    %p62 = por %p60, %p61
    %p63 = scmp.ne.s32.totalorder %s55, %s57
    %p64 = scmp.eq.s32.totalorder %s14, 7
    %p65 = por %p63, %p64
    %p66 = scmp.ne.s32.totalorder %s57, %s58
    %p67 = scmp.eq.s32.totalorder %s14, 0
    %p68 = por %p66, %p67
    %p69 = scmp.ne.s32.totalorder %s57, %s58
    %p70 = scmp.eq.s32.totalorder %s15, 7
    %p71 = por %p69, %p70
    %p73 = scmp.ne.s32.totalorder %s58, %s72
    %p74 = scmp.eq.s32.totalorder %s15, 0
    %p75 = por %p73, %p74
    %s77 = sadd.s32 %s76, 1
    %p80 = scmp.eq.s32.totalorder %s9, 7
    %p81 = scmp.ne.s32.totalorder %s76, %s78
    %p82 = scmp.eq.s32.totalorder %s9, 0
    %p83 = por %p81, %p82
    %p84 = scmp.ne.s32.totalorder %s76, %s78
    %p85 = scmp.eq.s32.totalorder %s14, 7
    %p86 = por %p84, %p85
    %p87 = scmp.ne.s32.totalorder %s78, %s79
    %p88 = scmp.eq.s32.totalorder %s14, 0
    %p89 = por %p87, %p88
    %p90 = scmp.ne.s32.totalorder %s78, %s79
    %p91 = scmp.eq.s32.totalorder %s15, 7
    %p92 = por %p90, %p91
    %p94 = scmp.ne.s32.totalorder %s79, %s93
    %p95 = scmp.eq.s32.totalorder %s15, 0
    %p96 = por %p94, %p95
    %s97 = smul.u32 %s16, 4
    %s98 = sadd.s32 %s97, %s17
    %s99 = smul.u32 %s28, 4
    %s100 = sadd.s32 %s99, %s24
    %s101 = ssub.s32 %s98, %s100
    %p102 = scmp.eq.s32.totalorder %s101, 0
    %s104 = sadd.s32 %s103, 1
    %s105 = scalar_select %p102, %s103, %s104
    %p108 = pneg %p102
    %p109 = scmp.eq.s32.totalorder %s9, 7
    %p110 = por %p108, %p109
    %p111 = scmp.ne.s32.totalorder %s103, %s106
    %p112 = scmp.eq.s32.totalorder %s9, 0
    %p113 = por %p111, %p112
    %p114 = scmp.ne.s32.totalorder %s103, %s106
    %p115 = scmp.eq.s32.totalorder %s14, 7
    %p116 = por %p114, %p115
    %p117 = scmp.ne.s32.totalorder %s106, %s107
    %p118 = scmp.eq.s32.totalorder %s14, 0
    %p119 = por %p117, %p118
    %p120 = scmp.ne.s32.totalorder %s106, %s107
    %p121 = scmp.eq.s32.totalorder %s15, 7
    %p122 = por %p120, %p121
    %p124 = scmp.ne.s32.totalorder %s107, %s123
    %p125 = scmp.eq.s32.totalorder %s15, 0
    %p126 = por %p124, %p125
    %p127 = scmp.le.s32.totalorder 1, %s9
    %p128 = scmp.lt.s32.totalorder %s9, 9
    %p129 = pnand %p127, %p128
    %p130 = pneg %p129
    // Predicated region
    $region9: #{inception_module.7} parent=5 // pred_check
      _
    $region10: #{inception_module.7} parent=5 // pred_check_branch
      %132 = sbr.rel (%p129) target = $region12
    $region11: #{inception_module.7} parent=5 // pred_region
      %s133 = ssub.s32 %s9, 1
      // Predicated region
      $region13: #{inception_module.7} parent=11 // pred_check
        %p134 = pneg %p68
      $region14: #{inception_module.7} parent=11 // pred_check_branch
        %136 = sbr.rel (%p134) target = $region16
      $region15: #{inception_module.7} parent=11 // pred_region
        _
      $region16: #{inception_module.7} parent=11 // pred_fallthru
        _
      // Predicated region
      $region17: #{inception_module.7} parent=11 // pred_check
        %p137 = pneg %p89
      $region18: #{inception_module.7} parent=11 // pred_check_branch
        %139 = sbr.rel (%p137) target = $region20
      $region19: #{inception_module.7} parent=11 // pred_region
        _
      $region20: #{inception_module.7} parent=11 // pred_fallthru
        _
    $region12: #{inception_module.7} parent=5 // pred_fallthru
      _
    %p140 = scmp.lt.s32.totalorder %s9, 8
    // Predicated region
    $region21: #{inception_module.7} parent=5 // pred_check
      %p141 = pneg %p140
    $region22: #{inception_module.7} parent=5 // pred_check_branch
      %143 = sbr.rel (%p141) target = $region24
    $region23: #{inception_module.7} parent=5 // pred_region
      // Predicated region
      $region25: #{inception_module.7} parent=23 // pred_check
        %p144 = pneg %p41
      $region26: #{inception_module.7} parent=23 // pred_check_branch
        %146 = sbr.rel (%p144) target = $region28
      $region27: #{inception_module.7} parent=23 // pred_region
        %p147 = scmp.lt.s32.totalorder %s16, 1
        %s148 = scalar_select %p147, %s16, 1
        %s149 = smul.addr %s148, 120
        %s150 = smul.addr %s149, 4
        %s151 = scalar_lea.vmem %s0, %s150
      $region28: #{inception_module.7} parent=23 // pred_fallthru
        _
    $region24: #{inception_module.7} parent=5 // pred_fallthru
      _
    %p152 = scmp.le.s32.totalorder 1, %s9
    %p153 = scmp.lt.s32.totalorder %s9, 9
    %p154 = pnand %p152, %p153
    %p155 = pneg %p154
    // Predicated region
    $region29: #{inception_module.7} parent=5 // pred_check
      _
    $region30: #{inception_module.7} parent=5 // pred_check_branch
      %157 = sbr.rel (%p154) target = $region32
    $region31: #{inception_module.7} parent=5 // pred_region
      %s158 = ssub.s32 %s9, 1
      %p159 = scmp.lt.s32.totalorder %s18, 1
      %s160 = scalar_select %p159, %s18, 1
      %s161 = smul.addr %s160, 120
      %s162 = smul.addr %s161, 4
      %s163 = scalar_lea.vmem %s0, %s162
      %p164 = pneg %p47
      %p165 = pneg %p44
      %p166 = pneg %p68
      %p167 = pneg %p65
      %p168 = pneg %p89
      %p169 = pneg %p86
      %p170 = pneg %p119
      %p171 = pneg %p116
      %s172 = smul.u32 %s18, 4
      %s173 = sadd.s32 %s172, %s19
      %s174 = smul.u32 8, %s173
      %p175 = scmp.lt.s32.totalorder %s174, 63
      %s176 = scalar_select %p175, %s174, 63
      %s177 = smul.addr %s176, 4
      %s178 = scalar_lea.vmem %s3, %s177
      %p179 = scmp.lt.s32.totalorder %s18, 1
      %s180 = scalar_select %p179, %s18, 1
      %s181 = smul.addr %s180, 120
      %s182 = smul.addr %s181, 4
      %s183 = scalar_lea.vmem %s0, %s182
      %s184 = smul.u32 %s18, 4
      %s185 = sadd.s32 %s184, %s19
      %s186 = smul.u32 8, %s185
      %p187 = scmp.lt.s32.totalorder %s186, 63
      %s188 = scalar_select %p187, %s186, 63
      %s189 = smul.addr %s188, 4
      %s190 = scalar_lea.vmem %s3, %s189
      %s191 = smul.u32 %s18, 4
      %s192 = sadd.s32 %s191, %s19
      %s193 = smul.u32 8, %s192
      %s195 = smul.u32 %s19, 20
      %s196 = smul.addr %s195, 4
      %s197 = scalar_lea.vmem %s183, %s196
      %v198 = vld [vmem:[%s197] sm:$0xf]
      %v199 = vld [vmem:[%s197 + $0x4] sm:$0x1]
      %v200 = vld [vmem:[%s197 + $0x8] sm:$0xf]
      %v201 = vld [vmem:[%s197 + $0xc] sm:$0x1]
      %v202 = vld [vmem:[%s197 + $0x10] sm:$0xf]
      %v203 = vld [vmem:[%s197 + $0x14] sm:$0x1]
      %v204 = vld [vmem:[%s197 + $0x18] sm:$0xf]
      %v205 = vld [vmem:[%s197 + $0x1c] sm:$0x1]
      %v206 = vld [vmem:[%s197 + $0x20] sm:$0xf]
      %v207 = vld [vmem:[%s197 + $0x24] sm:$0x1]
      %v208 = vld [vmem:[%s197 + $0x28] sm:$0xf]
      %v209 = vld [vmem:[%s197 + $0x2c] sm:$0x1]
      %v210 = vld [vmem:[%s197 + $0x30] sm:$0xf]
      %v211 = vld [vmem:[%s197 + $0x34] sm:$0x1]
      %v212 = vld [vmem:[%s197 + $0x38] sm:$0xf]
      %v213 = vld [vmem:[%s197 + $0x3c] sm:$0x1]
      %v214 = vld [vmem:[%s197 + $0x40] sm:$0xf]
      %v215 = vld [vmem:[%s197 + $0x44] sm:$0x1]
      %v216 = vld [vmem:[%s197 + $0x48] sm:$0xf]
      %v217 = vld [vmem:[%s197 + $0x4c] sm:$0x1]
      %s218 = sadd.s32 %s19, 1
      %s219 = smul.u32 %s218, 20
      %s220 = smul.addr %s219, 4
      %s221 = scalar_lea.vmem %s183, %s220
      %v222 = vld [vmem:[%s221] sm:$0xf]
      %v223 = vld [vmem:[%s221 + $0x4] sm:$0x1]
      %v224 = vld [vmem:[%s221 + $0x8] sm:$0xf]
      %v225 = vld [vmem:[%s221 + $0xc] sm:$0x1]
      %v226 = vld [vmem:[%s221 + $0x10] sm:$0xf]
      %v227 = vld [vmem:[%s221 + $0x14] sm:$0x1]
      %v228 = vld [vmem:[%s221 + $0x18] sm:$0xf]
      %v229 = vld [vmem:[%s221 + $0x1c] sm:$0x1]
      %v230 = vld [vmem:[%s221 + $0x20] sm:$0xf]
      %v231 = vld [vmem:[%s221 + $0x24] sm:$0x1]
      %v232 = vld [vmem:[%s221 + $0x28] sm:$0xf]
      %v233 = vld [vmem:[%s221 + $0x2c] sm:$0x1]
      %v234 = vld [vmem:[%s221 + $0x30] sm:$0xf]
      %v235 = vld [vmem:[%s221 + $0x34] sm:$0x1]
      %v236 = vld [vmem:[%s221 + $0x38] sm:$0xf]
      %v237 = vld [vmem:[%s221 + $0x3c] sm:$0x1]
      %v238 = vld [vmem:[%s221 + $0x40] sm:$0xf]
      %v239 = vld [vmem:[%s221 + $0x44] sm:$0x1]
      %v240 = vld [vmem:[%s221 + $0x48] sm:$0xf]
      %v241 = vld [vmem:[%s221 + $0x4c] sm:$0x1]
      %v242 = vmax.bf16 %v198, %v222
      %v243 = vmax.bf16 %v199, %v223
      %v244 = vmax.bf16 %v200, %v224
      %v245 = vmax.bf16 %v201, %v225
      %v246 = vmax.bf16 %v202, %v226
      %v247 = vmax.bf16 %v203, %v227
      %v248 = vmax.bf16 %v204, %v228
      %v249 = vmax.bf16 %v205, %v229
      %v250 = vmax.bf16 %v206, %v230
      %v251 = vmax.bf16 %v207, %v231
      %v252 = vmax.bf16 %v208, %v232
      %v253 = vmax.bf16 %v209, %v233
      %v254 = vmax.bf16 %v210, %v234
      %v255 = vmax.bf16 %v211, %v235
      %v256 = vmax.bf16 %v212, %v236
      %v257 = vmax.bf16 %v213, %v237
      %v258 = vmax.bf16 %v214, %v238
      %v259 = vmax.bf16 %v215, %v239
      %v260 = vmax.bf16 %v216, %v240
      %v261 = vmax.bf16 %v217, %v241
      %s262 = sadd.s32 %s19, 2
      %s263 = smul.u32 %s262, 20
      %s264 = smul.addr %s263, 4
      %s265 = scalar_lea.vmem %s183, %s264
      %v266 = vld [vmem:[%s265] sm:$0xf]
      %v267 = vld [vmem:[%s265 + $0x4] sm:$0x1]
      %v268 = vld [vmem:[%s265 + $0x8] sm:$0xf]
      %v269 = vld [vmem:[%s265 + $0xc] sm:$0x1]
      %v270 = vld [vmem:[%s265 + $0x10] sm:$0xf]
      %v271 = vld [vmem:[%s265 + $0x14] sm:$0x1]
      %v272 = vld [vmem:[%s265 + $0x18] sm:$0xf]
      %v273 = vld [vmem:[%s265 + $0x1c] sm:$0x1]
      %v274 = vld [vmem:[%s265 + $0x20] sm:$0xf]
      %v275 = vld [vmem:[%s265 + $0x24] sm:$0x1]
      %v276 = vld [vmem:[%s265 + $0x28] sm:$0xf]
      %v277 = vld [vmem:[%s265 + $0x2c] sm:$0x1]
      %v278 = vld [vmem:[%s265 + $0x30] sm:$0xf]
      %v279 = vld [vmem:[%s265 + $0x34] sm:$0x1]
      %v280 = vld [vmem:[%s265 + $0x38] sm:$0xf]
      %v281 = vld [vmem:[%s265 + $0x3c] sm:$0x1]
      %v282 = vld [vmem:[%s265 + $0x40] sm:$0xf]
      %v283 = vld [vmem:[%s265 + $0x44] sm:$0x1]
      %v284 = vld [vmem:[%s265 + $0x48] sm:$0xf]
      %v285 = vld [vmem:[%s265 + $0x4c] sm:$0x1]
      %v286 = vmax.bf16 %v242, %v266
      %v287 = vmax.bf16 %v243, %v267
      %v288 = vmax.bf16 %v244, %v268
      %v289 = vmax.bf16 %v245, %v269
      %v290 = vmax.bf16 %v246, %v270
      %v291 = vmax.bf16 %v247, %v271
      %v292 = vmax.bf16 %v248, %v272
      %v293 = vmax.bf16 %v249, %v273
      %v294 = vmax.bf16 %v250, %v274
      %v295 = vmax.bf16 %v251, %v275
      %v296 = vmax.bf16 %v252, %v276
      %v297 = vmax.bf16 %v253, %v277
      %v298 = vmax.bf16 %v254, %v278
      %v299 = vmax.bf16 %v255, %v279
      %v300 = vmax.bf16 %v256, %v280
      %v301 = vmax.bf16 %v257, %v281
      %v302 = vmax.bf16 %v258, %v282
      %v303 = vmax.bf16 %v259, %v283
      %v304 = vmax.bf16 %v260, %v284
      %v305 = vmax.bf16 %v261, %v285
      %vm306 = vsmask.f32 3328
      %vm307 = vsmask.f32 7440
      %vm308 = vmor %vm306, %vm307
      %v310 = vshrl.u32 %v286, 16
      %v312 = vrot.slane %v310, 4
      %v313 = vshll.u32 %v286, 16
      %v315 = vrot.slane %v313, 5
      %v316 = vor.u32 %v312, %v315
      %v317 = vrot.slane %v316, 4
      %v319 = vshll.u32 %v287, 16
      %v321 = vrot.slane %v319, 5
      %v322 = vsel %vm308, %v317, %v321
      %v324 = vshrl.u32 %v288, 16
      %v326 = vrot.slane %v324, 4
      %v327 = vshll.u32 %v288, 16
      %v329 = vrot.slane %v327, 5
      %v330 = vor.u32 %v326, %v329
      %v331 = vrot.slane %v330, 4
      %v333 = vshll.u32 %v289, 16
      %v335 = vrot.slane %v333, 5
      %v336 = vsel %vm308, %v331, %v335
      %v338 = vshrl.u32 %v290, 16
      %v340 = vrot.slane %v338, 4
      %v341 = vshll.u32 %v290, 16
      %v343 = vrot.slane %v341, 5
      %v344 = vor.u32 %v340, %v343
      %v345 = vrot.slane %v344, 4
      %v347 = vshll.u32 %v291, 16
      %v349 = vrot.slane %v347, 5
      %v350 = vsel %vm308, %v345, %v349
      %v352 = vshrl.u32 %v292, 16
      %v354 = vrot.slane %v352, 4
      %v355 = vshll.u32 %v292, 16
      %v357 = vrot.slane %v355, 5
      %v358 = vor.u32 %v354, %v357
      %v359 = vrot.slane %v358, 4
      %v361 = vshll.u32 %v293, 16
      %v363 = vrot.slane %v361, 5
      %v364 = vsel %vm308, %v359, %v363
      %v366 = vshrl.u32 %v294, 16
      %v368 = vrot.slane %v366, 4
      %v369 = vshll.u32 %v294, 16
      %v371 = vrot.slane %v369, 5
      %v372 = vor.u32 %v368, %v371
      %v373 = vrot.slane %v372, 4
      %v375 = vshll.u32 %v295, 16
      %v377 = vrot.slane %v375, 5
      %v378 = vsel %vm308, %v373, %v377
      %v380 = vshrl.u32 %v296, 16
      %v382 = vrot.slane %v380, 4
      %v383 = vshll.u32 %v296, 16
      %v385 = vrot.slane %v383, 5
      %v386 = vor.u32 %v382, %v385
      %v387 = vrot.slane %v386, 4
      %v389 = vshll.u32 %v297, 16
      %v391 = vrot.slane %v389, 5
      %v392 = vsel %vm308, %v387, %v391
      %v394 = vshrl.u32 %v298, 16
      %v396 = vrot.slane %v394, 4
      %v397 = vshll.u32 %v298, 16
      %v399 = vrot.slane %v397, 5
      %v400 = vor.u32 %v396, %v399
      %v401 = vrot.slane %v400, 4
      %v403 = vshll.u32 %v299, 16
      %v405 = vrot.slane %v403, 5
      %v406 = vsel %vm308, %v401, %v405
      %v408 = vshrl.u32 %v300, 16
      %v410 = vrot.slane %v408, 4
      %v411 = vshll.u32 %v300, 16
      %v413 = vrot.slane %v411, 5
      %v414 = vor.u32 %v410, %v413
      %v415 = vrot.slane %v414, 4
      %v417 = vshll.u32 %v301, 16
      %v419 = vrot.slane %v417, 5
      %v420 = vsel %vm308, %v415, %v419
      %v422 = vshrl.u32 %v302, 16
      %v424 = vrot.slane %v422, 4
      %v425 = vshll.u32 %v302, 16
      %v427 = vrot.slane %v425, 5
      %v428 = vor.u32 %v424, %v427
      %v429 = vrot.slane %v428, 4
      %v431 = vshll.u32 %v303, 16
      %v433 = vrot.slane %v431, 5
      %v434 = vsel %vm308, %v429, %v433
      %v436 = vshrl.u32 %v304, 16
      %v438 = vrot.slane %v436, 4
      %v439 = vshll.u32 %v304, 16
      %v441 = vrot.slane %v439, 5
      %v442 = vor.u32 %v438, %v441
      %v443 = vrot.slane %v442, 4
      %v445 = vshll.u32 %v305, 16
      %v447 = vrot.slane %v445, 5
      %v448 = vsel %vm308, %v443, %v447
      %v459 = vmax.bf16 %v286, %v322
      %v460 = vmax.bf16 %v288, %v336
      %v461 = vmax.bf16 %v290, %v350
      %v462 = vmax.bf16 %v292, %v364
      %v463 = vmax.bf16 %v294, %v378
      %v464 = vmax.bf16 %v296, %v392
      %v465 = vmax.bf16 %v298, %v406
      %v466 = vmax.bf16 %v300, %v420
      %v467 = vmax.bf16 %v302, %v434
      %v468 = vmax.bf16 %v304, %v448
      %vm489 = vcmask 1042432
      %vm490 = vcmask 1046532
      %vm491 = vmor %vm489, %vm490
      %v492 = vrot.slane %v286, 5
      %v493 = vrot.slane %v492, 4
      %v494 = vrot.slane %v287, 5
      %v495 = vsel %vm491, %v493, %v494
      %v496 = vrot.slane %v288, 5
      %v497 = vrot.slane %v496, 4
      %v498 = vrot.slane %v289, 5
      %v499 = vsel %vm491, %v497, %v498
      %v500 = vrot.slane %v290, 5
      %v501 = vrot.slane %v500, 4
      %v502 = vrot.slane %v291, 5
      %v503 = vsel %vm491, %v501, %v502
      %v504 = vrot.slane %v292, 5
      %v505 = vrot.slane %v504, 4
      %v506 = vrot.slane %v293, 5
      %v507 = vsel %vm491, %v505, %v506
      %v508 = vrot.slane %v294, 5
      %v509 = vrot.slane %v508, 4
      %v510 = vrot.slane %v295, 5
      %v511 = vsel %vm491, %v509, %v510
      %v512 = vrot.slane %v296, 5
      %v513 = vrot.slane %v512, 4
      %v514 = vrot.slane %v297, 5
      %v515 = vsel %vm491, %v513, %v514
      %v516 = vrot.slane %v298, 5
      %v517 = vrot.slane %v516, 4
      %v518 = vrot.slane %v299, 5
      %v519 = vsel %vm491, %v517, %v518
      %v520 = vrot.slane %v300, 5
      %v521 = vrot.slane %v520, 4
      %v522 = vrot.slane %v301, 5
      %v523 = vsel %vm491, %v521, %v522
      %v524 = vrot.slane %v302, 5
      %v525 = vrot.slane %v524, 4
      %v526 = vrot.slane %v303, 5
      %v527 = vsel %vm491, %v525, %v526
      %v528 = vrot.slane %v304, 5
      %v529 = vrot.slane %v528, 4
      %v530 = vrot.slane %v305, 5
      %v531 = vsel %vm491, %v529, %v530
      %v542 = vmax.bf16 %v459, %v495
      %v543 = vmax.bf16 %v460, %v499
      %v544 = vmax.bf16 %v461, %v503
      %v545 = vmax.bf16 %v462, %v507
      %v546 = vmax.bf16 %v463, %v511
      %v547 = vmax.bf16 %v464, %v515
      %v548 = vmax.bf16 %v465, %v519
      %v549 = vmax.bf16 %v466, %v523
      %v550 = vmax.bf16 %v467, %v527
      %v551 = vmax.bf16 %v468, %v531
      %v552 = vmax.bf16 %v542, %v543
      %v553 = vmax.bf16 %v543, %v544
      %v554 = vmax.bf16 %v544, %v545
      %v555 = vmax.bf16 %v545, %v546
      %v556 = vmax.bf16 %v546, %v547
      %v557 = vmax.bf16 %v547, %v548
      %v558 = vmax.bf16 %v548, %v549
      %v559 = vmax.bf16 %v549, %v550
      %v560 = vmax.bf16 %v552, %v544
      %v561 = vmax.bf16 %v553, %v545
      %v562 = vmax.bf16 %v554, %v546
      %v563 = vmax.bf16 %v555, %v547
      %v564 = vmax.bf16 %v556, %v548
      %v565 = vmax.bf16 %v557, %v549
      %v566 = vmax.bf16 %v558, %v550
      %v567 = vmax.bf16 %v559, %v551
      %v568 = vld [vmem:[%s1] sm:$0x3]
      %v569 = vld [vmem:[%s2] sm:$0x1]
      %v571 = vlaneseq
      %v572 = vshrl.u32 %v571, 7
      %v573 = vsub.s32 0, %v572
      %v574 = vrot.slane %v569, %v573
      %v584 = vunpack.c.l.b16 %v560
      %v585 = vunpack.c.l.b16 %v561
      %v586 = vunpack.c.l.b16 %v562
      %v587 = vunpack.c.l.b16 %v563
      %v588 = vunpack.c.l.b16 %v564
      %v589 = vunpack.c.l.b16 %v565
      %v590 = vunpack.c.l.b16 %v566
      %v591 = vunpack.c.l.b16 %v567
      %v592 = vpack.c.b16 %v585, %v584
      %v593 = vpack.c.b16 %v587, %v586
      %v594 = vpack.c.b16 %v589, %v588
      %v595 = vpack.c.b16 %v591, %v590
      %vm596 = vcmask 31744
      %v598 = vsel %vm596, %v592, 0
      %v601 = vsel %vm596, %v593, 0
      %v604 = vsel %vm596, %v594, 0
      %v607 = vsel %vm596, %v595, 0
      %vm609 = vcmask 1041408
      %v611 = vsel %vm609, %v568, 0
      %613 = vmatprep.subr.bf16.mxu0 0
      %614 = vmatpush1.bf16.msra.mxu0 %v611
      %615 = vmatprep.subr.bf16.mxu0 0
      %616 = vmatpush1.bf16.msra.mxu0 0
      %617 = vmatprep.subr.bf16.mxu0 0
      %618 = vmatpush1.bf16.msra.mxu0 0
      %619 = vmatprep.subr.bf16.mxu0 0
      %620 = vmatpush1.bf16.msra.mxu0 0
      %621 = vmatprep.subr.bf16.mxu0 0
      %622 = vmatpush1.bf16.msra.mxu0 0
      %623 = vmatprep.subr.bf16.mxu0 0
      %624 = vmatpush1.bf16.msra.mxu0 0
      %625 = vmatprep.subr.bf16.mxu0 0
      %626 = vmatpush1.bf16.msra.mxu0 0
      %627 = vmatprep.subr.bf16.mxu0 0
      %628 = vmatpush1.bf16.msra.mxu0 0
      %629 = vmatprep.subr.bf16.mxu0 0
      %630 = vmatpush1.bf16.msra.mxu0 0
      %631 = vmatprep.subr.bf16.mxu0 0
      %632 = vmatpush1.bf16.msra.mxu0 0
      %633 = vmatprep.subr.bf16.mxu0 0
      %634 = vmatpush1.bf16.msra.mxu0 0
      %635 = vmatprep.subr.bf16.mxu0 0
      %636 = vmatpush1.bf16.msra.mxu0 0
      %637 = vmatprep.subr.bf16.mxu0 0
      %638 = vmatpush1.bf16.msra.mxu0 0
      %639 = vmatprep.subr.bf16.mxu0 0
      %640 = vmatpush1.bf16.msra.mxu0 0
      %641 = vmatprep.subr.bf16.mxu0 0
      %642 = vmatpush1.bf16.msra.mxu0 0
      %643 = vmatprep.subr.bf16.mxu0 0
      %644 = vmatpush1.bf16.msra.mxu0 0
      %645 = vmatprep.mubr.bf16.mxu0 0
      %646 = vmatmul.mubr.bf16.gmra.mrb[0].mxu0 %v598
      %v647 = vpop.f32.mrb[0].mxu0
      %v648 = vadd.f32 %v574, %v647
      %v649 = vpop.f32.mrb[0].mxu0
      %v650 = vpop.f32.mrb[0].mxu0
      %v651 = vadd.f32 %v574, %v650
      %v652 = vpop.f32.mrb[0].mxu0
      %653 = vmatprep.mubr.bf16.mxu0 0
      %654 = vmatmul.mubr.bf16.gmra.mrb[0].mxu0 %v601
      %v655 = vpop.f32.mrb[0].mxu0
      %v656 = vadd.f32 %v574, %v655
      %v657 = vpop.f32.mrb[0].mxu0
      %v658 = vpop.f32.mrb[0].mxu0
      %v659 = vadd.f32 %v574, %v658
      %v660 = vpop.f32.mrb[0].mxu0
      %661 = vmatprep.mubr.bf16.mxu0 0
      %662 = vmatmul.mubr.bf16.gmra.mrb[0].mxu0 %v604
      %v663 = vpop.f32.mrb[0].mxu0
      %v664 = vadd.f32 %v574, %v663
      %v665 = vpop.f32.mrb[0].mxu0
      %v666 = vpop.f32.mrb[0].mxu0
      %v667 = vadd.f32 %v574, %v666
      %v668 = vpop.f32.mrb[0].mxu0
      %669 = vmatprep.mubr.bf16.mxu0 0
      %670 = vmatmul.mubr.bf16.gmra.mrb[0].mxu0 %v607
      %v671 = vpop.f32.mrb[0].mxu0
      %v672 = vadd.f32 %v574, %v671
      %v673 = vpop.f32.mrb[0].mxu0
      %v674 = vpop.f32.mrb[0].mxu0
      %v675 = vadd.f32 %v574, %v674
      %v676 = vpop.f32.mrb[0].mxu0
      %677 = vdwg.mxu0
      %v678 = vmax.f32 %v648, 0.0
      %v679 = vmax.f32 %v651, 0.0
      %v680 = vmax.f32 %v656, 0.0
      %v681 = vmax.f32 %v659, 0.0
      %v682 = vmax.f32 %v664, 0.0
      %v683 = vmax.f32 %v667, 0.0
      %v684 = vmax.f32 %v672, 0.0
      %v685 = vmax.f32 %v675, 0.0
      %v686 = vpack.c.bf16 %v679, %v678
      %v687 = vpack.c.bf16 %v681, %v680
      %v688 = vpack.c.bf16 %v683, %v682
      %v689 = vpack.c.bf16 %v685, %v684
      %v694 = vunpack.c.l.b16 %v686
      %v695 = vunpack.c.h.b16 %v686
      %v696 = vunpack.c.l.b16 %v687
      %v697 = vunpack.c.h.b16 %v687
      %v698 = vunpack.c.l.b16 %v688
      %v699 = vunpack.c.h.b16 %v688
      %v700 = vunpack.c.l.b16 %v689
      %v701 = vunpack.c.h.b16 %v689
      %v702 = vpack.c.b16 %v694, %v694
      %v703 = vpack.c.b16 %v695, %v695
      %v704 = vpack.c.b16 %v696, %v696
      %v705 = vpack.c.b16 %v697, %v697
      %v706 = vpack.c.b16 %v698, %v698
      %v707 = vpack.c.b16 %v699, %v699
      %v708 = vpack.c.b16 %v700, %v700
      %v709 = vpack.c.b16 %v701, %v701
      %718 = vst [vmem:[%s190] sm:$0xf] %v702
      %719 = vst [vmem:[%s190 + $0x4] sm:$0xf] %v703
      %720 = vst [vmem:[%s190 + $0x8] sm:$0xf] %v704
      %721 = vst [vmem:[%s190 + $0xc] sm:$0xf] %v705
      %722 = vst [vmem:[%s190 + $0x10] sm:$0xf] %v706
      %723 = vst [vmem:[%s190 + $0x14] sm:$0xf] %v707
      %724 = vst [vmem:[%s190 + $0x18] sm:$0xf] %v708
      %725 = vst [vmem:[%s190 + $0x1c] sm:$0xf] %v709
      %s726 = smul.u32 %s18, 4
      %s727 = sadd.s32 %s726, %s19
      %s728 = smul.u32 8, %s727
      %p729 = scmp.lt.s32.totalorder %s728, 63
      %s730 = scalar_select %p729, %s728, 63
      %s731 = smul.addr %s730, 4
      %s732 = scalar_lea.vmem %s3, %s731
      // Predicated region
      $region33: #{inception_module.7} parent=31 // pred_check
        %p733 = pneg %p116
      $region34: #{inception_module.7} parent=31 // pred_check_branch
        %735 = sbr.rel (%p733) target = $region36
      $region35: #{inception_module.7} parent=31 // pred_region
        %s736 = smul.u32 %s18, 4
        %s737 = sadd.s32 %s736, %s19
        %s738 = smul.u32 8, %s737
      $region36: #{inception_module.7} parent=31 // pred_fallthru
        _
    $region32: #{inception_module.7} parent=5 // pred_fallthru
      _
    %p739 = scmp.le.s32.totalorder 2, %s9
    // Predicated region
    $region37: #{inception_module.7} parent=5 // pred_check
      %p740 = pneg %p739
    $region38: #{inception_module.7} parent=5 // pred_check_branch
      %742 = sbr.rel (%p740) target = $region40
    $region39: #{inception_module.7} parent=5 // pred_region
      %s743 = ssub.s32 %s9, 2
      // Predicated region
      $region41: #{inception_module.7} parent=39 // pred_check
        %p744 = pneg %p122
      $region42: #{inception_module.7} parent=39 // pred_check_branch
        %746 = sbr.rel (%p744) target = $region44
      $region43: #{inception_module.7} parent=39 // pred_region
        %s747 = smul.u32 %s20, 4
        %s748 = sadd.s32 %s747, %s21
        %s749 = smul.u32 8, %s748
        %p750 = scmp.lt.s32.totalorder %s749, 63
        %s751 = scalar_select %p750, %s749, 63
        %s752 = smul.addr %s751, 4
        %s753 = scalar_lea.vmem %s3, %s752
      $region44: #{inception_module.7} parent=39 // pred_fallthru
        _
    $region40: #{inception_module.7} parent=5 // pred_fallthru
      _
  $region6: #{inception_module.7} parent=0 // loop_footer
    %s13 = sadd.s32 1, %s9
  $region7: #{inception_module.7} parent=0 // loop_footer_branch
    %8 = sbr.rel target = $region3
  $region8: #{inception_module.7} parent=0 // loop_exit
    _

// kernel: inception_module.6
$region0: #{inception_module.6}
  #allocation0 [shape = 'u32[]', space=smem, size = 0x4, offset = 0x4, fixed_abs, tag = 'smem constant byte address 0x4 - core index']
  #allocation1 [shape = 'u32[144,128]{1,0:T(1,128)}', space=vmem, size = 0x12000, scoped, tag = 'internal scratch']
  %s0 = inlined_call_operand.vmem [shape: bf16[2,6,10,10,4], index: 0, kind: input, shape index: {}]
  %s1 = inlined_call_operand.vmem [shape: bf16[3,36,128], index: 1, kind: input, shape index: {}]
  %s2 = inlined_call_operand.vmem [shape: f32[1,128], index: 2, kind: input, shape index: {}]
  %s3 = inlined_call_operand.vmem [shape: bf16[512,128], index: 3, kind: output, shape index: {}]
  %s4 = sld [smem:[#allocation0]]
  $region45: #{inception_module.6} parent=0
    _
  %s6 = ssub.s32 1, %s4
  %s7 = scalar_select 0, %s6, %s4
  loop: start=0, step=1, limit=10
  $region2: #{inception_module.6} parent=0 // loop_pre_header
    _
  $region3: #{inception_module.6} parent=0 // loop_header
    %s9 = sphi 0, %s13
    %p10 = scmp.ge.s32.totalorder %s9, 10
    %s16 = sphi 0, %s28
    %s17 = sphi 0, %s24
    %s18 = sphi 0, %s16
    %s19 = sphi 0, %s17
    %s20 = sphi 0, %s18
    %s21 = sphi 0, %s19
    %s31 = sphi 0, %s33
    %s34 = sphi 0, %s31
    %s35 = sphi 0, %s34
    %s51 = sphi 0, %s35
    %s55 = sphi 0, %s55
    %s57 = sphi 0, %s55
    %s58 = sphi 0, %s57
    %s72 = sphi 0, %s58
    %s76 = sphi 0, %s76
    %s78 = sphi 0, %s76
    %s79 = sphi 0, %s78
    %s93 = sphi 0, %s79
    %s103 = sphi 0, %s105
    %s106 = sphi 0, %s103
    %s107 = sphi 0, %s106
    %s123 = sphi 0, %s107
  $region4: #{inception_module.6} parent=0 // loop_header_branch
    %12 = sbr.rel (%p10) target = $region8
  $region5: #{inception_module.6} parent=0 // loop_body
    %s14 = ssub.s32 %s9, 1
    %s15 = ssub.s32 %s9, 2
    %s22 = sadd.s32 1, %s17
    %p23 = scmp.ge.s32.totalorder %s22, 4
    %s24 = scalar_select %p23, 0, %s22
    %s25 = sadd.s32 1, %s16
    %s26 = scalar_select %p23, %s25, %s16
    %p27 = scmp.ge.s32.totalorder %s26, 2
    %s28 = scalar_select %p27, 0, %s26
    %s29 = ssub.s32 %s16, %s28
    %p30 = scmp.eq.s32.totalorder %s29, 0
    %s32 = sadd.s32 %s31, 1
    %s33 = scalar_select %p30, %s31, %s32
    %p36 = pneg %p30
    %p37 = scmp.eq.s32.totalorder %s9, 7
    %p38 = por %p36, %p37
    %p39 = scmp.ne.s32.totalorder %s31, %s34
    %p40 = scmp.eq.s32.totalorder %s9, 0
    %p41 = por %p39, %p40
    %p42 = scmp.ne.s32.totalorder %s31, %s34
    %p43 = scmp.eq.s32.totalorder %s14, 7
    %p44 = por %p42, %p43
    %p45 = scmp.ne.s32.totalorder %s34, %s35
    %p46 = scmp.eq.s32.totalorder %s14, 0
    %p47 = por %p45, %p46
    %p48 = scmp.ne.s32.totalorder %s34, %s35
    %p49 = scmp.eq.s32.totalorder %s15, 7
    %p50 = por %p48, %p49
    %p52 = scmp.ne.s32.totalorder %s35, %s51
    %p53 = scmp.eq.s32.totalorder %s15, 0
    %p54 = por %p52, %p53
    %s56 = sadd.s32 %s55, 1
    %p59 = scmp.eq.s32.totalorder %s9, 7
    %p60 = scmp.ne.s32.totalorder %s55, %s57
    %p61 = scmp.eq.s32.totalorder %s9, 0
    %p62 = por %p60, %p61
    %p63 = scmp.ne.s32.totalorder %s55, %s57
    %p64 = scmp.eq.s32.totalorder %s14, 7
    %p65 = por %p63, %p64
    %p66 = scmp.ne.s32.totalorder %s57, %s58
    %p67 = scmp.eq.s32.totalorder %s14, 0
    %p68 = por %p66, %p67
    %p69 = scmp.ne.s32.totalorder %s57, %s58
    %p70 = scmp.eq.s32.totalorder %s15, 7
    %p71 = por %p69, %p70
    %p73 = scmp.ne.s32.totalorder %s58, %s72
    %p74 = scmp.eq.s32.totalorder %s15, 0
    %p75 = por %p73, %p74
    %s77 = sadd.s32 %s76, 1
    %p80 = scmp.eq.s32.totalorder %s9, 7
    %p81 = scmp.ne.s32.totalorder %s76, %s78
    %p82 = scmp.eq.s32.totalorder %s9, 0
    %p83 = por %p81, %p82
    %p84 = scmp.ne.s32.totalorder %s76, %s78
    %p85 = scmp.eq.s32.totalorder %s14, 7
    %p86 = por %p84, %p85
    %p87 = scmp.ne.s32.totalorder %s78, %s79
    %p88 = scmp.eq.s32.totalorder %s14, 0
    %p89 = por %p87, %p88
    %p90 = scmp.ne.s32.totalorder %s78, %s79
    %p91 = scmp.eq.s32.totalorder %s15, 7
    %p92 = por %p90, %p91
    %p94 = scmp.ne.s32.totalorder %s79, %s93
    %p95 = scmp.eq.s32.totalorder %s15, 0
    %p96 = por %p94, %p95
    %s97 = smul.u32 %s16, 4
    %s98 = sadd.s32 %s97, %s17
    %s99 = smul.u32 %s28, 4
    %s100 = sadd.s32 %s99, %s24
    %s101 = ssub.s32 %s98, %s100
    %p102 = scmp.eq.s32.totalorder %s101, 0
    %s104 = sadd.s32 %s103, 1
    %s105 = scalar_select %p102, %s103, %s104
    %p108 = pneg %p102
    %p109 = scmp.eq.s32.totalorder %s9, 7
    %p110 = por %p108, %p109
    %p111 = scmp.ne.s32.totalorder %s103, %s106
    %p112 = scmp.eq.s32.totalorder %s9, 0
    %p113 = por %p111, %p112
    %p114 = scmp.ne.s32.totalorder %s103, %s106
    %p115 = scmp.eq.s32.totalorder %s14, 7
    %p116 = por %p114, %p115
    %p117 = scmp.ne.s32.totalorder %s106, %s107
    %p118 = scmp.eq.s32.totalorder %s14, 0
    %p119 = por %p117, %p118
    %p120 = scmp.ne.s32.totalorder %s106, %s107
    %p121 = scmp.eq.s32.totalorder %s15, 7
    %p122 = por %p120, %p121
    %p124 = scmp.ne.s32.totalorder %s107, %s123
    %p125 = scmp.eq.s32.totalorder %s15, 0
    %p126 = por %p124, %p125
    %p127 = scmp.le.s32.totalorder 1, %s9
    %p128 = scmp.lt.s32.totalorder %s9, 9
    %p129 = pnand %p127, %p128
    %p130 = pneg %p129
    // Predicated region
    $region9: #{inception_module.6} parent=5 // pred_check
      _
    $region10: #{inception_module.6} parent=5 // pred_check_branch
      %132 = sbr.rel (%p129) target = $region12
    $region11: #{inception_module.6} parent=5 // pred_region
      %s133 = ssub.s32 %s9, 1
      // Predicated region
      $region13: #{inception_module.6} parent=11 // pred_check
        %p134 = pneg %p68
      $region14: #{inception_module.6} parent=11 // pred_check_branch
        %136 = sbr.rel (%p134) target = $region16
      $region15: #{inception_module.6} parent=11 // pred_region
        _
      $region16: #{inception_module.6} parent=11 // pred_fallthru
        _
      // Predicated region
      $region17: #{inception_module.6} parent=11 // pred_check
        %p137 = pneg %p89
      $region18: #{inception_module.6} parent=11 // pred_check_branch
        %139 = sbr.rel (%p137) target = $region20
      $region19: #{inception_module.6} parent=11 // pred_region
        _
      $region20: #{inception_module.6} parent=11 // pred_fallthru
        _
    $region12: #{inception_module.6} parent=5 // pred_fallthru
      _
    %p140 = scmp.lt.s32.totalorder %s9, 8
    // Predicated region
    $region21: #{inception_module.6} parent=5 // pred_check
      %p141 = pneg %p140
    $region22: #{inception_module.6} parent=5 // pred_check_branch
      %143 = sbr.rel (%p141) target = $region24
    $region23: #{inception_module.6} parent=5 // pred_region
      // Predicated region
      $region25: #{inception_module.6} parent=23 // pred_check
        %p144 = pneg %p41
      $region26: #{inception_module.6} parent=23 // pred_check_branch
        %146 = sbr.rel (%p144) target = $region28
      $region27: #{inception_module.6} parent=23 // pred_region
        %p147 = scmp.lt.s32.totalorder %s16, 1
        %s148 = scalar_select %p147, %s16, 1
        %s149 = smul.addr %s148, 120
        %s150 = smul.addr %s149, 4
        %s151 = scalar_lea.vmem %s0, %s150
      $region28: #{inception_module.6} parent=23 // pred_fallthru
        _
    $region24: #{inception_module.6} parent=5 // pred_fallthru
      _
    %p152 = scmp.le.s32.totalorder 1, %s9
    %p153 = scmp.lt.s32.totalorder %s9, 9
    %p154 = pnand %p152, %p153
    %p155 = pneg %p154
    // Predicated region
    $region29: #{inception_module.6} parent=5 // pred_check
      _
    $region30: #{inception_module.6} parent=5 // pred_check_branch
      %157 = sbr.rel (%p154) target = $region32
    $region31: #{inception_module.6} parent=5 // pred_region
      %s158 = ssub.s32 %s9, 1
      %p159 = scmp.lt.s32.totalorder %s18, 1
      %s160 = scalar_select %p159, %s18, 1
      %s161 = smul.addr %s160, 120
      %s162 = smul.addr %s161, 4
      %s163 = scalar_lea.vmem %s0, %s162
      %p164 = pneg %p47
      %p165 = pneg %p44
      %p166 = pneg %p68
      %p167 = pneg %p65
      %p168 = pneg %p89
      %p169 = pneg %p86
      %p170 = pneg %p119
      %p171 = pneg %p116
      %s172 = smul.u32 %s18, 4
      %s173 = sadd.s32 %s172, %s19
      %s174 = smul.u32 8, %s173
      %p175 = scmp.lt.s32.totalorder %s174, 63
      %s176 = scalar_select %p175, %s174, 63
      %s177 = smul.addr %s176, 4
      %s178 = scalar_lea.vmem %s3, %s177
      %p179 = scmp.lt.s32.totalorder %s18, 1
      %s180 = scalar_select %p179, %s18, 1
      %s181 = smul.addr %s180, 120
      %s182 = smul.addr %s181, 4
      %s183 = scalar_lea.vmem %s0, %s182
      %s184 = smul.u32 %s18, 4
      %s185 = sadd.s32 %s184, %s19
      %s186 = smul.u32 8, %s185
      %p187 = scmp.lt.s32.totalorder %s186, 63
      %s188 = scalar_select %p187, %s186, 63
      %s189 = smul.addr %s188, 4
      %s190 = scalar_lea.vmem %s3, %s189
      %s191 = smul.u32 %s18, 4
      %s192 = sadd.s32 %s191, %s19
      %s193 = smul.u32 8, %s192
      %s195 = smul.u32 %s19, 20
      %s196 = smul.addr %s195, 4
      %s197 = scalar_lea.vmem %s183, %s196
      %v198 = vld [vmem:[%s197] sm:$0xf]
      %v199 = vld [vmem:[%s197 + $0x4] sm:$0x1]
      %v200 = vld [vmem:[%s197 + $0x8] sm:$0xf]
      %v201 = vld [vmem:[%s197 + $0xc] sm:$0x1]
      %v202 = vld [vmem:[%s197 + $0x10] sm:$0xf]
      %v203 = vld [vmem:[%s197 + $0x14] sm:$0x1]
      %v204 = vld [vmem:[%s197 + $0x18] sm:$0xf]
      %v205 = vld [vmem:[%s197 + $0x1c] sm:$0x1]
      %v206 = vld [vmem:[%s197 + $0x20] sm:$0xf]
      %v207 = vld [vmem:[%s197 + $0x24] sm:$0x1]
      %v208 = vld [vmem:[%s197 + $0x28] sm:$0xf]
      %v209 = vld [vmem:[%s197 + $0x2c] sm:$0x1]
      %v210 = vld [vmem:[%s197 + $0x30] sm:$0xf]
      %v211 = vld [vmem:[%s197 + $0x34] sm:$0x1]
      %v212 = vld [vmem:[%s197 + $0x38] sm:$0xf]
      %v213 = vld [vmem:[%s197 + $0x3c] sm:$0x1]
      %v214 = vld [vmem:[%s197 + $0x40] sm:$0xf]
      %v215 = vld [vmem:[%s197 + $0x44] sm:$0x1]
      %v216 = vld [vmem:[%s197 + $0x48] sm:$0xf]
      %v217 = vld [vmem:[%s197 + $0x4c] sm:$0x1]
      %v234 = vunpack.c.l.b16 %v198
      %v235 = vunpack.c.l.b16 %v199
      %v236 = vunpack.c.l.b16 %v200
      %v237 = vunpack.c.l.b16 %v201
      %v238 = vunpack.c.l.b16 %v202
      %v239 = vunpack.c.l.b16 %v203
      %v240 = vunpack.c.l.b16 %v204
      %v241 = vunpack.c.l.b16 %v205
      %v242 = vunpack.c.l.b16 %v206
      %v243 = vunpack.c.l.b16 %v207
      %v244 = vunpack.c.l.b16 %v208
      %v245 = vunpack.c.l.b16 %v209
      %v246 = vunpack.c.l.b16 %v210
      %v247 = vunpack.c.l.b16 %v211
      %v248 = vunpack.c.l.b16 %v212
      %v249 = vunpack.c.l.b16 %v213
      %v250 = vpack.c.b16 %v235, %v234
      %v251 = vpack.c.b16 %v237, %v236
      %v252 = vpack.c.b16 %v239, %v238
      %v253 = vpack.c.b16 %v241, %v240
      %v254 = vpack.c.b16 %v243, %v242
      %v255 = vpack.c.b16 %v245, %v244
      %v256 = vpack.c.b16 %v247, %v246
      %v257 = vpack.c.b16 %v249, %v248
      %v259 = vshrl.u32 %v250, 16
      %v261 = vshll.u32 %v250, 16
      %v263 = vrot.slane %v261, 1
      %v264 = vor.u32 %v259, %v263
      %v266 = vshrl.u32 %v251, 16
      %v268 = vshll.u32 %v251, 16
      %v270 = vrot.slane %v268, 1
      %v271 = vor.u32 %v266, %v270
      %v273 = vshrl.u32 %v252, 16
      %v275 = vshll.u32 %v252, 16
      %v277 = vrot.slane %v275, 1
      %v278 = vor.u32 %v273, %v277
      %v280 = vshrl.u32 %v253, 16
      %v282 = vshll.u32 %v253, 16
      %v284 = vrot.slane %v282, 1
      %v285 = vor.u32 %v280, %v284
      %v287 = vshrl.u32 %v254, 16
      %v289 = vshll.u32 %v254, 16
      %v291 = vrot.slane %v289, 1
      %v292 = vor.u32 %v287, %v291
      %v294 = vshrl.u32 %v255, 16
      %v296 = vshll.u32 %v255, 16
      %v298 = vrot.slane %v296, 1
      %v299 = vor.u32 %v294, %v298
      %v301 = vshrl.u32 %v256, 16
      %v303 = vshll.u32 %v256, 16
      %v305 = vrot.slane %v303, 1
      %v306 = vor.u32 %v301, %v305
      %v308 = vshrl.u32 %v257, 16
      %v310 = vshll.u32 %v257, 16
      %v312 = vrot.slane %v310, 1
      %v313 = vor.u32 %v308, %v312
      %314 = vrot.lane.b32.xlu0 %v264, 4
      %v315 = vpop.permute.xlu0 %314
      %316 = vrot.lane.b32.xlu0 %v271, 4
      %v317 = vpop.permute.xlu0 %316
      %318 = vrot.lane.b32.xlu0 %v278, 4
      %v319 = vpop.permute.xlu0 %318
      %320 = vrot.lane.b32.xlu0 %v285, 4
      %v321 = vpop.permute.xlu0 %320
      %322 = vrot.lane.b32.xlu0 %v292, 4
      %v323 = vpop.permute.xlu0 %322
      %324 = vrot.lane.b32.xlu0 %v299, 4
      %v325 = vpop.permute.xlu0 %324
      %326 = vrot.lane.b32.xlu0 %v306, 4
      %v327 = vpop.permute.xlu0 %326
      %328 = vrot.lane.b32.xlu0 %v313, 4
      %v329 = vpop.permute.xlu0 %328
      %v330 = vrot.slane %v250, 1
      %v331 = vrot.slane %v251, 1
      %v332 = vrot.slane %v252, 1
      %v333 = vrot.slane %v253, 1
      %v334 = vrot.slane %v254, 1
      %v335 = vrot.slane %v255, 1
      %v336 = vrot.slane %v256, 1
      %v337 = vrot.slane %v257, 1
      %338 = vrot.lane.b32.xlu0 %v330, 8
      %v339 = vpop.permute.xlu0 %338
      %340 = vrot.lane.b32.xlu0 %v331, 8
      %v341 = vpop.permute.xlu0 %340
      %342 = vrot.lane.b32.xlu0 %v332, 8
      %v343 = vpop.permute.xlu0 %342
      %344 = vrot.lane.b32.xlu0 %v333, 8
      %v345 = vpop.permute.xlu0 %344
      %346 = vrot.lane.b32.xlu0 %v334, 8
      %v347 = vpop.permute.xlu0 %346
      %348 = vrot.lane.b32.xlu0 %v335, 8
      %v349 = vpop.permute.xlu0 %348
      %350 = vrot.lane.b32.xlu0 %v336, 8
      %v351 = vpop.permute.xlu0 %350
      %352 = vrot.lane.b32.xlu0 %v337, 8
      %v353 = vpop.permute.xlu0 %352
      %v355 = vunpack.c.l.b16 %v214
      %v356 = vpack.c.b16 %v236, %v236
      %v357 = vpack.c.b16 %v238, %v238
      %v358 = vpack.c.b16 %v240, %v240
      %v359 = vpack.c.b16 %v242, %v242
      %v360 = vpack.c.b16 %v244, %v244
      %v361 = vpack.c.b16 %v246, %v246
      %v362 = vpack.c.b16 %v248, %v248
      %v363 = vpack.c.b16 %v355, %v355
      %364 = vrot.lane.b32.xlu0 %v356, 12
      %v365 = vpop.permute.xlu0 %364
      %366 = vrot.lane.b32.xlu0 %v357, 12
      %v367 = vpop.permute.xlu0 %366
      %368 = vrot.lane.b32.xlu0 %v358, 12
      %v369 = vpop.permute.xlu0 %368
      %370 = vrot.lane.b32.xlu0 %v359, 12
      %v371 = vpop.permute.xlu0 %370
      %372 = vrot.lane.b32.xlu0 %v360, 12
      %v373 = vpop.permute.xlu0 %372
      %374 = vrot.lane.b32.xlu0 %v361, 12
      %v375 = vpop.permute.xlu0 %374
      %376 = vrot.lane.b32.xlu0 %v362, 12
      %v377 = vpop.permute.xlu0 %376
      %378 = vrot.lane.b32.xlu0 %v363, 12
      %v379 = vpop.permute.xlu0 %378
      %v381 = vunpack.c.l.b16 %v215
      %v382 = vpack.c.b16 %v381, %v355
      %v384 = vshrl.u32 %v382, 16
      %v386 = vshll.u32 %v382, 16
      %v388 = vrot.slane %v386, 1
      %v389 = vor.u32 %v384, %v388
      %390 = vrot.lane.b32.xlu0 %v271, 16
      %v391 = vpop.permute.xlu0 %390
      %392 = vrot.lane.b32.xlu0 %v278, 16
      %v393 = vpop.permute.xlu0 %392
      %394 = vrot.lane.b32.xlu0 %v285, 16
      %v395 = vpop.permute.xlu0 %394
      %396 = vrot.lane.b32.xlu0 %v292, 16
      %v397 = vpop.permute.xlu0 %396
      %398 = vrot.lane.b32.xlu0 %v299, 16
      %v399 = vpop.permute.xlu0 %398
      %400 = vrot.lane.b32.xlu0 %v306, 16
      %v401 = vpop.permute.xlu0 %400
      %402 = vrot.lane.b32.xlu0 %v313, 16
      %v403 = vpop.permute.xlu0 %402
      %404 = vrot.lane.b32.xlu0 %v389, 16
      %v405 = vpop.permute.xlu0 %404
      %v406 = vrot.slane %v382, 1
      %407 = vrot.lane.b32.xlu0 %v331, 20
      %v408 = vpop.permute.xlu0 %407
      %409 = vrot.lane.b32.xlu0 %v332, 20
      %v410 = vpop.permute.xlu0 %409
      %411 = vrot.lane.b32.xlu0 %v333, 20
      %v412 = vpop.permute.xlu0 %411
      %413 = vrot.lane.b32.xlu0 %v334, 20
      %v414 = vpop.permute.xlu0 %413
      %415 = vrot.lane.b32.xlu0 %v335, 20
      %v416 = vpop.permute.xlu0 %415
      %417 = vrot.lane.b32.xlu0 %v336, 20
      %v418 = vpop.permute.xlu0 %417
      %419 = vrot.lane.b32.xlu0 %v337, 20
      %v420 = vpop.permute.xlu0 %419
      %421 = vrot.lane.b32.xlu0 %v406, 20
      %v422 = vpop.permute.xlu0 %421
      %v424 = vunpack.c.l.b16 %v216
      %v425 = vpack.c.b16 %v424, %v424
      %426 = vrot.lane.b32.xlu0 %v357, 24
      %v427 = vpop.permute.xlu0 %426
      %428 = vrot.lane.b32.xlu0 %v358, 24
      %v429 = vpop.permute.xlu0 %428
      %430 = vrot.lane.b32.xlu0 %v359, 24
      %v431 = vpop.permute.xlu0 %430
      %432 = vrot.lane.b32.xlu0 %v360, 24
      %v433 = vpop.permute.xlu0 %432
      %434 = vrot.lane.b32.xlu0 %v361, 24
      %v435 = vpop.permute.xlu0 %434
      %436 = vrot.lane.b32.xlu0 %v362, 24
      %v437 = vpop.permute.xlu0 %436
      %438 = vrot.lane.b32.xlu0 %v363, 24
      %v439 = vpop.permute.xlu0 %438
      %440 = vrot.lane.b32.xlu0 %v425, 24
      %v441 = vpop.permute.xlu0 %440
      %v443 = vunpack.c.l.b16 %v217
      %v444 = vpack.c.b16 %v443, %v424
      %v446 = vshrl.u32 %v444, 16
      %v448 = vshll.u32 %v444, 16
      %v450 = vrot.slane %v448, 1
      %v451 = vor.u32 %v446, %v450
      %452 = vrot.lane.b32.xlu0 %v278, 28
      %v453 = vpop.permute.xlu0 %452
      %454 = vrot.lane.b32.xlu0 %v285, 28
      %v455 = vpop.permute.xlu0 %454
      %456 = vrot.lane.b32.xlu0 %v292, 28
      %v457 = vpop.permute.xlu0 %456
      %458 = vrot.lane.b32.xlu0 %v299, 28
      %v459 = vpop.permute.xlu0 %458
      %460 = vrot.lane.b32.xlu0 %v306, 28
      %v461 = vpop.permute.xlu0 %460
      %462 = vrot.lane.b32.xlu0 %v313, 28
      %v463 = vpop.permute.xlu0 %462
      %464 = vrot.lane.b32.xlu0 %v389, 28
      %v465 = vpop.permute.xlu0 %464
      %466 = vrot.lane.b32.xlu0 %v451, 28
      %v467 = vpop.permute.xlu0 %466
      %v468 = vrot.slane %v444, 1
      %469 = vrot.lane.b32.xlu0 %v332, 32
      %v470 = vpop.permute.xlu0 %469
      %471 = vrot.lane.b32.xlu0 %v333, 32
      %v472 = vpop.permute.xlu0 %471
      %473 = vrot.lane.b32.xlu0 %v334, 32
      %v474 = vpop.permute.xlu0 %473
      %475 = vrot.lane.b32.xlu0 %v335, 32
      %v476 = vpop.permute.xlu0 %475
      %477 = vrot.lane.b32.xlu0 %v336, 32
      %v478 = vpop.permute.xlu0 %477
      %479 = vrot.lane.b32.xlu0 %v337, 32
      %v480 = vpop.permute.xlu0 %479
      %481 = vrot.lane.b32.xlu0 %v406, 32
      %v482 = vpop.permute.xlu0 %481
      %483 = vrot.lane.b32.xlu0 %v468, 32
      %v484 = vpop.permute.xlu0 %483
      %vm485 = vcmask 31744
      %v488 = vsel %vm485, %v198, %v315
      %v491 = vsel %vm485, %v200, %v317
      %v494 = vsel %vm485, %v202, %v319
      %v497 = vsel %vm485, %v204, %v321
      %v500 = vsel %vm485, %v206, %v323
      %v503 = vsel %vm485, %v208, %v325
      %v506 = vsel %vm485, %v210, %v327
      %v509 = vsel %vm485, %v212, %v329
      %vm510 = vcmask 64512
      %v512 = vsel %vm510, %v488, %v339
      %v514 = vsel %vm510, %v491, %v341
      %v516 = vsel %vm510, %v494, %v343
      %v518 = vsel %vm510, %v497, %v345
      %v520 = vsel %vm510, %v500, %v347
      %v522 = vsel %vm510, %v503, %v349
      %v524 = vsel %vm510, %v506, %v351
      %v526 = vsel %vm510, %v509, %v353
      %vm527 = vcmask 97280
      %v529 = vsel %vm527, %v512, %v365
      %v531 = vsel %vm527, %v514, %v367
      %v533 = vsel %vm527, %v516, %v369
      %v535 = vsel %vm527, %v518, %v371
      %v537 = vsel %vm527, %v520, %v373
      %v539 = vsel %vm527, %v522, %v375
      %v541 = vsel %vm527, %v524, %v377
      %v543 = vsel %vm527, %v526, %v379
      %vm544 = vcmask 130048
      %v546 = vsel %vm544, %v529, %v391
      %v548 = vsel %vm544, %v531, %v393
      %v550 = vsel %vm544, %v533, %v395
      %v552 = vsel %vm544, %v535, %v397
      %v554 = vsel %vm544, %v537, %v399
      %v556 = vsel %vm544, %v539, %v401
      %v558 = vsel %vm544, %v541, %v403
      %v560 = vsel %vm544, %v543, %v405
      %vm561 = vcmask 162816
      %v563 = vsel %vm561, %v546, %v408
      %v565 = vsel %vm561, %v548, %v410
      %v567 = vsel %vm561, %v550, %v412
      %v569 = vsel %vm561, %v552, %v414
      %v571 = vsel %vm561, %v554, %v416
      %v573 = vsel %vm561, %v556, %v418
      %v575 = vsel %vm561, %v558, %v420
      %v577 = vsel %vm561, %v560, %v422
      %vm578 = vcmask 195584
      %v580 = vsel %vm578, %v563, %v427
      %v582 = vsel %vm578, %v565, %v429
      %v584 = vsel %vm578, %v567, %v431
      %v586 = vsel %vm578, %v569, %v433
      %v588 = vsel %vm578, %v571, %v435
      %v590 = vsel %vm578, %v573, %v437
      %v592 = vsel %vm578, %v575, %v439
      %v594 = vsel %vm578, %v577, %v441
      %vm595 = vcmask 228352
      %v597 = vsel %vm595, %v580, %v453
      %v599 = vsel %vm595, %v582, %v455
      %v601 = vsel %vm595, %v584, %v457
      %v603 = vsel %vm595, %v586, %v459
      %v605 = vsel %vm595, %v588, %v461
      %v607 = vsel %vm595, %v590, %v463
      %v609 = vsel %vm595, %v592, %v465
      %v611 = vsel %vm595, %v594, %v467
      %vm612 = vcmask 261120
      %v614 = vsel %vm612, %v597, %v470
      %v616 = vsel %vm612, %v599, %v472
      %v618 = vsel %vm612, %v601, %v474
      %v620 = vsel %vm612, %v603, %v476
      %v622 = vsel %vm612, %v605, %v478
      %v624 = vsel %vm612, %v607, %v480
      %v626 = vsel %vm612, %v609, %v482
      %v628 = vsel %vm612, %v611, %v484
      %v629 = vld [vmem:[%s1] sm:$0xf]
      %v630 = vld [vmem:[%s1 + $0x4] sm:$0xf]
      %v631 = vld [vmem:[%s1 + $0x8] sm:$0xf]
      %v632 = vld [vmem:[%s1 + $0xc] sm:$0xf]
      %v633 = vld [vmem:[%s1 + $0x10] sm:$0x3]
      %s634 = sadd.s32 %s19, 1
      %s635 = smul.u32 %s634, 20
      %s636 = smul.addr %s635, 4
      %s637 = scalar_lea.vmem %s183, %s636
      %v638 = vld [vmem:[%s637] sm:$0xf]
      %v639 = vld [vmem:[%s637 + $0x4] sm:$0x1]
      %v640 = vld [vmem:[%s637 + $0x8] sm:$0xf]
      %v641 = vld [vmem:[%s637 + $0xc] sm:$0x1]
      %v642 = vld [vmem:[%s637 + $0x10] sm:$0xf]
      %v643 = vld [vmem:[%s637 + $0x14] sm:$0x1]
      %v644 = vld [vmem:[%s637 + $0x18] sm:$0xf]
      %v645 = vld [vmem:[%s637 + $0x1c] sm:$0x1]
      %v646 = vld [vmem:[%s637 + $0x20] sm:$0xf]
      %v647 = vld [vmem:[%s637 + $0x24] sm:$0x1]
      %v648 = vld [vmem:[%s637 + $0x28] sm:$0xf]
      %v649 = vld [vmem:[%s637 + $0x2c] sm:$0x1]
      %v650 = vld [vmem:[%s637 + $0x30] sm:$0xf]
      %v651 = vld [vmem:[%s637 + $0x34] sm:$0x1]
      %v652 = vld [vmem:[%s637 + $0x38] sm:$0xf]
      %v653 = vld [vmem:[%s637 + $0x3c] sm:$0x1]
      %v654 = vld [vmem:[%s637 + $0x40] sm:$0xf]
      %v655 = vld [vmem:[%s637 + $0x44] sm:$0x1]
      %v656 = vld [vmem:[%s637 + $0x48] sm:$0xf]
      %v657 = vld [vmem:[%s637 + $0x4c] sm:$0x1]
      %v674 = vunpack.c.l.b16 %v638
      %v675 = vunpack.c.l.b16 %v639
      %v676 = vunpack.c.l.b16 %v640
      %v677 = vunpack.c.l.b16 %v641
      %v678 = vunpack.c.l.b16 %v642
      %v679 = vunpack.c.l.b16 %v643
      %v680 = vunpack.c.l.b16 %v644
      %v681 = vunpack.c.l.b16 %v645
      %v682 = vunpack.c.l.b16 %v646
      %v683 = vunpack.c.l.b16 %v647
      %v684 = vunpack.c.l.b16 %v648
      %v685 = vunpack.c.l.b16 %v649
      %v686 = vunpack.c.l.b16 %v650
      %v687 = vunpack.c.l.b16 %v651
      %v688 = vunpack.c.l.b16 %v652
      %v689 = vunpack.c.l.b16 %v653
      %v690 = vpack.c.b16 %v675, %v674
      %v691 = vpack.c.b16 %v677, %v676
      %v692 = vpack.c.b16 %v679, %v678
      %v693 = vpack.c.b16 %v681, %v680
      %v694 = vpack.c.b16 %v683, %v682
      %v695 = vpack.c.b16 %v685, %v684
      %v696 = vpack.c.b16 %v687, %v686
      %v697 = vpack.c.b16 %v689, %v688
      %v699 = vshrl.u32 %v690, 16
      %v701 = vshll.u32 %v690, 16
      %v703 = vrot.slane %v701, 1
      %v704 = vor.u32 %v699, %v703
      %v706 = vshrl.u32 %v691, 16
      %v708 = vshll.u32 %v691, 16
      %v710 = vrot.slane %v708, 1
      %v711 = vor.u32 %v706, %v710
      %v713 = vshrl.u32 %v692, 16
      %v715 = vshll.u32 %v692, 16
      %v717 = vrot.slane %v715, 1
      %v718 = vor.u32 %v713, %v717
      %v720 = vshrl.u32 %v693, 16
      %v722 = vshll.u32 %v693, 16
      %v724 = vrot.slane %v722, 1
      %v725 = vor.u32 %v720, %v724
      %v727 = vshrl.u32 %v694, 16
      %v729 = vshll.u32 %v694, 16
      %v731 = vrot.slane %v729, 1
      %v732 = vor.u32 %v727, %v731
      %v734 = vshrl.u32 %v695, 16
      %v736 = vshll.u32 %v695, 16
      %v738 = vrot.slane %v736, 1
      %v739 = vor.u32 %v734, %v738
      %v741 = vshrl.u32 %v696, 16
      %v743 = vshll.u32 %v696, 16
      %v745 = vrot.slane %v743, 1
      %v746 = vor.u32 %v741, %v745
      %v748 = vshrl.u32 %v697, 16
      %v750 = vshll.u32 %v697, 16
      %v752 = vrot.slane %v750, 1
      %v753 = vor.u32 %v748, %v752
      %754 = vrot.lane.b32.xlu0 %v704, 4
      %v755 = vpop.permute.xlu0 %754
      %756 = vrot.lane.b32.xlu0 %v711, 4
      %v757 = vpop.permute.xlu0 %756
      %758 = vrot.lane.b32.xlu0 %v718, 4
      %v759 = vpop.permute.xlu0 %758
      %760 = vrot.lane.b32.xlu0 %v725, 4
      %v761 = vpop.permute.xlu0 %760
      %762 = vrot.lane.b32.xlu0 %v732, 4
      %v763 = vpop.permute.xlu0 %762
      %764 = vrot.lane.b32.xlu0 %v739, 4
      %v765 = vpop.permute.xlu0 %764
      %766 = vrot.lane.b32.xlu0 %v746, 4
      %v767 = vpop.permute.xlu0 %766
      %768 = vrot.lane.b32.xlu0 %v753, 4
      %v769 = vpop.permute.xlu0 %768
      %v770 = vrot.slane %v690, 1
      %v771 = vrot.slane %v691, 1
      %v772 = vrot.slane %v692, 1
      %v773 = vrot.slane %v693, 1
      %v774 = vrot.slane %v694, 1
      %v775 = vrot.slane %v695, 1
      %v776 = vrot.slane %v696, 1
      %v777 = vrot.slane %v697, 1
      %778 = vrot.lane.b32.xlu0 %v770, 8
      %v779 = vpop.permute.xlu0 %778
      %780 = vrot.lane.b32.xlu0 %v771, 8
      %v781 = vpop.permute.xlu0 %780
      %782 = vrot.lane.b32.xlu0 %v772, 8
      %v783 = vpop.permute.xlu0 %782
      %784 = vrot.lane.b32.xlu0 %v773, 8
      %v785 = vpop.permute.xlu0 %784
      %786 = vrot.lane.b32.xlu0 %v774, 8
      %v787 = vpop.permute.xlu0 %786
      %788 = vrot.lane.b32.xlu0 %v775, 8
      %v789 = vpop.permute.xlu0 %788
      %790 = vrot.lane.b32.xlu0 %v776, 8
      %v791 = vpop.permute.xlu0 %790
      %792 = vrot.lane.b32.xlu0 %v777, 8
      %v793 = vpop.permute.xlu0 %792
      %v795 = vunpack.c.l.b16 %v654
      %v796 = vpack.c.b16 %v676, %v676
      %v797 = vpack.c.b16 %v678, %v678
      %v798 = vpack.c.b16 %v680, %v680
      %v799 = vpack.c.b16 %v682, %v682
      %v800 = vpack.c.b16 %v684, %v684
      %v801 = vpack.c.b16 %v686, %v686
      %v802 = vpack.c.b16 %v688, %v688
      %v803 = vpack.c.b16 %v795, %v795
      %804 = vrot.lane.b32.xlu0 %v796, 12
      %v805 = vpop.permute.xlu0 %804
      %806 = vrot.lane.b32.xlu0 %v797, 12
      %v807 = vpop.permute.xlu0 %806
      %808 = vrot.lane.b32.xlu0 %v798, 12
      %v809 = vpop.permute.xlu0 %808
      %810 = vrot.lane.b32.xlu0 %v799, 12
      %v811 = vpop.permute.xlu0 %810
      %812 = vrot.lane.b32.xlu0 %v800, 12
      %v813 = vpop.permute.xlu0 %812
      %814 = vrot.lane.b32.xlu0 %v801, 12
      %v815 = vpop.permute.xlu0 %814
      %816 = vrot.lane.b32.xlu0 %v802, 12
      %v817 = vpop.permute.xlu0 %816
      %818 = vrot.lane.b32.xlu0 %v803, 12
      %v819 = vpop.permute.xlu0 %818
      %v821 = vunpack.c.l.b16 %v655
      %v822 = vpack.c.b16 %v821, %v795
      %v824 = vshrl.u32 %v822, 16
      %v826 = vshll.u32 %v822, 16
      %v828 = vrot.slane %v826, 1
      %v829 = vor.u32 %v824, %v828
      %830 = vrot.lane.b32.xlu0 %v711, 16
      %v831 = vpop.permute.xlu0 %830
      %832 = vrot.lane.b32.xlu0 %v718, 16
      %v833 = vpop.permute.xlu0 %832
      %834 = vrot.lane.b32.xlu0 %v725, 16
      %v835 = vpop.permute.xlu0 %834
      %836 = vrot.lane.b32.xlu0 %v732, 16
      %v837 = vpop.permute.xlu0 %836
      %838 = vrot.lane.b32.xlu0 %v739, 16
      %v839 = vpop.permute.xlu0 %838
      %840 = vrot.lane.b32.xlu0 %v746, 16
      %v841 = vpop.permute.xlu0 %840
      %842 = vrot.lane.b32.xlu0 %v753, 16
      %v843 = vpop.permute.xlu0 %842
      %844 = vrot.lane.b32.xlu0 %v829, 16
      %v845 = vpop.permute.xlu0 %844
      %v846 = vrot.slane %v822, 1
      %847 = vrot.lane.b32.xlu0 %v771, 20
      %v848 = vpop.permute.xlu0 %847
      %849 = vrot.lane.b32.xlu0 %v772, 20
      %v850 = vpop.permute.xlu0 %849
      %851 = vrot.lane.b32.xlu0 %v773, 20
      %v852 = vpop.permute.xlu0 %851
      %853 = vrot.lane.b32.xlu0 %v774, 20
      %v854 = vpop.permute.xlu0 %853
      %855 = vrot.lane.b32.xlu0 %v775, 20
      %v856 = vpop.permute.xlu0 %855
      %857 = vrot.lane.b32.xlu0 %v776, 20
      %v858 = vpop.permute.xlu0 %857
      %859 = vrot.lane.b32.xlu0 %v777, 20
      %v860 = vpop.permute.xlu0 %859
      %861 = vrot.lane.b32.xlu0 %v846, 20
      %v862 = vpop.permute.xlu0 %861
      %v864 = vunpack.c.l.b16 %v656
      %v865 = vpack.c.b16 %v864, %v864
      %866 = vrot.lane.b32.xlu0 %v797, 24
      %v867 = vpop.permute.xlu0 %866
      %868 = vrot.lane.b32.xlu0 %v798, 24
      %v869 = vpop.permute.xlu0 %868
      %870 = vrot.lane.b32.xlu0 %v799, 24
      %v871 = vpop.permute.xlu0 %870
      %872 = vrot.lane.b32.xlu0 %v800, 24
      %v873 = vpop.permute.xlu0 %872
      %874 = vrot.lane.b32.xlu0 %v801, 24
      %v875 = vpop.permute.xlu0 %874
      %876 = vrot.lane.b32.xlu0 %v802, 24
      %v877 = vpop.permute.xlu0 %876
      %878 = vrot.lane.b32.xlu0 %v803, 24
      %v879 = vpop.permute.xlu0 %878
      %880 = vrot.lane.b32.xlu0 %v865, 24
      %v881 = vpop.permute.xlu0 %880
      %v883 = vunpack.c.l.b16 %v657
      %v884 = vpack.c.b16 %v883, %v864
      %v886 = vshrl.u32 %v884, 16
      %v888 = vshll.u32 %v884, 16
      %v890 = vrot.slane %v888, 1
      %v891 = vor.u32 %v886, %v890
      %892 = vrot.lane.b32.xlu0 %v718, 28
      %v893 = vpop.permute.xlu0 %892
      %894 = vrot.lane.b32.xlu0 %v725, 28
      %v895 = vpop.permute.xlu0 %894
      %896 = vrot.lane.b32.xlu0 %v732, 28
      %v897 = vpop.permute.xlu0 %896
      %898 = vrot.lane.b32.xlu0 %v739, 28
      %v899 = vpop.permute.xlu0 %898
      %900 = vrot.lane.b32.xlu0 %v746, 28
      %v901 = vpop.permute.xlu0 %900
      %902 = vrot.lane.b32.xlu0 %v753, 28
      %v903 = vpop.permute.xlu0 %902
      %904 = vrot.lane.b32.xlu0 %v829, 28
      %v905 = vpop.permute.xlu0 %904
      %906 = vrot.lane.b32.xlu0 %v891, 28
      %v907 = vpop.permute.xlu0 %906
      %v908 = vrot.slane %v884, 1
      %909 = vrot.lane.b32.xlu0 %v772, 32
      %v910 = vpop.permute.xlu0 %909
      %911 = vrot.lane.b32.xlu0 %v773, 32
      %v912 = vpop.permute.xlu0 %911
      %913 = vrot.lane.b32.xlu0 %v774, 32
      %v914 = vpop.permute.xlu0 %913
      %915 = vrot.lane.b32.xlu0 %v775, 32
      %v916 = vpop.permute.xlu0 %915
      %917 = vrot.lane.b32.xlu0 %v776, 32
      %v918 = vpop.permute.xlu0 %917
      %919 = vrot.lane.b32.xlu0 %v777, 32
      %v920 = vpop.permute.xlu0 %919
      %921 = vrot.lane.b32.xlu0 %v846, 32
      %v922 = vpop.permute.xlu0 %921
      %923 = vrot.lane.b32.xlu0 %v908, 32
      %v924 = vpop.permute.xlu0 %923
      %v927 = vsel %vm485, %v638, %v755
      %v930 = vsel %vm485, %v640, %v757
      %v933 = vsel %vm485, %v642, %v759
      %v936 = vsel %vm485, %v644, %v761
      %v939 = vsel %vm485, %v646, %v763
      %v942 = vsel %vm485, %v648, %v765
      %v945 = vsel %vm485, %v650, %v767
      %v948 = vsel %vm485, %v652, %v769
      %v950 = vsel %vm510, %v927, %v779
      %v952 = vsel %vm510, %v930, %v781
      %v954 = vsel %vm510, %v933, %v783
      %v956 = vsel %vm510, %v936, %v785
      %v958 = vsel %vm510, %v939, %v787
      %v960 = vsel %vm510, %v942, %v789
      %v962 = vsel %vm510, %v945, %v791
      %v964 = vsel %vm510, %v948, %v793
      %v966 = vsel %vm527, %v950, %v805
      %v968 = vsel %vm527, %v952, %v807
      %v970 = vsel %vm527, %v954, %v809
      %v972 = vsel %vm527, %v956, %v811
      %v974 = vsel %vm527, %v958, %v813
      %v976 = vsel %vm527, %v960, %v815
      %v978 = vsel %vm527, %v962, %v817
      %v980 = vsel %vm527, %v964, %v819
      %v982 = vsel %vm544, %v966, %v831
      %v984 = vsel %vm544, %v968, %v833
      %v986 = vsel %vm544, %v970, %v835
      %v988 = vsel %vm544, %v972, %v837
      %v990 = vsel %vm544, %v974, %v839
      %v992 = vsel %vm544, %v976, %v841
      %v994 = vsel %vm544, %v978, %v843
      %v996 = vsel %vm544, %v980, %v845
      %v998 = vsel %vm561, %v982, %v848
      %v1000 = vsel %vm561, %v984, %v850
      %v1002 = vsel %vm561, %v986, %v852
      %v1004 = vsel %vm561, %v988, %v854
      %v1006 = vsel %vm561, %v990, %v856
      %v1008 = vsel %vm561, %v992, %v858
      %v1010 = vsel %vm561, %v994, %v860
      %v1012 = vsel %vm561, %v996, %v862
      %v1014 = vsel %vm578, %v998, %v867
      %v1016 = vsel %vm578, %v1000, %v869
      %v1018 = vsel %vm578, %v1002, %v871
      %v1020 = vsel %vm578, %v1004, %v873
      %v1022 = vsel %vm578, %v1006, %v875
      %v1024 = vsel %vm578, %v1008, %v877
      %v1026 = vsel %vm578, %v1010, %v879
      %v1028 = vsel %vm578, %v1012, %v881
      %v1030 = vsel %vm595, %v1014, %v893
      %v1032 = vsel %vm595, %v1016, %v895
      %v1034 = vsel %vm595, %v1018, %v897
      %v1036 = vsel %vm595, %v1020, %v899
      %v1038 = vsel %vm595, %v1022, %v901
      %v1040 = vsel %vm595, %v1024, %v903
      %v1042 = vsel %vm595, %v1026, %v905
      %v1044 = vsel %vm595, %v1028, %v907
      %v1046 = vsel %vm612, %v1030, %v910
      %v1048 = vsel %vm612, %v1032, %v912
      %v1050 = vsel %vm612, %v1034, %v914
      %v1052 = vsel %vm612, %v1036, %v916
      %v1054 = vsel %vm612, %v1038, %v918
      %v1056 = vsel %vm612, %v1040, %v920
      %v1058 = vsel %vm612, %v1042, %v922
      %v1060 = vsel %vm612, %v1044, %v924
      %s1061 = scalar_lea.vmem %s1, 20
      %v1062 = vld [vmem:[%s1061] sm:$0xf]
      %v1063 = vld [vmem:[%s1061 + $0x4] sm:$0xf]
      %v1064 = vld [vmem:[%s1061 + $0x8] sm:$0xf]
      %v1065 = vld [vmem:[%s1061 + $0xc] sm:$0xf]
      %v1066 = vld [vmem:[%s1061 + $0x10] sm:$0x3]
      %v1075 = vunpack.c.l.b16 %v1046
      %v1076 = vunpack.c.l.b16 %v1048
      %v1077 = vunpack.c.l.b16 %v1050
      %v1078 = vunpack.c.l.b16 %v1052
      %v1079 = vunpack.c.l.b16 %v1054
      %v1080 = vunpack.c.l.b16 %v1056
      %v1081 = vunpack.c.l.b16 %v1058
      %v1082 = vunpack.c.l.b16 %v1060
      %v1083 = vpack.c.b16 %v1076, %v1075
      %v1084 = vpack.c.b16 %v1078, %v1077
      %v1085 = vpack.c.b16 %v1080, %v1079
      %v1086 = vpack.c.b16 %v1082, %v1081
      %v1092 = vunpack.c.l.b16 %v1062
      %v1093 = vunpack.c.l.b16 %v1063
      %v1094 = vunpack.c.l.b16 %v1064
      %v1095 = vunpack.c.l.b16 %v1065
      %v1096 = vunpack.c.l.b16 %v1066
      %v1097 = vpack.c.b16 %v1093, %v1092
      %v1098 = vpack.c.b16 %v1095, %v1094
      %v1099 = vpack.c.b16 %v1096, %v1096
      %vm1102 = vcmask 293888
      %v1104 = vsel %vm1102, %v1083, 0
      %v1107 = vsel %vm1102, %v1084, 0
      %v1110 = vsel %vm1102, %v1085, 0
      %v1113 = vsel %vm1102, %v1086, 0
      %vm1115 = vcmask 1041408
      %v1117 = vsel %vm1115, %v1099, 0
      %1119 = vmatprep.subr.bf16.mxu0 0
      %1120 = vmatpush1.bf16.msra.mxu0 %v1097
      %1121 = vmatprep.subr.bf16.mxu0 0
      %1122 = vmatpush1.bf16.msra.mxu0 %v1098
      %1123 = vmatprep.subr.bf16.mxu0 0
      %1124 = vmatpush1.bf16.msra.mxu0 %v1117
      %1125 = vmatprep.subr.bf16.mxu0 0
      %1126 = vmatpush1.bf16.msra.mxu0 0
      %1127 = vmatprep.subr.bf16.mxu0 0
      %1128 = vmatpush1.bf16.msra.mxu0 0
      %1129 = vmatprep.subr.bf16.mxu0 0
      %1130 = vmatpush1.bf16.msra.mxu0 0
      %1131 = vmatprep.subr.bf16.mxu0 0
      %1132 = vmatpush1.bf16.msra.mxu0 0
      %1133 = vmatprep.subr.bf16.mxu0 0
      %1134 = vmatpush1.bf16.msra.mxu0 0
      %1135 = vmatprep.subr.bf16.mxu0 0
      %1136 = vmatpush1.bf16.msra.mxu0 0
      %1137 = vmatprep.subr.bf16.mxu0 0
      %1138 = vmatpush1.bf16.msra.mxu0 0
      %1139 = vmatprep.subr.bf16.mxu0 0
      %1140 = vmatpush1.bf16.msra.mxu0 0
      %1141 = vmatprep.subr.bf16.mxu0 0
      %1142 = vmatpush1.bf16.msra.mxu0 0
      %1143 = vmatprep.subr.bf16.mxu0 0
      %1144 = vmatpush1.bf16.msra.mxu0 0
      %1145 = vmatprep.subr.bf16.mxu0 0
      %1146 = vmatpush1.bf16.msra.mxu0 0
      %1147 = vmatprep.subr.bf16.mxu0 0
      %1148 = vmatpush1.bf16.msra.mxu0 0
      %1149 = vmatprep.subr.bf16.mxu0 0
      %1150 = vmatpush1.bf16.msra.mxu0 0
      %1151 = vmatprep.mubr.bf16.mxu0 0
      %1152 = vmatmul.mubr.bf16.gmra.mrb[0].mxu0 %v1104
      %v1153 = vpop.f32.mrb[0].mxu0
      %v1154 = vadd.f32 0.0, %v1153
      %v1155 = vpop.f32.mrb[0].mxu0
      %v1156 = vpop.f32.mrb[0].mxu0
      %v1157 = vadd.f32 0.0, %v1156
      %v1158 = vpop.f32.mrb[0].mxu0
      %1159 = vmatprep.mubr.bf16.mxu0 0
      %1160 = vmatmul.mubr.bf16.gmra.mrb[0].mxu0 %v1107
      %v1161 = vpop.f32.mrb[0].mxu0
      %v1162 = vadd.f32 0.0, %v1161
      %v1163 = vpop.f32.mrb[0].mxu0
      %v1164 = vpop.f32.mrb[0].mxu0
      %v1165 = vadd.f32 0.0, %v1164
      %v1166 = vpop.f32.mrb[0].mxu0
      %1167 = vmatprep.mubr.bf16.mxu0 0
      %1168 = vmatmul.mubr.bf16.gmra.mrb[0].mxu0 %v1110
      %v1169 = vpop.f32.mrb[0].mxu0
      %v1170 = vadd.f32 0.0, %v1169
      %v1171 = vpop.f32.mrb[0].mxu0
      %v1172 = vpop.f32.mrb[0].mxu0
      %v1173 = vadd.f32 0.0, %v1172
      %v1174 = vpop.f32.mrb[0].mxu0
      %1175 = vmatprep.mubr.bf16.mxu0 0
      %1176 = vmatmul.mubr.bf16.gmra.mrb[0].mxu0 %v1113
      %v1177 = vpop.f32.mrb[0].mxu0
      %v1178 = vadd.f32 0.0, %v1177
      %v1179 = vpop.f32.mrb[0].mxu0
      %v1180 = vpop.f32.mrb[0].mxu0
      %v1181 = vadd.f32 0.0, %v1180
      %v1182 = vpop.f32.mrb[0].mxu0
      %1183 = vdwg.mxu0
      %v1192 = vunpack.c.l.b16 %v614
      %v1193 = vunpack.c.l.b16 %v616
      %v1194 = vunpack.c.l.b16 %v618
      %v1195 = vunpack.c.l.b16 %v620
      %v1196 = vunpack.c.l.b16 %v622
      %v1197 = vunpack.c.l.b16 %v624
      %v1198 = vunpack.c.l.b16 %v626
      %v1199 = vunpack.c.l.b16 %v628
      %v1200 = vpack.c.b16 %v1193, %v1192
      %v1201 = vpack.c.b16 %v1195, %v1194
      %v1202 = vpack.c.b16 %v1197, %v1196
      %v1203 = vpack.c.b16 %v1199, %v1198
      %v1209 = vunpack.c.l.b16 %v629
      %v1210 = vunpack.c.l.b16 %v630
      %v1211 = vunpack.c.l.b16 %v631
      %v1212 = vunpack.c.l.b16 %v632
      %v1213 = vunpack.c.l.b16 %v633
      %v1214 = vpack.c.b16 %v1210, %v1209
      %v1215 = vpack.c.b16 %v1212, %v1211
      %v1216 = vpack.c.b16 %v1213, %v1213
      %v1220 = vsel %vm1102, %v1200, 0
      %v1223 = vsel %vm1102, %v1201, 0
      %v1226 = vsel %vm1102, %v1202, 0
      %v1229 = vsel %vm1102, %v1203, 0
      %v1232 = vsel %vm1115, %v1216, 0
      %1234 = vmatprep.subr.bf16.mxu0 0
      %1235 = vmatpush1.bf16.msra.mxu0 %v1214
      %1236 = vmatprep.subr.bf16.mxu0 0
      %1237 = vmatpush1.bf16.msra.mxu0 %v1215
      %1238 = vmatprep.subr.bf16.mxu0 0
      %1239 = vmatpush1.bf16.msra.mxu0 %v1232
      %1240 = vmatprep.subr.bf16.mxu0 0
      %1241 = vmatpush1.bf16.msra.mxu0 0
      %1242 = vmatprep.subr.bf16.mxu0 0
      %1243 = vmatpush1.bf16.msra.mxu0 0
      %1244 = vmatprep.subr.bf16.mxu0 0
      %1245 = vmatpush1.bf16.msra.mxu0 0
      %1246 = vmatprep.subr.bf16.mxu0 0
      %1247 = vmatpush1.bf16.msra.mxu0 0
      %1248 = vmatprep.subr.bf16.mxu0 0
      %1249 = vmatpush1.bf16.msra.mxu0 0
      %1250 = vmatprep.subr.bf16.mxu0 0
      %1251 = vmatpush1.bf16.msra.mxu0 0
      %1252 = vmatprep.subr.bf16.mxu0 0
      %1253 = vmatpush1.bf16.msra.mxu0 0
      %1254 = vmatprep.subr.bf16.mxu0 0
      %1255 = vmatpush1.bf16.msra.mxu0 0
      %1256 = vmatprep.subr.bf16.mxu0 0
      %1257 = vmatpush1.bf16.msra.mxu0 0
      %1258 = vmatprep.subr.bf16.mxu0 0
      %1259 = vmatpush1.bf16.msra.mxu0 0
      %1260 = vmatprep.subr.bf16.mxu0 0
      %1261 = vmatpush1.bf16.msra.mxu0 0
      %1262 = vmatprep.subr.bf16.mxu0 0
      %1263 = vmatpush1.bf16.msra.mxu0 0
      %1264 = vmatprep.subr.bf16.mxu0 0
      %1265 = vmatpush1.bf16.msra.mxu0 0
      %1266 = vmatprep.mubr.bf16.mxu0 0
      %1267 = vmatmul.mubr.bf16.gmra.mrb[0].mxu0 %v1220
      %v1268 = vpop.f32.mrb[0].mxu0
      %v1269 = vadd.f32 %v1154, %v1268
      %v1270 = vpop.f32.mrb[0].mxu0
      %v1271 = vpop.f32.mrb[0].mxu0
      %v1272 = vadd.f32 %v1157, %v1271
      %v1273 = vpop.f32.mrb[0].mxu0
      %1274 = vmatprep.mubr.bf16.mxu0 0
      %1275 = vmatmul.mubr.bf16.gmra.mrb[0].mxu0 %v1223
      %v1276 = vpop.f32.mrb[0].mxu0
      %v1277 = vadd.f32 %v1162, %v1276
      %v1278 = vpop.f32.mrb[0].mxu0
      %v1279 = vpop.f32.mrb[0].mxu0
      %v1280 = vadd.f32 %v1165, %v1279
      %v1281 = vpop.f32.mrb[0].mxu0
      %1282 = vmatprep.mubr.bf16.mxu0 0
      %1283 = vmatmul.mubr.bf16.gmra.mrb[0].mxu0 %v1226
      %v1284 = vpop.f32.mrb[0].mxu0
      %v1285 = vadd.f32 %v1170, %v1284
      %v1286 = vpop.f32.mrb[0].mxu0
      %v1287 = vpop.f32.mrb[0].mxu0
      %v1288 = vadd.f32 %v1173, %v1287
      %v1289 = vpop.f32.mrb[0].mxu0
      %1290 = vmatprep.mubr.bf16.mxu0 0
      %1291 = vmatmul.mubr.bf16.gmra.mrb[0].mxu0 %v1229
      %v1292 = vpop.f32.mrb[0].mxu0
      %v1293 = vadd.f32 %v1178, %v1292
      %v1294 = vpop.f32.mrb[0].mxu0
      %v1295 = vpop.f32.mrb[0].mxu0
      %v1296 = vadd.f32 %v1181, %v1295
      %v1297 = vpop.f32.mrb[0].mxu0
      %1298 = vdwg.mxu0
      %s1299 = sadd.s32 %s19, 2
      %s1300 = smul.u32 %s1299, 20
      %s1301 = smul.addr %s1300, 4
      %s1302 = scalar_lea.vmem %s183, %s1301
      %v1303 = vld [vmem:[%s1302] sm:$0xf]
      %v1304 = vld [vmem:[%s1302 + $0x4] sm:$0x1]
      %v1305 = vld [vmem:[%s1302 + $0x8] sm:$0xf]
      %v1306 = vld [vmem:[%s1302 + $0xc] sm:$0x1]
      %v1307 = vld [vmem:[%s1302 + $0x10] sm:$0xf]
      %v1308 = vld [vmem:[%s1302 + $0x14] sm:$0x1]
      %v1309 = vld [vmem:[%s1302 + $0x18] sm:$0xf]
      %v1310 = vld [vmem:[%s1302 + $0x1c] sm:$0x1]
      %v1311 = vld [vmem:[%s1302 + $0x20] sm:$0xf]
      %v1312 = vld [vmem:[%s1302 + $0x24] sm:$0x1]
      %v1313 = vld [vmem:[%s1302 + $0x28] sm:$0xf]
      %v1314 = vld [vmem:[%s1302 + $0x2c] sm:$0x1]
      %v1315 = vld [vmem:[%s1302 + $0x30] sm:$0xf]
      %v1316 = vld [vmem:[%s1302 + $0x34] sm:$0x1]
      %v1317 = vld [vmem:[%s1302 + $0x38] sm:$0xf]
      %v1318 = vld [vmem:[%s1302 + $0x3c] sm:$0x1]
      %v1319 = vld [vmem:[%s1302 + $0x40] sm:$0xf]
      %v1320 = vld [vmem:[%s1302 + $0x44] sm:$0x1]
      %v1321 = vld [vmem:[%s1302 + $0x48] sm:$0xf]
      %v1322 = vld [vmem:[%s1302 + $0x4c] sm:$0x1]
      %v1339 = vunpack.c.l.b16 %v1303
      %v1340 = vunpack.c.l.b16 %v1304
      %v1341 = vunpack.c.l.b16 %v1305
      %v1342 = vunpack.c.l.b16 %v1306
      %v1343 = vunpack.c.l.b16 %v1307
      %v1344 = vunpack.c.l.b16 %v1308
      %v1345 = vunpack.c.l.b16 %v1309
      %v1346 = vunpack.c.l.b16 %v1310
      %v1347 = vunpack.c.l.b16 %v1311
      %v1348 = vunpack.c.l.b16 %v1312
      %v1349 = vunpack.c.l.b16 %v1313
      %v1350 = vunpack.c.l.b16 %v1314
      %v1351 = vunpack.c.l.b16 %v1315
      %v1352 = vunpack.c.l.b16 %v1316
      %v1353 = vunpack.c.l.b16 %v1317
      %v1354 = vunpack.c.l.b16 %v1318
      %v1355 = vpack.c.b16 %v1340, %v1339
      %v1356 = vpack.c.b16 %v1342, %v1341
      %v1357 = vpack.c.b16 %v1344, %v1343
      %v1358 = vpack.c.b16 %v1346, %v1345
      %v1359 = vpack.c.b16 %v1348, %v1347
      %v1360 = vpack.c.b16 %v1350, %v1349
      %v1361 = vpack.c.b16 %v1352, %v1351
      %v1362 = vpack.c.b16 %v1354, %v1353
      %v1364 = vshrl.u32 %v1355, 16
      %v1366 = vshll.u32 %v1355, 16
      %v1368 = vrot.slane %v1366, 1
      %v1369 = vor.u32 %v1364, %v1368
      %v1371 = vshrl.u32 %v1356, 16
      %v1373 = vshll.u32 %v1356, 16
      %v1375 = vrot.slane %v1373, 1
      %v1376 = vor.u32 %v1371, %v1375
      %v1378 = vshrl.u32 %v1357, 16
      %v1380 = vshll.u32 %v1357, 16
      %v1382 = vrot.slane %v1380, 1
      %v1383 = vor.u32 %v1378, %v1382
      %v1385 = vshrl.u32 %v1358, 16
      %v1387 = vshll.u32 %v1358, 16
      %v1389 = vrot.slane %v1387, 1
      %v1390 = vor.u32 %v1385, %v1389
      %v1392 = vshrl.u32 %v1359, 16
      %v1394 = vshll.u32 %v1359, 16
      %v1396 = vrot.slane %v1394, 1
      %v1397 = vor.u32 %v1392, %v1396
      %v1399 = vshrl.u32 %v1360, 16
      %v1401 = vshll.u32 %v1360, 16
      %v1403 = vrot.slane %v1401, 1
      %v1404 = vor.u32 %v1399, %v1403
      %v1406 = vshrl.u32 %v1361, 16
      %v1408 = vshll.u32 %v1361, 16
      %v1410 = vrot.slane %v1408, 1
      %v1411 = vor.u32 %v1406, %v1410
      %v1413 = vshrl.u32 %v1362, 16
      %v1415 = vshll.u32 %v1362, 16
      %v1417 = vrot.slane %v1415, 1
      %v1418 = vor.u32 %v1413, %v1417
      %1419 = vrot.lane.b32.xlu0 %v1369, 4
      %v1420 = vpop.permute.xlu0 %1419
      %1421 = vrot.lane.b32.xlu0 %v1376, 4
      %v1422 = vpop.permute.xlu0 %1421
      %1423 = vrot.lane.b32.xlu0 %v1383, 4
      %v1424 = vpop.permute.xlu0 %1423
      %1425 = vrot.lane.b32.xlu0 %v1390, 4
      %v1426 = vpop.permute.xlu0 %1425
      %1427 = vrot.lane.b32.xlu0 %v1397, 4
      %v1428 = vpop.permute.xlu0 %1427
      %1429 = vrot.lane.b32.xlu0 %v1404, 4
      %v1430 = vpop.permute.xlu0 %1429
      %1431 = vrot.lane.b32.xlu0 %v1411, 4
      %v1432 = vpop.permute.xlu0 %1431
      %1433 = vrot.lane.b32.xlu0 %v1418, 4
      %v1434 = vpop.permute.xlu0 %1433
      %v1435 = vrot.slane %v1355, 1
      %v1436 = vrot.slane %v1356, 1
      %v1437 = vrot.slane %v1357, 1
      %v1438 = vrot.slane %v1358, 1
      %v1439 = vrot.slane %v1359, 1
      %v1440 = vrot.slane %v1360, 1
      %v1441 = vrot.slane %v1361, 1
      %v1442 = vrot.slane %v1362, 1
      %1443 = vrot.lane.b32.xlu0 %v1435, 8
      %v1444 = vpop.permute.xlu0 %1443
      %1445 = vrot.lane.b32.xlu0 %v1436, 8
      %v1446 = vpop.permute.xlu0 %1445
      %1447 = vrot.lane.b32.xlu0 %v1437, 8
      %v1448 = vpop.permute.xlu0 %1447
      %1449 = vrot.lane.b32.xlu0 %v1438, 8
      %v1450 = vpop.permute.xlu0 %1449
      %1451 = vrot.lane.b32.xlu0 %v1439, 8
      %v1452 = vpop.permute.xlu0 %1451
      %1453 = vrot.lane.b32.xlu0 %v1440, 8
      %v1454 = vpop.permute.xlu0 %1453
      %1455 = vrot.lane.b32.xlu0 %v1441, 8
      %v1456 = vpop.permute.xlu0 %1455
      %1457 = vrot.lane.b32.xlu0 %v1442, 8
      %v1458 = vpop.permute.xlu0 %1457
      %v1460 = vunpack.c.l.b16 %v1319
      %v1461 = vpack.c.b16 %v1341, %v1341
      %v1462 = vpack.c.b16 %v1343, %v1343
      %v1463 = vpack.c.b16 %v1345, %v1345
      %v1464 = vpack.c.b16 %v1347, %v1347
      %v1465 = vpack.c.b16 %v1349, %v1349
      %v1466 = vpack.c.b16 %v1351, %v1351
      %v1467 = vpack.c.b16 %v1353, %v1353
      %v1468 = vpack.c.b16 %v1460, %v1460
      %1469 = vrot.lane.b32.xlu0 %v1461, 12
      %v1470 = vpop.permute.xlu0 %1469
      %1471 = vrot.lane.b32.xlu0 %v1462, 12
      %v1472 = vpop.permute.xlu0 %1471
      %1473 = vrot.lane.b32.xlu0 %v1463, 12
      %v1474 = vpop.permute.xlu0 %1473
      %1475 = vrot.lane.b32.xlu0 %v1464, 12
      %v1476 = vpop.permute.xlu0 %1475
      %1477 = vrot.lane.b32.xlu0 %v1465, 12
      %v1478 = vpop.permute.xlu0 %1477
      %1479 = vrot.lane.b32.xlu0 %v1466, 12
      %v1480 = vpop.permute.xlu0 %1479
      %1481 = vrot.lane.b32.xlu0 %v1467, 12
      %v1482 = vpop.permute.xlu0 %1481
      %1483 = vrot.lane.b32.xlu0 %v1468, 12
      %v1484 = vpop.permute.xlu0 %1483
      %v1486 = vunpack.c.l.b16 %v1320
      %v1487 = vpack.c.b16 %v1486, %v1460
      %v1489 = vshrl.u32 %v1487, 16
      %v1491 = vshll.u32 %v1487, 16
      %v1493 = vrot.slane %v1491, 1
      %v1494 = vor.u32 %v1489, %v1493
      %1495 = vrot.lane.b32.xlu0 %v1376, 16
      %v1496 = vpop.permute.xlu0 %1495
      %1497 = vrot.lane.b32.xlu0 %v1383, 16
      %v1498 = vpop.permute.xlu0 %1497
      %1499 = vrot.lane.b32.xlu0 %v1390, 16
      %v1500 = vpop.permute.xlu0 %1499
      %1501 = vrot.lane.b32.xlu0 %v1397, 16
      %v1502 = vpop.permute.xlu0 %1501
      %1503 = vrot.lane.b32.xlu0 %v1404, 16
      %v1504 = vpop.permute.xlu0 %1503
      %1505 = vrot.lane.b32.xlu0 %v1411, 16
      %v1506 = vpop.permute.xlu0 %1505
      %1507 = vrot.lane.b32.xlu0 %v1418, 16
      %v1508 = vpop.permute.xlu0 %1507
      %1509 = vrot.lane.b32.xlu0 %v1494, 16
      %v1510 = vpop.permute.xlu0 %1509
      %v1511 = vrot.slane %v1487, 1
      %1512 = vrot.lane.b32.xlu0 %v1436, 20
      %v1513 = vpop.permute.xlu0 %1512
      %1514 = vrot.lane.b32.xlu0 %v1437, 20
      %v1515 = vpop.permute.xlu0 %1514
      %1516 = vrot.lane.b32.xlu0 %v1438, 20
      %v1517 = vpop.permute.xlu0 %1516
      %1518 = vrot.lane.b32.xlu0 %v1439, 20
      %v1519 = vpop.permute.xlu0 %1518
      %1520 = vrot.lane.b32.xlu0 %v1440, 20
      %v1521 = vpop.permute.xlu0 %1520
      %1522 = vrot.lane.b32.xlu0 %v1441, 20
      %v1523 = vpop.permute.xlu0 %1522
      %1524 = vrot.lane.b32.xlu0 %v1442, 20
      %v1525 = vpop.permute.xlu0 %1524
      %1526 = vrot.lane.b32.xlu0 %v1511, 20
      %v1527 = vpop.permute.xlu0 %1526
      %v1529 = vunpack.c.l.b16 %v1321
      %v1530 = vpack.c.b16 %v1529, %v1529
      %1531 = vrot.lane.b32.xlu0 %v1462, 24
      %v1532 = vpop.permute.xlu0 %1531
      %1533 = vrot.lane.b32.xlu0 %v1463, 24
      %v1534 = vpop.permute.xlu0 %1533
      %1535 = vrot.lane.b32.xlu0 %v1464, 24
      %v1536 = vpop.permute.xlu0 %1535
      %1537 = vrot.lane.b32.xlu0 %v1465, 24
      %v1538 = vpop.permute.xlu0 %1537
      %1539 = vrot.lane.b32.xlu0 %v1466, 24
      %v1540 = vpop.permute.xlu0 %1539
      %1541 = vrot.lane.b32.xlu0 %v1467, 24
      %v1542 = vpop.permute.xlu0 %1541
      %1543 = vrot.lane.b32.xlu0 %v1468, 24
      %v1544 = vpop.permute.xlu0 %1543
      %1545 = vrot.lane.b32.xlu0 %v1530, 24
      %v1546 = vpop.permute.xlu0 %1545
      %v1548 = vunpack.c.l.b16 %v1322
      %v1549 = vpack.c.b16 %v1548, %v1529
      %v1551 = vshrl.u32 %v1549, 16
      %v1553 = vshll.u32 %v1549, 16
      %v1555 = vrot.slane %v1553, 1
      %v1556 = vor.u32 %v1551, %v1555
      %1557 = vrot.lane.b32.xlu0 %v1383, 28
      %v1558 = vpop.permute.xlu0 %1557
      %1559 = vrot.lane.b32.xlu0 %v1390, 28
      %v1560 = vpop.permute.xlu0 %1559
      %1561 = vrot.lane.b32.xlu0 %v1397, 28
      %v1562 = vpop.permute.xlu0 %1561
      %1563 = vrot.lane.b32.xlu0 %v1404, 28
      %v1564 = vpop.permute.xlu0 %1563
      %1565 = vrot.lane.b32.xlu0 %v1411, 28
      %v1566 = vpop.permute.xlu0 %1565
      %1567 = vrot.lane.b32.xlu0 %v1418, 28
      %v1568 = vpop.permute.xlu0 %1567
      %1569 = vrot.lane.b32.xlu0 %v1494, 28
      %v1570 = vpop.permute.xlu0 %1569
      %1571 = vrot.lane.b32.xlu0 %v1556, 28
      %v1572 = vpop.permute.xlu0 %1571
      %v1573 = vrot.slane %v1549, 1
      %1574 = vrot.lane.b32.xlu0 %v1437, 32
      %v1575 = vpop.permute.xlu0 %1574
      %1576 = vrot.lane.b32.xlu0 %v1438, 32
      %v1577 = vpop.permute.xlu0 %1576
      %1578 = vrot.lane.b32.xlu0 %v1439, 32
      %v1579 = vpop.permute.xlu0 %1578
      %1580 = vrot.lane.b32.xlu0 %v1440, 32
      %v1581 = vpop.permute.xlu0 %1580
      %1582 = vrot.lane.b32.xlu0 %v1441, 32
      %v1583 = vpop.permute.xlu0 %1582
      %1584 = vrot.lane.b32.xlu0 %v1442, 32
      %v1585 = vpop.permute.xlu0 %1584
      %1586 = vrot.lane.b32.xlu0 %v1511, 32
      %v1587 = vpop.permute.xlu0 %1586
      %1588 = vrot.lane.b32.xlu0 %v1573, 32
      %v1589 = vpop.permute.xlu0 %1588
      %v1592 = vsel %vm485, %v1303, %v1420
      %v1595 = vsel %vm485, %v1305, %v1422
      %v1598 = vsel %vm485, %v1307, %v1424
      %v1601 = vsel %vm485, %v1309, %v1426
      %v1604 = vsel %vm485, %v1311, %v1428
      %v1607 = vsel %vm485, %v1313, %v1430
      %v1610 = vsel %vm485, %v1315, %v1432
      %v1613 = vsel %vm485, %v1317, %v1434
      %v1615 = vsel %vm510, %v1592, %v1444
      %v1617 = vsel %vm510, %v1595, %v1446
      %v1619 = vsel %vm510, %v1598, %v1448
      %v1621 = vsel %vm510, %v1601, %v1450
      %v1623 = vsel %vm510, %v1604, %v1452
      %v1625 = vsel %vm510, %v1607, %v1454
      %v1627 = vsel %vm510, %v1610, %v1456
      %v1629 = vsel %vm510, %v1613, %v1458
      %v1631 = vsel %vm527, %v1615, %v1470
      %v1633 = vsel %vm527, %v1617, %v1472
      %v1635 = vsel %vm527, %v1619, %v1474
      %v1637 = vsel %vm527, %v1621, %v1476
      %v1639 = vsel %vm527, %v1623, %v1478
      %v1641 = vsel %vm527, %v1625, %v1480
      %v1643 = vsel %vm527, %v1627, %v1482
      %v1645 = vsel %vm527, %v1629, %v1484
      %v1647 = vsel %vm544, %v1631, %v1496
      %v1649 = vsel %vm544, %v1633, %v1498
      %v1651 = vsel %vm544, %v1635, %v1500
      %v1653 = vsel %vm544, %v1637, %v1502
      %v1655 = vsel %vm544, %v1639, %v1504
      %v1657 = vsel %vm544, %v1641, %v1506
      %v1659 = vsel %vm544, %v1643, %v1508
      %v1661 = vsel %vm544, %v1645, %v1510
      %v1663 = vsel %vm561, %v1647, %v1513
      %v1665 = vsel %vm561, %v1649, %v1515
      %v1667 = vsel %vm561, %v1651, %v1517
      %v1669 = vsel %vm561, %v1653, %v1519
      %v1671 = vsel %vm561, %v1655, %v1521
      %v1673 = vsel %vm561, %v1657, %v1523
      %v1675 = vsel %vm561, %v1659, %v1525
      %v1677 = vsel %vm561, %v1661, %v1527
      %v1679 = vsel %vm578, %v1663, %v1532
      %v1681 = vsel %vm578, %v1665, %v1534
      %v1683 = vsel %vm578, %v1667, %v1536
      %v1685 = vsel %vm578, %v1669, %v1538
      %v1687 = vsel %vm578, %v1671, %v1540
      %v1689 = vsel %vm578, %v1673, %v1542
      %v1691 = vsel %vm578, %v1675, %v1544
      %v1693 = vsel %vm578, %v1677, %v1546
      %v1695 = vsel %vm595, %v1679, %v1558
      %v1697 = vsel %vm595, %v1681, %v1560
      %v1699 = vsel %vm595, %v1683, %v1562
      %v1701 = vsel %vm595, %v1685, %v1564
      %v1703 = vsel %vm595, %v1687, %v1566
      %v1705 = vsel %vm595, %v1689, %v1568
      %v1707 = vsel %vm595, %v1691, %v1570
      %v1709 = vsel %vm595, %v1693, %v1572
      %v1711 = vsel %vm612, %v1695, %v1575
      %v1713 = vsel %vm612, %v1697, %v1577
      %v1715 = vsel %vm612, %v1699, %v1579
      %v1717 = vsel %vm612, %v1701, %v1581
      %v1719 = vsel %vm612, %v1703, %v1583
      %v1721 = vsel %vm612, %v1705, %v1585
      %v1723 = vsel %vm612, %v1707, %v1587
      %v1725 = vsel %vm612, %v1709, %v1589
      %s1726 = scalar_lea.vmem %s1, 40
      %v1727 = vld [vmem:[%s1726] sm:$0xf]
      %v1728 = vld [vmem:[%s1726 + $0x4] sm:$0xf]
      %v1729 = vld [vmem:[%s1726 + $0x8] sm:$0xf]
      %v1730 = vld [vmem:[%s1726 + $0xc] sm:$0xf]
      %v1731 = vld [vmem:[%s1726 + $0x10] sm:$0x3]
      %v1740 = vunpack.c.l.b16 %v1711
      %v1741 = vunpack.c.l.b16 %v1713
      %v1742 = vunpack.c.l.b16 %v1715
      %v1743 = vunpack.c.l.b16 %v1717
      %v1744 = vunpack.c.l.b16 %v1719
      %v1745 = vunpack.c.l.b16 %v1721
      %v1746 = vunpack.c.l.b16 %v1723
      %v1747 = vunpack.c.l.b16 %v1725
      %v1748 = vpack.c.b16 %v1741, %v1740
      %v1749 = vpack.c.b16 %v1743, %v1742
      %v1750 = vpack.c.b16 %v1745, %v1744
      %v1751 = vpack.c.b16 %v1747, %v1746
      %v1757 = vunpack.c.l.b16 %v1727
      %v1758 = vunpack.c.l.b16 %v1728
      %v1759 = vunpack.c.l.b16 %v1729
      %v1760 = vunpack.c.l.b16 %v1730
      %v1761 = vunpack.c.l.b16 %v1731
      %v1762 = vpack.c.b16 %v1758, %v1757
      %v1763 = vpack.c.b16 %v1760, %v1759
      %v1764 = vpack.c.b16 %v1761, %v1761
      %v1768 = vsel %vm1102, %v1748, 0
      %v1771 = vsel %vm1102, %v1749, 0
      %v1774 = vsel %vm1102, %v1750, 0
      %v1777 = vsel %vm1102, %v1751, 0
      %v1780 = vsel %vm1115, %v1764, 0
      %1782 = vmatprep.subr.bf16.mxu0 0
      %1783 = vmatpush1.bf16.msra.mxu0 %v1762
      %1784 = vmatprep.subr.bf16.mxu0 0
      %1785 = vmatpush1.bf16.msra.mxu0 %v1763
      %1786 = vmatprep.subr.bf16.mxu0 0
      %1787 = vmatpush1.bf16.msra.mxu0 %v1780
      %1788 = vmatprep.subr.bf16.mxu0 0
      %1789 = vmatpush1.bf16.msra.mxu0 0
      %1790 = vmatprep.subr.bf16.mxu0 0
      %1791 = vmatpush1.bf16.msra.mxu0 0
      %1792 = vmatprep.subr.bf16.mxu0 0
      %1793 = vmatpush1.bf16.msra.mxu0 0
      %1794 = vmatprep.subr.bf16.mxu0 0
      %1795 = vmatpush1.bf16.msra.mxu0 0
      %1796 = vmatprep.subr.bf16.mxu0 0
      %1797 = vmatpush1.bf16.msra.mxu0 0
      %1798 = vmatprep.subr.bf16.mxu0 0
      %1799 = vmatpush1.bf16.msra.mxu0 0
      %1800 = vmatprep.subr.bf16.mxu0 0
      %1801 = vmatpush1.bf16.msra.mxu0 0
      %1802 = vmatprep.subr.bf16.mxu0 0
      %1803 = vmatpush1.bf16.msra.mxu0 0
      %1804 = vmatprep.subr.bf16.mxu0 0
      %1805 = vmatpush1.bf16.msra.mxu0 0
      %1806 = vmatprep.subr.bf16.mxu0 0
      %1807 = vmatpush1.bf16.msra.mxu0 0
      %1808 = vmatprep.subr.bf16.mxu0 0
      %1809 = vmatpush1.bf16.msra.mxu0 0
      %1810 = vmatprep.subr.bf16.mxu0 0
      %1811 = vmatpush1.bf16.msra.mxu0 0
      %1812 = vmatprep.subr.bf16.mxu0 0
      %1813 = vmatpush1.bf16.msra.mxu0 0
      %1814 = vmatprep.mubr.bf16.mxu0 0
      %1815 = vmatmul.mubr.bf16.gmra.mrb[0].mxu0 %v1768
      %v1816 = vpop.f32.mrb[0].mxu0
      %v1817 = vadd.f32 0.0, %v1816
      %v1818 = vpop.f32.mrb[0].mxu0
      %v1819 = vpop.f32.mrb[0].mxu0
      %v1820 = vadd.f32 0.0, %v1819
      %v1821 = vpop.f32.mrb[0].mxu0
      %1822 = vmatprep.mubr.bf16.mxu0 0
      %1823 = vmatmul.mubr.bf16.gmra.mrb[0].mxu0 %v1771
      %v1824 = vpop.f32.mrb[0].mxu0
      %v1825 = vadd.f32 0.0, %v1824
      %v1826 = vpop.f32.mrb[0].mxu0
      %v1827 = vpop.f32.mrb[0].mxu0
      %v1828 = vadd.f32 0.0, %v1827
      %v1829 = vpop.f32.mrb[0].mxu0
      %1830 = vmatprep.mubr.bf16.mxu0 0
      %1831 = vmatmul.mubr.bf16.gmra.mrb[0].mxu0 %v1774
      %v1832 = vpop.f32.mrb[0].mxu0
      %v1833 = vadd.f32 0.0, %v1832
      %v1834 = vpop.f32.mrb[0].mxu0
      %v1835 = vpop.f32.mrb[0].mxu0
      %v1836 = vadd.f32 0.0, %v1835
      %v1837 = vpop.f32.mrb[0].mxu0
      %1838 = vmatprep.mubr.bf16.mxu0 0
      %1839 = vmatmul.mubr.bf16.gmra.mrb[0].mxu0 %v1777
      %v1840 = vpop.f32.mrb[0].mxu0
      %v1841 = vadd.f32 0.0, %v1840
      %v1842 = vpop.f32.mrb[0].mxu0
      %v1843 = vpop.f32.mrb[0].mxu0
      %v1844 = vadd.f32 0.0, %v1843
      %v1845 = vpop.f32.mrb[0].mxu0
      %1846 = vdwg.mxu0
      %v1847 = vadd.f32 %v1269, %v1817
      %v1848 = vadd.f32 %v1272, %v1820
      %v1849 = vadd.f32 %v1277, %v1825
      %v1850 = vadd.f32 %v1280, %v1828
      %v1851 = vadd.f32 %v1285, %v1833
      %v1852 = vadd.f32 %v1288, %v1836
      %v1853 = vadd.f32 %v1293, %v1841
      %v1854 = vadd.f32 %v1296, %v1844
      %v1855 = vld [vmem:[%s2] sm:$0x1]
      %v1857 = vlaneseq
      %v1858 = vshrl.u32 %v1857, 7
      %v1859 = vsub.s32 0, %v1858
      %v1860 = vrot.slane %v1855, %v1859
      %v1862 = vadd.f32 %v1847, %v1860
      %v1863 = vadd.f32 %v1848, %v1860
      %v1864 = vadd.f32 %v1849, %v1860
      %v1865 = vadd.f32 %v1850, %v1860
      %v1866 = vadd.f32 %v1851, %v1860
      %v1867 = vadd.f32 %v1852, %v1860
      %v1868 = vadd.f32 %v1853, %v1860
      %v1869 = vadd.f32 %v1854, %v1860
      %v1870 = vmax.f32 %v1862, 0.0
      %v1871 = vmax.f32 %v1863, 0.0
      %v1872 = vmax.f32 %v1864, 0.0
      %v1873 = vmax.f32 %v1865, 0.0
      %v1874 = vmax.f32 %v1866, 0.0
      %v1875 = vmax.f32 %v1867, 0.0
      %v1876 = vmax.f32 %v1868, 0.0
      %v1877 = vmax.f32 %v1869, 0.0
      %v1878 = vpack.c.bf16 %v1871, %v1870
      %v1879 = vpack.c.bf16 %v1873, %v1872
      %v1880 = vpack.c.bf16 %v1875, %v1874
      %v1881 = vpack.c.bf16 %v1877, %v1876
      %v1886 = vunpack.c.l.b16 %v1878
      %v1887 = vunpack.c.h.b16 %v1878
      %v1888 = vunpack.c.l.b16 %v1879
      %v1889 = vunpack.c.h.b16 %v1879
      %v1890 = vunpack.c.l.b16 %v1880
      %v1891 = vunpack.c.h.b16 %v1880
      %v1892 = vunpack.c.l.b16 %v1881
      %v1893 = vunpack.c.h.b16 %v1881
      %v1894 = vpack.c.b16 %v1886, %v1886
      %v1895 = vpack.c.b16 %v1887, %v1887
      %v1896 = vpack.c.b16 %v1888, %v1888
      %v1897 = vpack.c.b16 %v1889, %v1889
      %v1898 = vpack.c.b16 %v1890, %v1890
      %v1899 = vpack.c.b16 %v1891, %v1891
      %v1900 = vpack.c.b16 %v1892, %v1892
      %v1901 = vpack.c.b16 %v1893, %v1893
      %1910 = vst [vmem:[%s190] sm:$0xf] %v1894
      %1911 = vst [vmem:[%s190 + $0x4] sm:$0xf] %v1895
      %1912 = vst [vmem:[%s190 + $0x8] sm:$0xf] %v1896
      %1913 = vst [vmem:[%s190 + $0xc] sm:$0xf] %v1897
      %1914 = vst [vmem:[%s190 + $0x10] sm:$0xf] %v1898
      %1915 = vst [vmem:[%s190 + $0x14] sm:$0xf] %v1899
      %1916 = vst [vmem:[%s190 + $0x18] sm:$0xf] %v1900
      %1917 = vst [vmem:[%s190 + $0x1c] sm:$0xf] %v1901
      %s1918 = smul.u32 %s18, 4
      %s1919 = sadd.s32 %s1918, %s19
      %s1920 = smul.u32 8, %s1919
      %p1921 = scmp.lt.s32.totalorder %s1920, 63
      %s1922 = scalar_select %p1921, %s1920, 63
      %s1923 = smul.addr %s1922, 4
      %s1924 = scalar_lea.vmem %s3, %s1923
      // Predicated region
      $region33: #{inception_module.6} parent=31 // pred_check
        %p1925 = pneg %p116
      $region34: #{inception_module.6} parent=31 // pred_check_branch
        %1927 = sbr.rel (%p1925) target = $region36
      $region35: #{inception_module.6} parent=31 // pred_region
        %s1928 = smul.u32 %s18, 4
        %s1929 = sadd.s32 %s1928, %s19
        %s1930 = smul.u32 8, %s1929
      $region36: #{inception_module.6} parent=31 // pred_fallthru
        _
    $region32: #{inception_module.6} parent=5 // pred_fallthru
      _
    %p1931 = scmp.le.s32.totalorder 2, %s9
    // Predicated region
    $region37: #{inception_module.6} parent=5 // pred_check
      %p1932 = pneg %p1931
    $region38: #{inception_module.6} parent=5 // pred_check_branch
      %1934 = sbr.rel (%p1932) target = $region40
    $region39: #{inception_module.6} parent=5 // pred_region
      %s1935 = ssub.s32 %s9, 2
      // Predicated region
      $region41: #{inception_module.6} parent=39 // pred_check
        %p1936 = pneg %p122
      $region42: #{inception_module.6} parent=39 // pred_check_branch
        %1938 = sbr.rel (%p1936) target = $region44
      $region43: #{inception_module.6} parent=39 // pred_region
        %s1939 = smul.u32 %s20, 4
        %s1940 = sadd.s32 %s1939, %s21
        %s1941 = smul.u32 8, %s1940
        %p1942 = scmp.lt.s32.totalorder %s1941, 63
        %s1943 = scalar_select %p1942, %s1941, 63
        %s1944 = smul.addr %s1943, 4
        %s1945 = scalar_lea.vmem %s3, %s1944
      $region44: #{inception_module.6} parent=39 // pred_fallthru
        _
    $region40: #{inception_module.6} parent=5 // pred_fallthru
      _
  $region6: #{inception_module.6} parent=0 // loop_footer
    %s13 = sadd.s32 1, %s9
  $region7: #{inception_module.6} parent=0 // loop_footer_branch
    %8 = sbr.rel target = $region3
  $region8: #{inception_module.6} parent=0 // loop_exit
    _

</llo_original>
